<compile_context>
chip_gen: v5e
topology: v5e:2x2
jax: 0.10.0
libtpu: 0.0.40
codegen_flags: <defaults>
</compile_context>

<pallas_src>
import jax
import jax.numpy as jnp
from jax.experimental import pallas as pl
from jax.experimental.pallas import tpu as pltpu


FEAT_DIM = 1024   # DenseNet121 classifier.in_features
H1_PAD = 512      # fc1: 500 -> 512 (lane-aligned)
H2_PAD = 128      # fc2: 100 -> 128 (lane-aligned)


# ---------------------------------------------------------------------------
# Fused kernel: ReLU+GAP (both backbones) -> fc1+relu -> fc2+relu -> fc3
# ---------------------------------------------------------------------------
def _fused_forward_side_kernel(xF_ref, xS_ref, w1f_ref, w1s_ref, b1_ref,
                               w2_ref, b2_ref, w3_ref, b3_ref, o_ref):
    # DenseNet121 tail: ReLU then global average pool over the spatial axis.
    # Feature-map refs are (BT, H*W, C): C=1024 on lanes, spatial on sublanes,
    # so this is a sublane reduction and fF/fS land in MXU-friendly layout.
    # bf16 inputs are upcast; reduction / epilogue math stays f32.
    fF = jnp.mean(jnp.maximum(xF_ref[...].astype(jnp.float32), 0.0), axis=1)
    fS = jnp.mean(jnp.maximum(xS_ref[...].astype(jnp.float32), 0.0), axis=1)

    # fc1 on the "virtual concat":  cat(fF, fS) @ W1 == fF @ W1[:C] + fS @ W1[C:]
    h = (jnp.dot(fF.astype(jnp.bfloat16), w1f_ref[...],
                 preferred_element_type=jnp.float32)
         + jnp.dot(fS.astype(jnp.bfloat16), w1s_ref[...],
                   preferred_element_type=jnp.float32)
         + b1_ref[...])
    h = jnp.maximum(h, 0.0)                                   # relu(fc1)

    h = jnp.dot(h.astype(jnp.bfloat16), w2_ref[...],
                preferred_element_type=jnp.float32) + b2_ref[...]
    h = jnp.maximum(h, 0.0)                                   # relu(fc2)

    o_ref[...] = jnp.dot(h.astype(jnp.bfloat16), w3_ref[...],
                         preferred_element_type=jnp.float32) + b3_ref[...]


def forward_side_apply(pp, xF_featmap, xS_featmap, n_class):
    """pp: prepared (padded/split/bf16) head params.
    xF_featmap / xS_featmap: (B, H, W, 1024) DenseNet121 final feature maps
    (NHWC, ideally bf16 — the frozen backbone is asked to emit this layout so
    the head kernel reads lane-dense, half-width HBM bytes)."""
    B, H, W, C = xF_featmap.shape
    HW = H * W
    # Free reshape (no transpose, no extra HBM pass): (B,H,W,C) -> (B, H*W, C).
    xF = xF_featmap.reshape(B, HW, C)
    xS = xS_featmap.reshape(B, HW, C)

    # VMEM-safe batch tile (safe on v5e/v6e/v7x): <=16 rows, multiple of 8 when
    # possible, and >=2 grid steps for B>=16 so v7x can split across its 2 TCs
    # and the pipeline actually overlaps DMA with compute.
    if B < 8:
        BT = B            # tiny-batch / test path
    elif B < 32:
        BT = 8
    else:
        BT = 16
    grid = (pl.cdiv(B, BT),)   # ragged last block handled by Pallas (no jnp.pad)

    n_class_pad = pp["w3"].shape[1]

    def wspec(shape):
        # Weights / biases: same block every grid step -> single VMEM-resident
        # copy (no double-buffering needed).
        return pl.BlockSpec(shape, lambda i: (0, 0),
                            pipeline_mode=pl.Buffered(1))

    out = pl.pallas_call(
        _fused_forward_side_kernel,
        out_shape=jax.ShapeDtypeStruct((B, n_class_pad), jnp.float32),
        grid=grid,
        in_specs=[
            pl.BlockSpec((BT, HW, C), lambda i: (i, 0, 0)),   # xF feature map
            pl.BlockSpec((BT, HW, C), lambda i: (i, 0, 0)),   # xS feature map
            wspec((C, H1_PAD)),                               # W1 (forward half)
            wspec((C, H1_PAD)),                               # W1 (side half)
            wspec((1, H1_PAD)),                               # b1
            wspec((H1_PAD, H2_PAD)),                          # W2
            wspec((1, H2_PAD)),                               # b2
            wspec((H2_PAD, n_class_pad)),                     # W3
            wspec((1, n_class_pad)),                          # b3
        ],
        out_specs=pl.BlockSpec((BT, n_class_pad), lambda i: (i, 0)),
        compiler_params=pltpu.CompilerParams(
            dimension_semantics=("parallel",),
            vmem_limit_bytes=32 * 1024 * 1024),
    )(xF, xS, pp["w1f"], pp["w1s"], pp["b1"], pp["w2"], pp["b2"],
      pp["w3"], pp["b3"])

    # Slice padded class columns back off (ragged batch rows never existed).
    return out[:, :n_class]


# ---------------------------------------------------------------------------
# Parameter handling
# ---------------------------------------------------------------------------
def init_params(key, feat_dim=FEAT_DIM, n_class=14):
    """Deterministic stand-ins for fc1/fc2/fc3 (torch stores W as (out,in);
    here weights are kept pre-transposed as (in, out) for x @ W)."""
    ks = jax.random.split(key, 6)

    def lin(kw, kb, fan_in, fan_out):
        bound = 1.0 / jnp.sqrt(float(fan_in))
        w = jax.random.uniform(kw, (fan_in, fan_out), jnp.float32, -bound, bound)
        b = jax.random.uniform(kb, (1, fan_out), jnp.float32, -bound, bound)
        return w, b

    w1, b1 = lin(ks[0], ks[1], 2 * feat_dim, 500)   # fc1: 2048 -> 500
    w2, b2 = lin(ks[2], ks[3], 500, 100)            # fc2: 500  -> 100
    w3, b3 = lin(ks[4], ks[5], 100, n_class)        # fc3: 100  -> nnClassCount
    return {"w1": w1, "b1": b1, "w2": w2, "b2": b2, "w3": w3, "b3": b3}


def prepare_params(params, feat_dim=FEAT_DIM):
    """One-time preprocessing: zero-pad fc dims to lane multiples, split W1 at
    the concat boundary, store matmul weights in bf16 (biases stay f32)."""
    n_class = params["w3"].shape[1]
    n_class_pad = ((n_class + 127) // 128) * 128

    def pad2(a, rows, cols):
        return jnp.pad(a, ((0, rows - a.shape[0]), (0, cols - a.shape[1])))

    w1p = pad2(params["w1"], 2 * feat_dim, H1_PAD)
    return {
        "w1f": w1p[:feat_dim].astype(jnp.bfloat16),
        "w1s": w1p[feat_dim:].astype(jnp.bfloat16),
        "b1": pad2(params["b1"], 1, H1_PAD),
        "w2": pad2(params["w2"], H1_PAD, H2_PAD).astype(jnp.bfloat16),
        "b2": pad2(params["b2"], 1, H2_PAD),
        "w3": pad2(params["w3"], H2_PAD, n_class_pad).astype(jnp.bfloat16),
        "b3": pad2(params["b3"], 1, n_class_pad),
    }


def _reference(params, xF, xS):
    """Plain-JAX f32 reference mirroring the PyTorch forward (NHWC inputs)."""
    def backbone(x):
        # DenseNet121 tail: relu + global average pool -> (B, C)
        return jnp.mean(jnp.maximum(x.astype(jnp.float32), 0.0), axis=(1, 2))
    x = jnp.concatenate([backbone(xF), backbone(xS)], axis=-1)
    x = jnp.maximum(x @ params["w1"] + params["b1"], 0.0)
    x = jnp.maximum(x @ params["w2"] + params["b2"], 0.0)
    return x @ params["w3"] + params["b3"]


if __name__ == "__main__":
    B, H, W, C = 2, 4, 4, 1024        # C fixed at 1024 by DenseNet121
    N_CLASS = 14

    key = jax.random.PRNGKey(0)
    k_params, k_xf, k_xs = jax.random.split(key, 3)
    params = init_params(k_params, feat_dim=C, n_class=N_CLASS)
    pparams = prepare_params(params, feat_dim=C)

    # Deterministic stand-ins for the two backbones' final feature maps
    # (NHWC, bf16 — the layout/dtype the frozen producer is asked to emit).
    xF = jax.random.normal(k_xf, (B, H, W, C), jnp.float32).astype(jnp.bfloat16)
    xS = jax.random.normal(k_xs, (B, H, W, C), jnp.float32).astype(jnp.bfloat16)

    out = forward_side_apply(pparams, xF, xS, N_CLASS)
    out = jax.block_until_ready(out)

    ref = _reference(params, xF, xS)
    assert out.shape == (B, N_CLASS), out.shape
    # bf16 matmul operands (f32 accumulation) vs f32 reference -> looser tol.
    assert jnp.allclose(out, ref, atol=2e-2, rtol=2e-2), "mismatch vs reference"

    print("KERNEL_OK")
</pallas_src>

<mosaic_0001>
module attributes {stable_mosaic.version = 11 : i64} {
  func.func @_fused_forward_side_kernel(%arg0: i32, %arg1: memref<2x16x1024xbf16, #tpu.memory_space<vmem>>, %arg2: memref<2x16x1024xbf16, #tpu.memory_space<vmem>>, %arg3: memref<1024x512xbf16, #tpu.memory_space<vmem>>, %arg4: memref<1024x512xbf16, #tpu.memory_space<vmem>>, %arg5: memref<1x512xf32, #tpu.memory_space<vmem>>, %arg6: memref<512x128xbf16, #tpu.memory_space<vmem>>, %arg7: memref<1x128xf32, #tpu.memory_space<vmem>>, %arg8: memref<128x128xbf16, #tpu.memory_space<vmem>>, %arg9: memref<1x128xf32, #tpu.memory_space<vmem>>, %arg10: memref<2x128xf32, #tpu.memory_space<vmem>>) attributes {dimension_semantics = [#tpu.dimension_semantics<parallel>], iteration_bounds = array<i64: 1>, scalar_prefetch = 0 : i64, scratch_operands = 0 : i64, tpu.core_type = #tpu.core_type<tc>, window_params = [{transform_indices = @transform_0, window_bounds = array<i64: 2, 16, 1024>}, {transform_indices = @transform_1, window_bounds = array<i64: 2, 16, 1024>}, {pipeline_mode = #tpu.pipeline_mode<synchronous>, transform_indices = @transform_2, window_bounds = array<i64: 1024, 512>}, {pipeline_mode = #tpu.pipeline_mode<synchronous>, transform_indices = @transform_3, window_bounds = array<i64: 1024, 512>}, {pipeline_mode = #tpu.pipeline_mode<synchronous>, transform_indices = @transform_4, window_bounds = array<i64: 1, 512>}, {pipeline_mode = #tpu.pipeline_mode<synchronous>, transform_indices = @transform_5, window_bounds = array<i64: 512, 128>}, {pipeline_mode = #tpu.pipeline_mode<synchronous>, transform_indices = @transform_6, window_bounds = array<i64: 1, 128>}, {pipeline_mode = #tpu.pipeline_mode<synchronous>, transform_indices = @transform_7, window_bounds = array<i64: 128, 128>}, {pipeline_mode = #tpu.pipeline_mode<synchronous>, transform_indices = @transform_8, window_bounds = array<i64: 1, 128>}, {transform_indices = @transform_9, window_bounds = array<i64: 2, 128>}]} {
    %c0 = arith.constant 0 : index
    %c0_0 = arith.constant 0 : index
    %c0_1 = arith.constant 0 : index
    %0 = vector.load %arg1[%c0, %c0_0, %c0_1] : memref<2x16x1024xbf16, #tpu.memory_space<vmem>>, vector<2x16x1024xbf16>
    %1 = arith.extf %0 : vector<2x16x1024xbf16> to vector<2x16x1024xf32>
    %cst = arith.constant 0.000000e+00 : f32
    %2 = vector.broadcast %cst : f32 to vector<2x16x1024xf32>
    %3 = arith.maximumf %1, %2 : vector<2x16x1024xf32>
    %cst_2 = arith.constant dense<0.000000e+00> : vector<2x1024xf32>
    %4 = vector.multi_reduction <add>, %3, %cst_2 [1] : vector<2x16x1024xf32> to vector<2x1024xf32>
    %cst_3 = arith.constant 1.600000e+01 : f32
    %5 = vector.broadcast %cst_3 : f32 to vector<2x1024xf32>
    %6 = arith.divf %4, %5 : vector<2x1024xf32>
    %c0_4 = arith.constant 0 : index
    %c0_5 = arith.constant 0 : index
    %c0_6 = arith.constant 0 : index
    %7 = vector.load %arg2[%c0_4, %c0_5, %c0_6] : memref<2x16x1024xbf16, #tpu.memory_space<vmem>>, vector<2x16x1024xbf16>
    %8 = arith.extf %7 : vector<2x16x1024xbf16> to vector<2x16x1024xf32>
    %cst_7 = arith.constant 0.000000e+00 : f32
    %9 = vector.broadcast %cst_7 : f32 to vector<2x16x1024xf32>
    %10 = arith.maximumf %8, %9 : vector<2x16x1024xf32>
    %cst_8 = arith.constant dense<0.000000e+00> : vector<2x1024xf32>
    %11 = vector.multi_reduction <add>, %10, %cst_8 [1] : vector<2x16x1024xf32> to vector<2x1024xf32>
    %cst_9 = arith.constant 1.600000e+01 : f32
    %12 = vector.broadcast %cst_9 : f32 to vector<2x1024xf32>
    %13 = arith.divf %11, %12 : vector<2x1024xf32>
    %14 = arith.truncf %6 : vector<2x1024xf32> to vector<2x1024xbf16>
    %c0_10 = arith.constant 0 : index
    %c0_11 = arith.constant 0 : index
    %15 = vector.load %arg3[%c0_10, %c0_11] : memref<1024x512xbf16, #tpu.memory_space<vmem>>, vector<1024x512xbf16>
    %cst_12 = arith.constant dense<0.000000e+00> : vector<2x512xf32>
    %16 = tpu.matmul %14, %15, %cst_12 {dimension_numbers = #tpu.dot_dimension_numbers<[1], [0], [0], [1], [0, 0, 1, 1], [], []>} : vector<2x1024xbf16>, vector<1024x512xbf16>, vector<2x512xf32> -> vector<2x512xf32>
    %17 = arith.truncf %13 : vector<2x1024xf32> to vector<2x1024xbf16>
    %c0_13 = arith.constant 0 : index
    %c0_14 = arith.constant 0 : index
    %18 = vector.load %arg4[%c0_13, %c0_14] : memref<1024x512xbf16, #tpu.memory_space<vmem>>, vector<1024x512xbf16>
    %cst_15 = arith.constant dense<0.000000e+00> : vector<2x512xf32>
    %19 = tpu.matmul %17, %18, %cst_15 {dimension_numbers = #tpu.dot_dimension_numbers<[1], [0], [0], [1], [0, 0, 1, 1], [], []>} : vector<2x1024xbf16>, vector<1024x512xbf16>, vector<2x512xf32> -> vector<2x512xf32>
    %20 = arith.addf %16, %19 : vector<2x512xf32>
    %c0_16 = arith.constant 0 : index
    %c0_17 = arith.constant 0 : index
    %21 = vector.load %arg5[%c0_16, %c0_17] : memref<1x512xf32, #tpu.memory_space<vmem>>, vector<1x512xf32>
    %22 = vector.broadcast %21 : vector<1x512xf32> to vector<2x512xf32>
    %23 = arith.addf %20, %22 : vector<2x512xf32>
    %cst_18 = arith.constant 0.000000e+00 : f32
    %24 = vector.broadcast %cst_18 : f32 to vector<2x512xf32>
    %25 = arith.maximumf %23, %24 : vector<2x512xf32>
    %26 = arith.truncf %25 : vector<2x512xf32> to vector<2x512xbf16>
    %c0_19 = arith.constant 0 : index
    %c0_20 = arith.constant 0 : index
    %27 = vector.load %arg6[%c0_19, %c0_20] : memref<512x128xbf16, #tpu.memory_space<vmem>>, vector<512x128xbf16>
    %cst_21 = arith.constant dense<0.000000e+00> : vector<2x128xf32>
    %28 = tpu.matmul %26, %27, %cst_21 {dimension_numbers = #tpu.dot_dimension_numbers<[1], [0], [0], [1], [0, 0, 1, 1], [], []>} : vector<2x512xbf16>, vector<512x128xbf16>, vector<2x128xf32> -> vector<2x128xf32>
    %c0_22 = arith.constant 0 : index
    %c0_23 = arith.constant 0 : index
    %29 = vector.load %arg7[%c0_22, %c0_23] : memref<1x128xf32, #tpu.memory_space<vmem>>, vector<1x128xf32>
    %30 = vector.broadcast %29 : vector<1x128xf32> to vector<2x128xf32>
    %31 = arith.addf %28, %30 : vector<2x128xf32>
    %cst_24 = arith.constant 0.000000e+00 : f32
    %32 = vector.broadcast %cst_24 : f32 to vector<2x128xf32>
    %33 = arith.maximumf %31, %32 : vector<2x128xf32>
    %34 = arith.truncf %33 : vector<2x128xf32> to vector<2x128xbf16>
    %c0_25 = arith.constant 0 : index
    %c0_26 = arith.constant 0 : index
    %35 = vector.load %arg8[%c0_25, %c0_26] : memref<128x128xbf16, #tpu.memory_space<vmem>>, vector<128x128xbf16>
    %cst_27 = arith.constant dense<0.000000e+00> : vector<2x128xf32>
    %36 = tpu.matmul %34, %35, %cst_27 {dimension_numbers = #tpu.dot_dimension_numbers<[1], [0], [0], [1], [0, 0, 1, 1], [], []>} : vector<2x128xbf16>, vector<128x128xbf16>, vector<2x128xf32> -> vector<2x128xf32>
    %c0_28 = arith.constant 0 : index
    %c0_29 = arith.constant 0 : index
    %37 = vector.load %arg9[%c0_28, %c0_29] : memref<1x128xf32, #tpu.memory_space<vmem>>, vector<1x128xf32>
    %38 = vector.broadcast %37 : vector<1x128xf32> to vector<2x128xf32>
    %39 = arith.addf %36, %38 : vector<2x128xf32>
    %c0_30 = arith.constant 0 : index
    %c0_31 = arith.constant 0 : index
    %40 = vector.load %arg10[%c0_30, %c0_31] : memref<2x128xf32, #tpu.memory_space<vmem>>, vector<2x128xf32>
    tpu.vector_store %arg10[%c0_30, %c0_31], %39 {strides = array<i32>} : memref<2x128xf32, #tpu.memory_space<vmem>>, vector<2x128xf32>,
    return
  }
  func.func @transform_0(%arg0: i32) -> (i32, i32, i32) {
    %c0_i32 = arith.constant 0 : i32
    %c0_i32_0 = arith.constant 0 : i32
    %c0_i32_1 = arith.constant 0 : i32
    return %arg0, %c0_i32, %c0_i32_0 : i32, i32, i32
  }
  func.func @transform_1(%arg0: i32) -> (i32, i32, i32) {
    %c0_i32 = arith.constant 0 : i32
    %c0_i32_0 = arith.constant 0 : i32
    %c0_i32_1 = arith.constant 0 : i32
    return %arg0, %c0_i32, %c0_i32_0 : i32, i32, i32
  }
  func.func @transform_2(%arg0: i32) -> (i32, i32) {
    %c0_i32 = arith.constant 0 : i32
    %c0_i32_0 = arith.constant 0 : i32
    %c0_i32_1 = arith.constant 0 : i32
    return %c0_i32, %c0_i32_0 : i32, i32
  }
  func.func @transform_3(%arg0: i32) -> (i32, i32) {
    %c0_i32 = arith.constant 0 : i32
    %c0_i32_0 = arith.constant 0 : i32
    %c0_i32_1 = arith.constant 0 : i32
    return %c0_i32, %c0_i32_0 : i32, i32
  }
  func.func @transform_4(%arg0: i32) -> (i32, i32) {
    %c0_i32 = arith.constant 0 : i32
    %c0_i32_0 = arith.constant 0 : i32
    %c0_i32_1 = arith.constant 0 : i32
    return %c0_i32, %c0_i32_0 : i32, i32
  }
  func.func @transform_5(%arg0: i32) -> (i32, i32) {
    %c0_i32 = arith.constant 0 : i32
    %c0_i32_0 = arith.constant 0 : i32
    %c0_i32_1 = arith.constant 0 : i32
    return %c0_i32, %c0_i32_0 : i32, i32
  }
  func.func @transform_6(%arg0: i32) -> (i32, i32) {
    %c0_i32 = arith.constant 0 : i32
    %c0_i32_0 = arith.constant 0 : i32
    %c0_i32_1 = arith.constant 0 : i32
    return %c0_i32, %c0_i32_0 : i32, i32
  }
  func.func @transform_7(%arg0: i32) -> (i32, i32) {
    %c0_i32 = arith.constant 0 : i32
    %c0_i32_0 = arith.constant 0 : i32
    %c0_i32_1 = arith.constant 0 : i32
    return %c0_i32, %c0_i32_0 : i32, i32
  }
  func.func @transform_8(%arg0: i32) -> (i32, i32) {
    %c0_i32 = arith.constant 0 : i32
    %c0_i32_0 = arith.constant 0 : i32
    %c0_i32_1 = arith.constant 0 : i32
    return %c0_i32, %c0_i32_0 : i32, i32
  }
  func.func @transform_9(%arg0: i32) -> (i32, i32) {
    %c0_i32 = arith.constant 0 : i32
    %c0_i32_0 = arith.constant 0 : i32
    return %arg0, %c0_i32 : i32, i32
  }
}

</mosaic_0001>

<llo_original>
// kernel: tpu_custom_call.1
$region0: #{tpu_custom_call.1}
  #allocation0 [shape = 'u32[]', space=smem, size = 0x4, offset = 0x4, fixed_abs, tag = 'smem constant byte address 0x4 - core index']
  #allocation1 [shape = 'u32[72,128]{1,0:T(1,128)}', space=vmem, size = 0x9000, scoped, tag = 'internal scratch']
  %s0 = inlined_call_operand.hbm [shape: bf16[2,16,1024], index: 0, kind: input, shape index: {}]
  %s1 = inlined_call_operand.hbm [shape: bf16[2,16,1024], index: 1, kind: input, shape index: {}]
  %s2 = inlined_call_operand.hbm [shape: bf16[1024,512], index: 2, kind: input, shape index: {}]
  %s3 = inlined_call_operand.hbm [shape: bf16[1024,512], index: 3, kind: input, shape index: {}]
  %s4 = inlined_call_operand.hbm [shape: f32[1,512], index: 4, kind: input, shape index: {}]
  %s5 = inlined_call_operand.hbm [shape: bf16[512,128], index: 5, kind: input, shape index: {}]
  %s6 = inlined_call_operand.vmem [shape: f32[1,128], index: 6, kind: input, shape index: {}]
  %s7 = inlined_call_operand.hbm [shape: bf16[128,128], index: 7, kind: input, shape index: {}]
  %s8 = inlined_call_operand.vmem [shape: f32[1,128], index: 8, kind: input, shape index: {}]
  %s9 = inlined_call_operand.hbm [shape: f32[2,128], index: 9, kind: output, shape index: {}]
  %s10 = sld [smem:[#allocation0]]
  $region74: #{tpu_custom_call.1} parent=0
    _
  %s12 = ssub.s32 1, %s10
  %s13 = scalar_select 0, %s12, %s10
  $region1: #{tpu_custom_call.1} parent=0
    #allocation2 [shape = 'u8[65536]{0}', space=vmem, size = 0x10000, scoped, tag = 'input window, operand 0, single buffered']
    #allocation3 [shape = 's32[1]{0}', space=sflag, size = 0x4, scoped, tag = 'scoped memory for tpu_custom_call.1']
    #allocation4 [shape = 's32[1]{0}', space=sflag, size = 0x4, scoped, tag = 'scoped memory for tpu_custom_call.1']
    #allocation5 [shape = 'u8[65536]{0}', space=vmem, size = 0x10000, scoped, tag = 'input window, operand 1, single buffered']
    #allocation6 [shape = 's32[1]{0}', space=sflag, size = 0x4, scoped, tag = 'scoped memory for tpu_custom_call.1']
    #allocation7 [shape = 'u8[1048576]{0}', space=vmem, size = 0x100000, scoped, tag = 'input window, operand 2, single buffered']
    #allocation8 [shape = 'u8[1048576]{0}', space=vmem, size = 0x100000, scoped, tag = 'input window, operand 3, single buffered']
    #allocation9 [shape = 's32[1]{0}', space=sflag, size = 0x4, scoped, tag = 'scoped memory for tpu_custom_call.1']
    #allocation10 [shape = 'u8[2048]{0}', space=vmem, size = 0x800, scoped, tag = 'input window, operand 4, single buffered']
    #allocation11 [shape = 'u8[131072]{0}', space=vmem, size = 0x20000, scoped, tag = 'input window, operand 5, single buffered']
    #allocation12 [shape = 's32[1]{0}', space=sflag, size = 0x4, scoped, tag = 'scoped memory for tpu_custom_call.1']
    #allocation13 [shape = 'u8[32768]{0}', space=vmem, size = 0x8000, scoped, tag = 'input window, operand 7, single buffered']
    #allocation14 [shape = 'u8[1024]{0}', space=vmem, size = 0x400, scoped, tag = 'output window, operand 0, single buffered']
    %14 = vsyncpa [#allocation3], 0
    %15 = vsyncpa [#allocation6], 0
    %16 = vsyncpa [#allocation9], 0
    %17 = vsyncpa [#allocation12], 0
    %18 = vsyncpa [#allocation4], 0
    // Predicated region
    $region2: #{tpu_custom_call.1} parent=1 // pred_check
      _
    $region3: #{tpu_custom_call.1} parent=1 // pred_check_branch
      %20 = sbr.rel (0) target = $region5
    $region4: #{tpu_custom_call.1} parent=1 // pred_region
      %22 = vsyncadd [#allocation3], 0
      %s23 = sshll.u32 %s0, 4
      %s24 = int_to_ptr.hbm [resolvable:$true] %s23
      %s25 = sshll.u32 [#allocation2], 4
      %s26 = int_to_ptr.vmem [resolvable:$true] %s25
      %31 = dma.hbm_to_vmem [thread:$0]  %s24, 2048, %s26, [#allocation3], 512, 512, 32
    $region5: #{tpu_custom_call.1} parent=1 // pred_fallthru
      _
    // Predicated region
    $region6: #{tpu_custom_call.1} parent=1 // pred_check
      _
    $region7: #{tpu_custom_call.1} parent=1 // pred_check_branch
      %33 = sbr.rel (0) target = $region9
    $region8: #{tpu_custom_call.1} parent=1 // pred_region
      %35 = vsyncadd [#allocation6], 0
      %s36 = sshll.u32 %s1, 4
      %s37 = int_to_ptr.hbm [resolvable:$true] %s36
      %s38 = sshll.u32 [#allocation5], 4
      %s39 = int_to_ptr.vmem [resolvable:$true] %s38
      %44 = dma.hbm_to_vmem [thread:$0]  %s37, 2048, %s39, [#allocation6], 512, 512, 32
    $region9: #{tpu_custom_call.1} parent=1 // pred_fallthru
      _
    // Predicated region
    $region10: #{tpu_custom_call.1} parent=1 // pred_check
      _
    $region11: #{tpu_custom_call.1} parent=1 // pred_check_branch
      %46 = sbr.rel (0) target = $region13
    $region12: #{tpu_custom_call.1} parent=1 // pred_region
      %48 = vsyncadd [#allocation6], 0
      %s49 = sshll.u32 %s2, 4
      %s50 = int_to_ptr.hbm [resolvable:$true] %s49
      %s51 = sshll.u32 [#allocation7], 4
      %s52 = int_to_ptr.vmem [resolvable:$true] %s51
      %57 = dma.hbm_to_vmem [thread:$0]  %s50, 32768, %s52, [#allocation6], 256, 256, 16
    $region13: #{tpu_custom_call.1} parent=1 // pred_fallthru
      _
    // Predicated region
    $region14: #{tpu_custom_call.1} parent=1 // pred_check
      _
    $region15: #{tpu_custom_call.1} parent=1 // pred_check_branch
      %59 = sbr.rel (0) target = $region17
    $region16: #{tpu_custom_call.1} parent=1 // pred_region
      %61 = vsyncadd [#allocation9], 0
      %s62 = sshll.u32 %s3, 4
      %s63 = int_to_ptr.hbm [resolvable:$true] %s62
      %s64 = sshll.u32 [#allocation8], 4
      %s65 = int_to_ptr.vmem [resolvable:$true] %s64
      %70 = dma.hbm_to_vmem [thread:$0]  %s63, 32768, %s65, [#allocation9], 256, 256, 16
    $region17: #{tpu_custom_call.1} parent=1 // pred_fallthru
      _
    // Predicated region
    $region18: #{tpu_custom_call.1} parent=1 // pred_check
      _
    $region19: #{tpu_custom_call.1} parent=1 // pred_check_branch
      %72 = sbr.rel (0) target = $region21
    $region20: #{tpu_custom_call.1} parent=1 // pred_region
      %74 = vsyncadd [#allocation9], 0
      %s76 = sshll.u32 %s4, 4
      %s77 = int_to_ptr.hbm [resolvable:$true] %s76
      %s78 = sshll.u32 [#allocation10], 4
      %s79 = int_to_ptr.vmem [resolvable:$true] %s78
      %81 = dma.hbm_to_vmem [thread:$0]  %s77, 64, %s79, [#allocation9]
    $region21: #{tpu_custom_call.1} parent=1 // pred_fallthru
      _
    // Predicated region
    $region22: #{tpu_custom_call.1} parent=1 // pred_check
      _
    $region23: #{tpu_custom_call.1} parent=1 // pred_check_branch
      %83 = sbr.rel (0) target = $region25
    $region24: #{tpu_custom_call.1} parent=1 // pred_region
      %85 = vsyncadd [#allocation12], 0
      %s86 = sshll.u32 %s5, 4
      %s87 = int_to_ptr.hbm [resolvable:$true] %s86
      %s88 = sshll.u32 [#allocation11], 4
      %s89 = int_to_ptr.vmem [resolvable:$true] %s88
      %94 = dma.hbm_to_vmem [thread:$0]  %s87, 4096, %s89, [#allocation12], 64, 64, 4
    $region25: #{tpu_custom_call.1} parent=1 // pred_fallthru
      _
    // Predicated region
    $region26: #{tpu_custom_call.1} parent=1 // pred_check
      _
    $region27: #{tpu_custom_call.1} parent=1 // pred_check_branch
      %96 = sbr.rel (0) target = $region29
    $region28: #{tpu_custom_call.1} parent=1 // pred_region
      _
    $region29: #{tpu_custom_call.1} parent=1 // pred_fallthru
      _
    // Predicated region
    $region30: #{tpu_custom_call.1} parent=1 // pred_check
      _
    $region31: #{tpu_custom_call.1} parent=1 // pred_check_branch
      %98 = sbr.rel (0) target = $region33
    $region32: #{tpu_custom_call.1} parent=1 // pred_region
      %100 = vsyncadd [#allocation12], 0
      %s101 = sshll.u32 %s7, 4
      %s102 = int_to_ptr.hbm [resolvable:$true] %s101
      %s103 = sshll.u32 [#allocation13], 4
      %s104 = int_to_ptr.vmem [resolvable:$true] %s103
      %109 = dma.hbm_to_vmem [thread:$0]  %s102, 1024, %s104, [#allocation12], 64, 64, 4
    $region33: #{tpu_custom_call.1} parent=1 // pred_fallthru
      _
    // Predicated region
    $region34: #{tpu_custom_call.1} parent=1 // pred_check
      _
    $region35: #{tpu_custom_call.1} parent=1 // pred_check_branch
      %111 = sbr.rel (0) target = $region37
    $region36: #{tpu_custom_call.1} parent=1 // pred_region
      _
    $region37: #{tpu_custom_call.1} parent=1 // pred_fallthru
      _
    // Predicated region
    $region38: #{tpu_custom_call.1} parent=1 // pred_check
      _
    $region39: #{tpu_custom_call.1} parent=1 // pred_check_branch
      %113 = sbr.rel (0) target = $region41
    $region40: #{tpu_custom_call.1} parent=1 // pred_region
      %115 = dma.done [#allocation3], 2048
    $region41: #{tpu_custom_call.1} parent=1 // pred_fallthru
      _
    // Predicated region
    $region42: #{tpu_custom_call.1} parent=1 // pred_check
      _
    $region43: #{tpu_custom_call.1} parent=1 // pred_check_branch
      %117 = sbr.rel (0) target = $region45
    $region44: #{tpu_custom_call.1} parent=1 // pred_region
      %119 = dma.done [#allocation6], 2048
    $region45: #{tpu_custom_call.1} parent=1 // pred_fallthru
      _
    // Predicated region
    $region46: #{tpu_custom_call.1} parent=1 // pred_check
      _
    $region47: #{tpu_custom_call.1} parent=1 // pred_check_branch
      %121 = sbr.rel (0) target = $region49
    $region48: #{tpu_custom_call.1} parent=1 // pred_region
      %123 = dma.done [#allocation6], 32768
    $region49: #{tpu_custom_call.1} parent=1 // pred_fallthru
      _
    // Predicated region
    $region50: #{tpu_custom_call.1} parent=1 // pred_check
      _
    $region51: #{tpu_custom_call.1} parent=1 // pred_check_branch
      %125 = sbr.rel (0) target = $region53
    $region52: #{tpu_custom_call.1} parent=1 // pred_region
      %127 = dma.done [#allocation9], 32768
    $region53: #{tpu_custom_call.1} parent=1 // pred_fallthru
      _
    // Predicated region
    $region54: #{tpu_custom_call.1} parent=1 // pred_check
      _
    $region55: #{tpu_custom_call.1} parent=1 // pred_check_branch
      %129 = sbr.rel (0) target = $region57
    $region56: #{tpu_custom_call.1} parent=1 // pred_region
      %131 = dma.done [#allocation9], 64
    $region57: #{tpu_custom_call.1} parent=1 // pred_fallthru
      _
    // Predicated region
    $region58: #{tpu_custom_call.1} parent=1 // pred_check
      _
    $region59: #{tpu_custom_call.1} parent=1 // pred_check_branch
      %133 = sbr.rel (0) target = $region61
    $region60: #{tpu_custom_call.1} parent=1 // pred_region
      %135 = dma.done [#allocation12], 4096
    $region61: #{tpu_custom_call.1} parent=1 // pred_fallthru
      _
    // Predicated region
    $region62: #{tpu_custom_call.1} parent=1 // pred_check
      _
    $region63: #{tpu_custom_call.1} parent=1 // pred_check_branch
      %137 = sbr.rel (0) target = $region65
    $region64: #{tpu_custom_call.1} parent=1 // pred_region
      %139 = dma.done [#allocation12], 1024
    $region65: #{tpu_custom_call.1} parent=1 // pred_fallthru
      _
    %v140 = vld [vmem:[#allocation2] sm:$0xff]
    %v141 = vld [vmem:[#allocation2 + $0x8] sm:$0xff]
    %v142 = vld [vmem:[#allocation2 + $0x10] sm:$0xff]
    %v143 = vld [vmem:[#allocation2 + $0x18] sm:$0xff]
    %v144 = vld [vmem:[#allocation2 + $0x20] sm:$0xff]
    %v145 = vld [vmem:[#allocation2 + $0x28] sm:$0xff]
    %v146 = vld [vmem:[#allocation2 + $0x30] sm:$0xff]
    %v147 = vld [vmem:[#allocation2 + $0x38] sm:$0xff]
    %v148 = vld [vmem:[#allocation2 + $0x40] sm:$0xff]
    %v149 = vld [vmem:[#allocation2 + $0x48] sm:$0xff]
    %v150 = vld [vmem:[#allocation2 + $0x50] sm:$0xff]
    %v151 = vld [vmem:[#allocation2 + $0x58] sm:$0xff]
    %v152 = vld [vmem:[#allocation2 + $0x60] sm:$0xff]
    %v153 = vld [vmem:[#allocation2 + $0x68] sm:$0xff]
    %v154 = vld [vmem:[#allocation2 + $0x70] sm:$0xff]
    %v155 = vld [vmem:[#allocation2 + $0x78] sm:$0xff]
    %v156 = vunpack.c.l.bf16 %v140
    %v157 = vunpack.c.h.bf16 %v140
    %v158 = vunpack.c.l.bf16 %v141
    %v159 = vunpack.c.h.bf16 %v141
    %v160 = vunpack.c.l.bf16 %v142
    %v161 = vunpack.c.h.bf16 %v142
    %v162 = vunpack.c.l.bf16 %v143
    %v163 = vunpack.c.h.bf16 %v143
    %v164 = vunpack.c.l.bf16 %v144
    %v165 = vunpack.c.h.bf16 %v144
    %v166 = vunpack.c.l.bf16 %v145
    %v167 = vunpack.c.h.bf16 %v145
    %v168 = vunpack.c.l.bf16 %v146
    %v169 = vunpack.c.h.bf16 %v146
    %v170 = vunpack.c.l.bf16 %v147
    %v171 = vunpack.c.h.bf16 %v147
    %v172 = vunpack.c.l.bf16 %v148
    %v173 = vunpack.c.h.bf16 %v148
    %v174 = vunpack.c.l.bf16 %v149
    %v175 = vunpack.c.h.bf16 %v149
    %v176 = vunpack.c.l.bf16 %v150
    %v177 = vunpack.c.h.bf16 %v150
    %v178 = vunpack.c.l.bf16 %v151
    %v179 = vunpack.c.h.bf16 %v151
    %v180 = vunpack.c.l.bf16 %v152
    %v181 = vunpack.c.h.bf16 %v152
    %v182 = vunpack.c.l.bf16 %v153
    %v183 = vunpack.c.h.bf16 %v153
    %v184 = vunpack.c.l.bf16 %v154
    %v185 = vunpack.c.h.bf16 %v154
    %v186 = vunpack.c.l.bf16 %v155
    %v187 = vunpack.c.h.bf16 %v155
    %v188 = vmax.f32 %v156, 0.0
    %v189 = vmax.f32 %v157, 0.0
    %v190 = vmax.f32 %v158, 0.0
    %v191 = vmax.f32 %v159, 0.0
    %v192 = vmax.f32 %v160, 0.0
    %v193 = vmax.f32 %v161, 0.0
    %v194 = vmax.f32 %v162, 0.0
    %v195 = vmax.f32 %v163, 0.0
    %v196 = vmax.f32 %v164, 0.0
    %v197 = vmax.f32 %v165, 0.0
    %v198 = vmax.f32 %v166, 0.0
    %v199 = vmax.f32 %v167, 0.0
    %v200 = vmax.f32 %v168, 0.0
    %v201 = vmax.f32 %v169, 0.0
    %v202 = vmax.f32 %v170, 0.0
    %v203 = vmax.f32 %v171, 0.0
    %v204 = vmax.f32 %v172, 0.0
    %v205 = vmax.f32 %v173, 0.0
    %v206 = vmax.f32 %v174, 0.0
    %v207 = vmax.f32 %v175, 0.0
    %v208 = vmax.f32 %v176, 0.0
    %v209 = vmax.f32 %v177, 0.0
    %v210 = vmax.f32 %v178, 0.0
    %v211 = vmax.f32 %v179, 0.0
    %v212 = vmax.f32 %v180, 0.0
    %v213 = vmax.f32 %v181, 0.0
    %v214 = vmax.f32 %v182, 0.0
    %v215 = vmax.f32 %v183, 0.0
    %v216 = vmax.f32 %v184, 0.0
    %v217 = vmax.f32 %v185, 0.0
    %v218 = vmax.f32 %v186, 0.0
    %v219 = vmax.f32 %v187, 0.0
    %v220 = vadd.f32 %v188, %v196
    %v221 = vrot.slane %v220, 4
    %v222 = vadd.f32 %v220, %v221
    %v223 = vrot.slane %v222, 2
    %v224 = vadd.f32 %v222, %v223
    %v225 = vrot.slane %v224, 1
    %v226 = vadd.f32 %v224, %v225
    %v227 = vadd.f32 %v189, %v197
    %v228 = vrot.slane %v227, 4
    %v229 = vadd.f32 %v227, %v228
    %v230 = vrot.slane %v229, 2
    %v231 = vadd.f32 %v229, %v230
    %v232 = vrot.slane %v231, 1
    %v233 = vadd.f32 %v231, %v232
    %v234 = vadd.f32 %v190, %v198
    %v235 = vrot.slane %v234, 4
    %v236 = vadd.f32 %v234, %v235
    %v237 = vrot.slane %v236, 2
    %v238 = vadd.f32 %v236, %v237
    %v239 = vrot.slane %v238, 1
    %v240 = vadd.f32 %v238, %v239
    %v241 = vadd.f32 %v191, %v199
    %v242 = vrot.slane %v241, 4
    %v243 = vadd.f32 %v241, %v242
    %v244 = vrot.slane %v243, 2
    %v245 = vadd.f32 %v243, %v244
    %v246 = vrot.slane %v245, 1
    %v247 = vadd.f32 %v245, %v246
    %v248 = vadd.f32 %v192, %v200
    %v249 = vrot.slane %v248, 4
    %v250 = vadd.f32 %v248, %v249
    %v251 = vrot.slane %v250, 2
    %v252 = vadd.f32 %v250, %v251
    %v253 = vrot.slane %v252, 1
    %v254 = vadd.f32 %v252, %v253
    %v255 = vadd.f32 %v193, %v201
    %v256 = vrot.slane %v255, 4
    %v257 = vadd.f32 %v255, %v256
    %v258 = vrot.slane %v257, 2
    %v259 = vadd.f32 %v257, %v258
    %v260 = vrot.slane %v259, 1
    %v261 = vadd.f32 %v259, %v260
    %v262 = vadd.f32 %v194, %v202
    %v263 = vrot.slane %v262, 4
    %v264 = vadd.f32 %v262, %v263
    %v265 = vrot.slane %v264, 2
    %v266 = vadd.f32 %v264, %v265
    %v267 = vrot.slane %v266, 1
    %v268 = vadd.f32 %v266, %v267
    %v269 = vadd.f32 %v195, %v203
    %v270 = vrot.slane %v269, 4
    %v271 = vadd.f32 %v269, %v270
    %v272 = vrot.slane %v271, 2
    %v273 = vadd.f32 %v271, %v272
    %v274 = vrot.slane %v273, 1
    %v275 = vadd.f32 %v273, %v274
    %v276 = vadd.f32 %v204, %v212
    %v277 = vrot.slane %v276, 4
    %v278 = vadd.f32 %v276, %v277
    %v279 = vrot.slane %v278, 2
    %v280 = vadd.f32 %v278, %v279
    %v281 = vrot.slane %v280, 1
    %v282 = vadd.f32 %v280, %v281
    %v283 = vadd.f32 %v205, %v213
    %v284 = vrot.slane %v283, 4
    %v285 = vadd.f32 %v283, %v284
    %v286 = vrot.slane %v285, 2
    %v287 = vadd.f32 %v285, %v286
    %v288 = vrot.slane %v287, 1
    %v289 = vadd.f32 %v287, %v288
    %v290 = vadd.f32 %v206, %v214
    %v291 = vrot.slane %v290, 4
    %v292 = vadd.f32 %v290, %v291
    %v293 = vrot.slane %v292, 2
    %v294 = vadd.f32 %v292, %v293
    %v295 = vrot.slane %v294, 1
    %v296 = vadd.f32 %v294, %v295
    %v297 = vadd.f32 %v207, %v215
    %v298 = vrot.slane %v297, 4
    %v299 = vadd.f32 %v297, %v298
    %v300 = vrot.slane %v299, 2
    %v301 = vadd.f32 %v299, %v300
    %v302 = vrot.slane %v301, 1
    %v303 = vadd.f32 %v301, %v302
    %v304 = vadd.f32 %v208, %v216
    %v305 = vrot.slane %v304, 4
    %v306 = vadd.f32 %v304, %v305
    %v307 = vrot.slane %v306, 2
    %v308 = vadd.f32 %v306, %v307
    %v309 = vrot.slane %v308, 1
    %v310 = vadd.f32 %v308, %v309
    %v311 = vadd.f32 %v209, %v217
    %v312 = vrot.slane %v311, 4
    %v313 = vadd.f32 %v311, %v312
    %v314 = vrot.slane %v313, 2
    %v315 = vadd.f32 %v313, %v314
    %v316 = vrot.slane %v315, 1
    %v317 = vadd.f32 %v315, %v316
    %v318 = vadd.f32 %v210, %v218
    %v319 = vrot.slane %v318, 4
    %v320 = vadd.f32 %v318, %v319
    %v321 = vrot.slane %v320, 2
    %v322 = vadd.f32 %v320, %v321
    %v323 = vrot.slane %v322, 1
    %v324 = vadd.f32 %v322, %v323
    %v325 = vadd.f32 %v211, %v219
    %v326 = vrot.slane %v325, 4
    %v327 = vadd.f32 %v325, %v326
    %v328 = vrot.slane %v327, 2
    %v329 = vadd.f32 %v327, %v328
    %v330 = vrot.slane %v329, 1
    %v331 = vadd.f32 %v329, %v330
    %v332 = vrcp.pop 16.0
    %v333 = vmul.f32 16.0, %v332
    %v334 = vsub.f32 1.0, %v333
    %v335 = vmul.f32 %v332, %v334
    %v336 = vadd.f32 %v332, %v335
    %vm337 = vweird.f32 %v332
    %v338 = vsel %vm337, %v332, %v336
    %v339 = vmul.f32 %v226, %v338
    %v340 = vmul.f32 %v233, %v338
    %v341 = vmul.f32 %v240, %v338
    %v342 = vmul.f32 %v247, %v338
    %v343 = vmul.f32 %v254, %v338
    %v344 = vmul.f32 %v261, %v338
    %v345 = vmul.f32 %v268, %v338
    %v346 = vmul.f32 %v275, %v338
    %v347 = vmul.f32 %v282, %v338
    %v348 = vmul.f32 %v289, %v338
    %v349 = vmul.f32 %v296, %v338
    %v350 = vmul.f32 %v303, %v338
    %v351 = vmul.f32 %v310, %v338
    %v352 = vmul.f32 %v317, %v338
    %v353 = vmul.f32 %v324, %v338
    %v354 = vmul.f32 %v331, %v338
    %v355 = vld [vmem:[#allocation5] sm:$0xff]
    %v356 = vld [vmem:[#allocation5 + $0x8] sm:$0xff]
    %v357 = vld [vmem:[#allocation5 + $0x10] sm:$0xff]
    %v358 = vld [vmem:[#allocation5 + $0x18] sm:$0xff]
    %v359 = vld [vmem:[#allocation5 + $0x20] sm:$0xff]
    %v360 = vld [vmem:[#allocation5 + $0x28] sm:$0xff]
    %v361 = vld [vmem:[#allocation5 + $0x30] sm:$0xff]
    %v362 = vld [vmem:[#allocation5 + $0x38] sm:$0xff]
    %v363 = vld [vmem:[#allocation5 + $0x40] sm:$0xff]
    %v364 = vld [vmem:[#allocation5 + $0x48] sm:$0xff]
    %v365 = vld [vmem:[#allocation5 + $0x50] sm:$0xff]
    %v366 = vld [vmem:[#allocation5 + $0x58] sm:$0xff]
    %v367 = vld [vmem:[#allocation5 + $0x60] sm:$0xff]
    %v368 = vld [vmem:[#allocation5 + $0x68] sm:$0xff]
    %v369 = vld [vmem:[#allocation5 + $0x70] sm:$0xff]
    %v370 = vld [vmem:[#allocation5 + $0x78] sm:$0xff]
    %v371 = vunpack.c.l.bf16 %v355
    %v372 = vunpack.c.h.bf16 %v355
    %v373 = vunpack.c.l.bf16 %v356
    %v374 = vunpack.c.h.bf16 %v356
    %v375 = vunpack.c.l.bf16 %v357
    %v376 = vunpack.c.h.bf16 %v357
    %v377 = vunpack.c.l.bf16 %v358
    %v378 = vunpack.c.h.bf16 %v358
    %v379 = vunpack.c.l.bf16 %v359
    %v380 = vunpack.c.h.bf16 %v359
    %v381 = vunpack.c.l.bf16 %v360
    %v382 = vunpack.c.h.bf16 %v360
    %v383 = vunpack.c.l.bf16 %v361
    %v384 = vunpack.c.h.bf16 %v361
    %v385 = vunpack.c.l.bf16 %v362
    %v386 = vunpack.c.h.bf16 %v362
    %v387 = vunpack.c.l.bf16 %v363
    %v388 = vunpack.c.h.bf16 %v363
    %v389 = vunpack.c.l.bf16 %v364
    %v390 = vunpack.c.h.bf16 %v364
    %v391 = vunpack.c.l.bf16 %v365
    %v392 = vunpack.c.h.bf16 %v365
    %v393 = vunpack.c.l.bf16 %v366
    %v394 = vunpack.c.h.bf16 %v366
    %v395 = vunpack.c.l.bf16 %v367
    %v396 = vunpack.c.h.bf16 %v367
    %v397 = vunpack.c.l.bf16 %v368
    %v398 = vunpack.c.h.bf16 %v368
    %v399 = vunpack.c.l.bf16 %v369
    %v400 = vunpack.c.h.bf16 %v369
    %v401 = vunpack.c.l.bf16 %v370
    %v402 = vunpack.c.h.bf16 %v370
    %v403 = vmax.f32 %v371, 0.0
    %v404 = vmax.f32 %v372, 0.0
    %v405 = vmax.f32 %v373, 0.0
    %v406 = vmax.f32 %v374, 0.0
    %v407 = vmax.f32 %v375, 0.0
    %v408 = vmax.f32 %v376, 0.0
    %v409 = vmax.f32 %v377, 0.0
    %v410 = vmax.f32 %v378, 0.0
    %v411 = vmax.f32 %v379, 0.0
    %v412 = vmax.f32 %v380, 0.0
    %v413 = vmax.f32 %v381, 0.0
    %v414 = vmax.f32 %v382, 0.0
    %v415 = vmax.f32 %v383, 0.0
    %v416 = vmax.f32 %v384, 0.0
    %v417 = vmax.f32 %v385, 0.0
    %v418 = vmax.f32 %v386, 0.0
    %v419 = vmax.f32 %v387, 0.0
    %v420 = vmax.f32 %v388, 0.0
    %v421 = vmax.f32 %v389, 0.0
    %v422 = vmax.f32 %v390, 0.0
    %v423 = vmax.f32 %v391, 0.0
    %v424 = vmax.f32 %v392, 0.0
    %v425 = vmax.f32 %v393, 0.0
    %v426 = vmax.f32 %v394, 0.0
    %v427 = vmax.f32 %v395, 0.0
    %v428 = vmax.f32 %v396, 0.0
    %v429 = vmax.f32 %v397, 0.0
    %v430 = vmax.f32 %v398, 0.0
    %v431 = vmax.f32 %v399, 0.0
    %v432 = vmax.f32 %v400, 0.0
    %v433 = vmax.f32 %v401, 0.0
    %v434 = vmax.f32 %v402, 0.0
    %v435 = vadd.f32 %v403, %v411
    %v436 = vrot.slane %v435, 4
    %v437 = vadd.f32 %v435, %v436
    %v438 = vrot.slane %v437, 2
    %v439 = vadd.f32 %v437, %v438
    %v440 = vrot.slane %v439, 1
    %v441 = vadd.f32 %v439, %v440
    %v442 = vadd.f32 %v404, %v412
    %v443 = vrot.slane %v442, 4
    %v444 = vadd.f32 %v442, %v443
    %v445 = vrot.slane %v444, 2
    %v446 = vadd.f32 %v444, %v445
    %v447 = vrot.slane %v446, 1
    %v448 = vadd.f32 %v446, %v447
    %v449 = vadd.f32 %v405, %v413
    %v450 = vrot.slane %v449, 4
    %v451 = vadd.f32 %v449, %v450
    %v452 = vrot.slane %v451, 2
    %v453 = vadd.f32 %v451, %v452
    %v454 = vrot.slane %v453, 1
    %v455 = vadd.f32 %v453, %v454
    %v456 = vadd.f32 %v406, %v414
    %v457 = vrot.slane %v456, 4
    %v458 = vadd.f32 %v456, %v457
    %v459 = vrot.slane %v458, 2
    %v460 = vadd.f32 %v458, %v459
    %v461 = vrot.slane %v460, 1
    %v462 = vadd.f32 %v460, %v461
    %v463 = vadd.f32 %v407, %v415
    %v464 = vrot.slane %v463, 4
    %v465 = vadd.f32 %v463, %v464
    %v466 = vrot.slane %v465, 2
    %v467 = vadd.f32 %v465, %v466
    %v468 = vrot.slane %v467, 1
    %v469 = vadd.f32 %v467, %v468
    %v470 = vadd.f32 %v408, %v416
    %v471 = vrot.slane %v470, 4
    %v472 = vadd.f32 %v470, %v471
    %v473 = vrot.slane %v472, 2
    %v474 = vadd.f32 %v472, %v473
    %v475 = vrot.slane %v474, 1
    %v476 = vadd.f32 %v474, %v475
    %v477 = vadd.f32 %v409, %v417
    %v478 = vrot.slane %v477, 4
    %v479 = vadd.f32 %v477, %v478
    %v480 = vrot.slane %v479, 2
    %v481 = vadd.f32 %v479, %v480
    %v482 = vrot.slane %v481, 1
    %v483 = vadd.f32 %v481, %v482
    %v484 = vadd.f32 %v410, %v418
    %v485 = vrot.slane %v484, 4
    %v486 = vadd.f32 %v484, %v485
    %v487 = vrot.slane %v486, 2
    %v488 = vadd.f32 %v486, %v487
    %v489 = vrot.slane %v488, 1
    %v490 = vadd.f32 %v488, %v489
    %v491 = vadd.f32 %v419, %v427
    %v492 = vrot.slane %v491, 4
    %v493 = vadd.f32 %v491, %v492
    %v494 = vrot.slane %v493, 2
    %v495 = vadd.f32 %v493, %v494
    %v496 = vrot.slane %v495, 1
    %v497 = vadd.f32 %v495, %v496
    %v498 = vadd.f32 %v420, %v428
    %v499 = vrot.slane %v498, 4
    %v500 = vadd.f32 %v498, %v499
    %v501 = vrot.slane %v500, 2
    %v502 = vadd.f32 %v500, %v501
    %v503 = vrot.slane %v502, 1
    %v504 = vadd.f32 %v502, %v503
    %v505 = vadd.f32 %v421, %v429
    %v506 = vrot.slane %v505, 4
    %v507 = vadd.f32 %v505, %v506
    %v508 = vrot.slane %v507, 2
    %v509 = vadd.f32 %v507, %v508
    %v510 = vrot.slane %v509, 1
    %v511 = vadd.f32 %v509, %v510
    %v512 = vadd.f32 %v422, %v430
    %v513 = vrot.slane %v512, 4
    %v514 = vadd.f32 %v512, %v513
    %v515 = vrot.slane %v514, 2
    %v516 = vadd.f32 %v514, %v515
    %v517 = vrot.slane %v516, 1
    %v518 = vadd.f32 %v516, %v517
    %v519 = vadd.f32 %v423, %v431
    %v520 = vrot.slane %v519, 4
    %v521 = vadd.f32 %v519, %v520
    %v522 = vrot.slane %v521, 2
    %v523 = vadd.f32 %v521, %v522
    %v524 = vrot.slane %v523, 1
    %v525 = vadd.f32 %v523, %v524
    %v526 = vadd.f32 %v424, %v432
    %v527 = vrot.slane %v526, 4
    %v528 = vadd.f32 %v526, %v527
    %v529 = vrot.slane %v528, 2
    %v530 = vadd.f32 %v528, %v529
    %v531 = vrot.slane %v530, 1
    %v532 = vadd.f32 %v530, %v531
    %v533 = vadd.f32 %v425, %v433
    %v534 = vrot.slane %v533, 4
    %v535 = vadd.f32 %v533, %v534
    %v536 = vrot.slane %v535, 2
    %v537 = vadd.f32 %v535, %v536
    %v538 = vrot.slane %v537, 1
    %v539 = vadd.f32 %v537, %v538
    %v540 = vadd.f32 %v426, %v434
    %v541 = vrot.slane %v540, 4
    %v542 = vadd.f32 %v540, %v541
    %v543 = vrot.slane %v542, 2
    %v544 = vadd.f32 %v542, %v543
    %v545 = vrot.slane %v544, 1
    %v546 = vadd.f32 %v544, %v545
    %v547 = vmul.f32 %v441, %v338
    %v548 = vmul.f32 %v448, %v338
    %v549 = vmul.f32 %v455, %v338
    %v550 = vmul.f32 %v462, %v338
    %v551 = vmul.f32 %v469, %v338
    %v552 = vmul.f32 %v476, %v338
    %v553 = vmul.f32 %v483, %v338
    %v554 = vmul.f32 %v490, %v338
    %v555 = vmul.f32 %v497, %v338
    %v556 = vmul.f32 %v504, %v338
    %v557 = vmul.f32 %v511, %v338
    %v558 = vmul.f32 %v518, %v338
    %v559 = vmul.f32 %v525, %v338
    %v560 = vmul.f32 %v532, %v338
    %v561 = vmul.f32 %v539, %v338
    %v562 = vmul.f32 %v546, %v338
    %v563 = vpack.c.bf16 %v339, %v339
    %v564 = vpack.c.bf16 %v340, %v340
    %v565 = vpack.c.bf16 %v341, %v341
    %v566 = vpack.c.bf16 %v342, %v342
    %v567 = vpack.c.bf16 %v343, %v343
    %v568 = vpack.c.bf16 %v344, %v344
    %v569 = vpack.c.bf16 %v345, %v345
    %v570 = vpack.c.bf16 %v346, %v346
    %v571 = vpack.c.bf16 %v347, %v347
    %v572 = vpack.c.bf16 %v348, %v348
    %v573 = vpack.c.bf16 %v349, %v349
    %v574 = vpack.c.bf16 %v350, %v350
    %v575 = vpack.c.bf16 %v351, %v351
    %v576 = vpack.c.bf16 %v352, %v352
    %v577 = vpack.c.bf16 %v353, %v353
    %v578 = vpack.c.bf16 %v354, %v354
    %v579 = vld [vmem:[#allocation7] sm:$0xff]
    %v580 = vld [vmem:[#allocation7 + $0x8] sm:$0xff]
    %v581 = vld [vmem:[#allocation7 + $0x10] sm:$0xff]
    %v582 = vld [vmem:[#allocation7 + $0x18] sm:$0xff]
    %v583 = vld [vmem:[#allocation7 + $0x20] sm:$0xff]
    %v584 = vld [vmem:[#allocation7 + $0x28] sm:$0xff]
    %v585 = vld [vmem:[#allocation7 + $0x30] sm:$0xff]
    %v586 = vld [vmem:[#allocation7 + $0x38] sm:$0xff]
    %v587 = vld [vmem:[#allocation7 + $0x40] sm:$0xff]
    %v588 = vld [vmem:[#allocation7 + $0x48] sm:$0xff]
    %v589 = vld [vmem:[#allocation7 + $0x50] sm:$0xff]
    %v590 = vld [vmem:[#allocation7 + $0x58] sm:$0xff]
    %v591 = vld [vmem:[#allocation7 + $0x60] sm:$0xff]
    %v592 = vld [vmem:[#allocation7 + $0x68] sm:$0xff]
    %v593 = vld [vmem:[#allocation7 + $0x70] sm:$0xff]
    %v594 = vld [vmem:[#allocation7 + $0x78] sm:$0xff]
    %v595 = vld [vmem:[#allocation7 + $0x80] sm:$0xff]
    %v596 = vld [vmem:[#allocation7 + $0x88] sm:$0xff]
    %v597 = vld [vmem:[#allocation7 + $0x90] sm:$0xff]
    %v598 = vld [vmem:[#allocation7 + $0x98] sm:$0xff]
    %v599 = vld [vmem:[#allocation7 + $0xa0] sm:$0xff]
    %v600 = vld [vmem:[#allocation7 + $0xa8] sm:$0xff]
    %v601 = vld [vmem:[#allocation7 + $0xb0] sm:$0xff]
    %v602 = vld [vmem:[#allocation7 + $0xb8] sm:$0xff]
    %v603 = vld [vmem:[#allocation7 + $0xc0] sm:$0xff]
    %v604 = vld [vmem:[#allocation7 + $0xc8] sm:$0xff]
    %v605 = vld [vmem:[#allocation7 + $0xd0] sm:$0xff]
    %v606 = vld [vmem:[#allocation7 + $0xd8] sm:$0xff]
    %v607 = vld [vmem:[#allocation7 + $0xe0] sm:$0xff]
    %v608 = vld [vmem:[#allocation7 + $0xe8] sm:$0xff]
    %v609 = vld [vmem:[#allocation7 + $0xf0] sm:$0xff]
    %v610 = vld [vmem:[#allocation7 + $0xf8] sm:$0xff]
    %v611 = vld [vmem:[#allocation7 + $0x100] sm:$0xff]
    %v612 = vld [vmem:[#allocation7 + $0x108] sm:$0xff]
    %v613 = vld [vmem:[#allocation7 + $0x110] sm:$0xff]
    %v614 = vld [vmem:[#allocation7 + $0x118] sm:$0xff]
    %v615 = vld [vmem:[#allocation7 + $0x120] sm:$0xff]
    %v616 = vld [vmem:[#allocation7 + $0x128] sm:$0xff]
    %v617 = vld [vmem:[#allocation7 + $0x130] sm:$0xff]
    %v618 = vld [vmem:[#allocation7 + $0x138] sm:$0xff]
    %v619 = vld [vmem:[#allocation7 + $0x140] sm:$0xff]
    %v620 = vld [vmem:[#allocation7 + $0x148] sm:$0xff]
    %v621 = vld [vmem:[#allocation7 + $0x150] sm:$0xff]
    %v622 = vld [vmem:[#allocation7 + $0x158] sm:$0xff]
    %v623 = vld [vmem:[#allocation7 + $0x160] sm:$0xff]
    %v624 = vld [vmem:[#allocation7 + $0x168] sm:$0xff]
    %v625 = vld [vmem:[#allocation7 + $0x170] sm:$0xff]
    %v626 = vld [vmem:[#allocation7 + $0x178] sm:$0xff]
    %v627 = vld [vmem:[#allocation7 + $0x180] sm:$0xff]
    %v628 = vld [vmem:[#allocation7 + $0x188] sm:$0xff]
    %v629 = vld [vmem:[#allocation7 + $0x190] sm:$0xff]
    %v630 = vld [vmem:[#allocation7 + $0x198] sm:$0xff]
    %v631 = vld [vmem:[#allocation7 + $0x1a0] sm:$0xff]
    %v632 = vld [vmem:[#allocation7 + $0x1a8] sm:$0xff]
    %v633 = vld [vmem:[#allocation7 + $0x1b0] sm:$0xff]
    %v634 = vld [vmem:[#allocation7 + $0x1b8] sm:$0xff]
    %v635 = vld [vmem:[#allocation7 + $0x1c0] sm:$0xff]
    %v636 = vld [vmem:[#allocation7 + $0x1c8] sm:$0xff]
    %v637 = vld [vmem:[#allocation7 + $0x1d0] sm:$0xff]
    %v638 = vld [vmem:[#allocation7 + $0x1d8] sm:$0xff]
    %v639 = vld [vmem:[#allocation7 + $0x1e0] sm:$0xff]
    %v640 = vld [vmem:[#allocation7 + $0x1e8] sm:$0xff]
    %v641 = vld [vmem:[#allocation7 + $0x1f0] sm:$0xff]
    %v642 = vld [vmem:[#allocation7 + $0x1f8] sm:$0xff]
    %v643 = vld [vmem:[#allocation7 + $0x200] sm:$0xff]
    %v644 = vld [vmem:[#allocation7 + $0x208] sm:$0xff]
    %v645 = vld [vmem:[#allocation7 + $0x210] sm:$0xff]
    %v646 = vld [vmem:[#allocation7 + $0x218] sm:$0xff]
    %v647 = vld [vmem:[#allocation7 + $0x220] sm:$0xff]
    %v648 = vld [vmem:[#allocation7 + $0x228] sm:$0xff]
    %v649 = vld [vmem:[#allocation7 + $0x230] sm:$0xff]
    %v650 = vld [vmem:[#allocation7 + $0x238] sm:$0xff]
    %v651 = vld [vmem:[#allocation7 + $0x240] sm:$0xff]
    %v652 = vld [vmem:[#allocation7 + $0x248] sm:$0xff]
    %v653 = vld [vmem:[#allocation7 + $0x250] sm:$0xff]
    %v654 = vld [vmem:[#allocation7 + $0x258] sm:$0xff]
    %v655 = vld [vmem:[#allocation7 + $0x260] sm:$0xff]
    %v656 = vld [vmem:[#allocation7 + $0x268] sm:$0xff]
    %v657 = vld [vmem:[#allocation7 + $0x270] sm:$0xff]
    %v658 = vld [vmem:[#allocation7 + $0x278] sm:$0xff]
    %v659 = vld [vmem:[#allocation7 + $0x280] sm:$0xff]
    %v660 = vld [vmem:[#allocation7 + $0x288] sm:$0xff]
    %v661 = vld [vmem:[#allocation7 + $0x290] sm:$0xff]
    %v662 = vld [vmem:[#allocation7 + $0x298] sm:$0xff]
    %v663 = vld [vmem:[#allocation7 + $0x2a0] sm:$0xff]
    %v664 = vld [vmem:[#allocation7 + $0x2a8] sm:$0xff]
    %v665 = vld [vmem:[#allocation7 + $0x2b0] sm:$0xff]
    %v666 = vld [vmem:[#allocation7 + $0x2b8] sm:$0xff]
    %v667 = vld [vmem:[#allocation7 + $0x2c0] sm:$0xff]
    %v668 = vld [vmem:[#allocation7 + $0x2c8] sm:$0xff]
    %v669 = vld [vmem:[#allocation7 + $0x2d0] sm:$0xff]
    %v670 = vld [vmem:[#allocation7 + $0x2d8] sm:$0xff]
    %v671 = vld [vmem:[#allocation7 + $0x2e0] sm:$0xff]
    %v672 = vld [vmem:[#allocation7 + $0x2e8] sm:$0xff]
    %v673 = vld [vmem:[#allocation7 + $0x2f0] sm:$0xff]
    %v674 = vld [vmem:[#allocation7 + $0x2f8] sm:$0xff]
    %v675 = vld [vmem:[#allocation7 + $0x300] sm:$0xff]
    %v676 = vld [vmem:[#allocation7 + $0x308] sm:$0xff]
    %v677 = vld [vmem:[#allocation7 + $0x310] sm:$0xff]
    %v678 = vld [vmem:[#allocation7 + $0x318] sm:$0xff]
    %v679 = vld [vmem:[#allocation7 + $0x320] sm:$0xff]
    %v680 = vld [vmem:[#allocation7 + $0x328] sm:$0xff]
    %v681 = vld [vmem:[#allocation7 + $0x330] sm:$0xff]
    %v682 = vld [vmem:[#allocation7 + $0x338] sm:$0xff]
    %v683 = vld [vmem:[#allocation7 + $0x340] sm:$0xff]
    %v684 = vld [vmem:[#allocation7 + $0x348] sm:$0xff]
    %v685 = vld [vmem:[#allocation7 + $0x350] sm:$0xff]
    %v686 = vld [vmem:[#allocation7 + $0x358] sm:$0xff]
    %v687 = vld [vmem:[#allocation7 + $0x360] sm:$0xff]
    %v688 = vld [vmem:[#allocation7 + $0x368] sm:$0xff]
    %v689 = vld [vmem:[#allocation7 + $0x370] sm:$0xff]
    %v690 = vld [vmem:[#allocation7 + $0x378] sm:$0xff]
    %v691 = vld [vmem:[#allocation7 + $0x380] sm:$0xff]
    %v692 = vld [vmem:[#allocation7 + $0x388] sm:$0xff]
    %v693 = vld [vmem:[#allocation7 + $0x390] sm:$0xff]
    %v694 = vld [vmem:[#allocation7 + $0x398] sm:$0xff]
    %v695 = vld [vmem:[#allocation7 + $0x3a0] sm:$0xff]
    %v696 = vld [vmem:[#allocation7 + $0x3a8] sm:$0xff]
    %v697 = vld [vmem:[#allocation7 + $0x3b0] sm:$0xff]
    %v698 = vld [vmem:[#allocation7 + $0x3b8] sm:$0xff]
    %v699 = vld [vmem:[#allocation7 + $0x3c0] sm:$0xff]
    %v700 = vld [vmem:[#allocation7 + $0x3c8] sm:$0xff]
    %v701 = vld [vmem:[#allocation7 + $0x3d0] sm:$0xff]
    %v702 = vld [vmem:[#allocation7 + $0x3d8] sm:$0xff]
    %v703 = vld [vmem:[#allocation7 + $0x3e0] sm:$0xff]
    %v704 = vld [vmem:[#allocation7 + $0x3e8] sm:$0xff]
    %v705 = vld [vmem:[#allocation7 + $0x3f0] sm:$0xff]
    %v706 = vld [vmem:[#allocation7 + $0x3f8] sm:$0xff]
    %v707 = vld [vmem:[#allocation7 + $0x400] sm:$0xff]
    %v708 = vld [vmem:[#allocation7 + $0x408] sm:$0xff]
    %v709 = vld [vmem:[#allocation7 + $0x410] sm:$0xff]
    %v710 = vld [vmem:[#allocation7 + $0x418] sm:$0xff]
    %v711 = vld [vmem:[#allocation7 + $0x420] sm:$0xff]
    %v712 = vld [vmem:[#allocation7 + $0x428] sm:$0xff]
    %v713 = vld [vmem:[#allocation7 + $0x430] sm:$0xff]
    %v714 = vld [vmem:[#allocation7 + $0x438] sm:$0xff]
    %v715 = vld [vmem:[#allocation7 + $0x440] sm:$0xff]
    %v716 = vld [vmem:[#allocation7 + $0x448] sm:$0xff]
    %v717 = vld [vmem:[#allocation7 + $0x450] sm:$0xff]
    %v718 = vld [vmem:[#allocation7 + $0x458] sm:$0xff]
    %v719 = vld [vmem:[#allocation7 + $0x460] sm:$0xff]
    %v720 = vld [vmem:[#allocation7 + $0x468] sm:$0xff]
    %v721 = vld [vmem:[#allocation7 + $0x470] sm:$0xff]
    %v722 = vld [vmem:[#allocation7 + $0x478] sm:$0xff]
    %v723 = vld [vmem:[#allocation7 + $0x480] sm:$0xff]
    %v724 = vld [vmem:[#allocation7 + $0x488] sm:$0xff]
    %v725 = vld [vmem:[#allocation7 + $0x490] sm:$0xff]
    %v726 = vld [vmem:[#allocation7 + $0x498] sm:$0xff]
    %v727 = vld [vmem:[#allocation7 + $0x4a0] sm:$0xff]
    %v728 = vld [vmem:[#allocation7 + $0x4a8] sm:$0xff]
    %v729 = vld [vmem:[#allocation7 + $0x4b0] sm:$0xff]
    %v730 = vld [vmem:[#allocation7 + $0x4b8] sm:$0xff]
    %v731 = vld [vmem:[#allocation7 + $0x4c0] sm:$0xff]
    %v732 = vld [vmem:[#allocation7 + $0x4c8] sm:$0xff]
    %v733 = vld [vmem:[#allocation7 + $0x4d0] sm:$0xff]
    %v734 = vld [vmem:[#allocation7 + $0x4d8] sm:$0xff]
    %v735 = vld [vmem:[#allocation7 + $0x4e0] sm:$0xff]
    %v736 = vld [vmem:[#allocation7 + $0x4e8] sm:$0xff]
    %v737 = vld [vmem:[#allocation7 + $0x4f0] sm:$0xff]
    %v738 = vld [vmem:[#allocation7 + $0x4f8] sm:$0xff]
    %v739 = vld [vmem:[#allocation7 + $0x500] sm:$0xff]
    %v740 = vld [vmem:[#allocation7 + $0x508] sm:$0xff]
    %v741 = vld [vmem:[#allocation7 + $0x510] sm:$0xff]
    %v742 = vld [vmem:[#allocation7 + $0x518] sm:$0xff]
    %v743 = vld [vmem:[#allocation7 + $0x520] sm:$0xff]
    %v744 = vld [vmem:[#allocation7 + $0x528] sm:$0xff]
    %v745 = vld [vmem:[#allocation7 + $0x530] sm:$0xff]
    %v746 = vld [vmem:[#allocation7 + $0x538] sm:$0xff]
    %v747 = vld [vmem:[#allocation7 + $0x540] sm:$0xff]
    %v748 = vld [vmem:[#allocation7 + $0x548] sm:$0xff]
    %v749 = vld [vmem:[#allocation7 + $0x550] sm:$0xff]
    %v750 = vld [vmem:[#allocation7 + $0x558] sm:$0xff]
    %v751 = vld [vmem:[#allocation7 + $0x560] sm:$0xff]
    %v752 = vld [vmem:[#allocation7 + $0x568] sm:$0xff]
    %v753 = vld [vmem:[#allocation7 + $0x570] sm:$0xff]
    %v754 = vld [vmem:[#allocation7 + $0x578] sm:$0xff]
    %v755 = vld [vmem:[#allocation7 + $0x580] sm:$0xff]
    %v756 = vld [vmem:[#allocation7 + $0x588] sm:$0xff]
    %v757 = vld [vmem:[#allocation7 + $0x590] sm:$0xff]
    %v758 = vld [vmem:[#allocation7 + $0x598] sm:$0xff]
    %v759 = vld [vmem:[#allocation7 + $0x5a0] sm:$0xff]
    %v760 = vld [vmem:[#allocation7 + $0x5a8] sm:$0xff]
    %v761 = vld [vmem:[#allocation7 + $0x5b0] sm:$0xff]
    %v762 = vld [vmem:[#allocation7 + $0x5b8] sm:$0xff]
    %v763 = vld [vmem:[#allocation7 + $0x5c0] sm:$0xff]
    %v764 = vld [vmem:[#allocation7 + $0x5c8] sm:$0xff]
    %v765 = vld [vmem:[#allocation7 + $0x5d0] sm:$0xff]
    %v766 = vld [vmem:[#allocation7 + $0x5d8] sm:$0xff]
    %v767 = vld [vmem:[#allocation7 + $0x5e0] sm:$0xff]
    %v768 = vld [vmem:[#allocation7 + $0x5e8] sm:$0xff]
    %v769 = vld [vmem:[#allocation7 + $0x5f0] sm:$0xff]
    %v770 = vld [vmem:[#allocation7 + $0x5f8] sm:$0xff]
    %v771 = vld [vmem:[#allocation7 + $0x600] sm:$0xff]
    %v772 = vld [vmem:[#allocation7 + $0x608] sm:$0xff]
    %v773 = vld [vmem:[#allocation7 + $0x610] sm:$0xff]
    %v774 = vld [vmem:[#allocation7 + $0x618] sm:$0xff]
    %v775 = vld [vmem:[#allocation7 + $0x620] sm:$0xff]
    %v776 = vld [vmem:[#allocation7 + $0x628] sm:$0xff]
    %v777 = vld [vmem:[#allocation7 + $0x630] sm:$0xff]
    %v778 = vld [vmem:[#allocation7 + $0x638] sm:$0xff]
    %v779 = vld [vmem:[#allocation7 + $0x640] sm:$0xff]
    %v780 = vld [vmem:[#allocation7 + $0x648] sm:$0xff]
    %v781 = vld [vmem:[#allocation7 + $0x650] sm:$0xff]
    %v782 = vld [vmem:[#allocation7 + $0x658] sm:$0xff]
    %v783 = vld [vmem:[#allocation7 + $0x660] sm:$0xff]
    %v784 = vld [vmem:[#allocation7 + $0x668] sm:$0xff]
    %v785 = vld [vmem:[#allocation7 + $0x670] sm:$0xff]
    %v786 = vld [vmem:[#allocation7 + $0x678] sm:$0xff]
    %v787 = vld [vmem:[#allocation7 + $0x680] sm:$0xff]
    %v788 = vld [vmem:[#allocation7 + $0x688] sm:$0xff]
    %v789 = vld [vmem:[#allocation7 + $0x690] sm:$0xff]
    %v790 = vld [vmem:[#allocation7 + $0x698] sm:$0xff]
    %v791 = vld [vmem:[#allocation7 + $0x6a0] sm:$0xff]
    %v792 = vld [vmem:[#allocation7 + $0x6a8] sm:$0xff]
    %v793 = vld [vmem:[#allocation7 + $0x6b0] sm:$0xff]
    %v794 = vld [vmem:[#allocation7 + $0x6b8] sm:$0xff]
    %v795 = vld [vmem:[#allocation7 + $0x6c0] sm:$0xff]
    %v796 = vld [vmem:[#allocation7 + $0x6c8] sm:$0xff]
    %v797 = vld [vmem:[#allocation7 + $0x6d0] sm:$0xff]
    %v798 = vld [vmem:[#allocation7 + $0x6d8] sm:$0xff]
    %v799 = vld [vmem:[#allocation7 + $0x6e0] sm:$0xff]
    %v800 = vld [vmem:[#allocation7 + $0x6e8] sm:$0xff]
    %v801 = vld [vmem:[#allocation7 + $0x6f0] sm:$0xff]
    %v802 = vld [vmem:[#allocation7 + $0x6f8] sm:$0xff]
    %v803 = vld [vmem:[#allocation7 + $0x700] sm:$0xff]
    %v804 = vld [vmem:[#allocation7 + $0x708] sm:$0xff]
    %v805 = vld [vmem:[#allocation7 + $0x710] sm:$0xff]
    %v806 = vld [vmem:[#allocation7 + $0x718] sm:$0xff]
    %v807 = vld [vmem:[#allocation7 + $0x720] sm:$0xff]
    %v808 = vld [vmem:[#allocation7 + $0x728] sm:$0xff]
    %v809 = vld [vmem:[#allocation7 + $0x730] sm:$0xff]
    %v810 = vld [vmem:[#allocation7 + $0x738] sm:$0xff]
    %v811 = vld [vmem:[#allocation7 + $0x740] sm:$0xff]
    %v812 = vld [vmem:[#allocation7 + $0x748] sm:$0xff]
    %v813 = vld [vmem:[#allocation7 + $0x750] sm:$0xff]
    %v814 = vld [vmem:[#allocation7 + $0x758] sm:$0xff]
    %v815 = vld [vmem:[#allocation7 + $0x760] sm:$0xff]
    %v816 = vld [vmem:[#allocation7 + $0x768] sm:$0xff]
    %v817 = vld [vmem:[#allocation7 + $0x770] sm:$0xff]
    %v818 = vld [vmem:[#allocation7 + $0x778] sm:$0xff]
    %v819 = vld [vmem:[#allocation7 + $0x780] sm:$0xff]
    %v820 = vld [vmem:[#allocation7 + $0x788] sm:$0xff]
    %v821 = vld [vmem:[#allocation7 + $0x790] sm:$0xff]
    %v822 = vld [vmem:[#allocation7 + $0x798] sm:$0xff]
    %v823 = vld [vmem:[#allocation7 + $0x7a0] sm:$0xff]
    %v824 = vld [vmem:[#allocation7 + $0x7a8] sm:$0xff]
    %v825 = vld [vmem:[#allocation7 + $0x7b0] sm:$0xff]
    %v826 = vld [vmem:[#allocation7 + $0x7b8] sm:$0xff]
    %v827 = vld [vmem:[#allocation7 + $0x7c0] sm:$0xff]
    %v828 = vld [vmem:[#allocation7 + $0x7c8] sm:$0xff]
    %v829 = vld [vmem:[#allocation7 + $0x7d0] sm:$0xff]
    %v830 = vld [vmem:[#allocation7 + $0x7d8] sm:$0xff]
    %v831 = vld [vmem:[#allocation7 + $0x7e0] sm:$0xff]
    %v832 = vld [vmem:[#allocation7 + $0x7e8] sm:$0xff]
    %v833 = vld [vmem:[#allocation7 + $0x7f0] sm:$0xff]
    %v834 = vld [vmem:[#allocation7 + $0x7f8] sm:$0xff]
    %v835 = vpack.c.bf16 %v547, %v547
    %v836 = vpack.c.bf16 %v548, %v548
    %v837 = vpack.c.bf16 %v549, %v549
    %v838 = vpack.c.bf16 %v550, %v550
    %v839 = vpack.c.bf16 %v551, %v551
    %v840 = vpack.c.bf16 %v552, %v552
    %v841 = vpack.c.bf16 %v553, %v553
    %v842 = vpack.c.bf16 %v554, %v554
    %v843 = vpack.c.bf16 %v555, %v555
    %v844 = vpack.c.bf16 %v556, %v556
    %v845 = vpack.c.bf16 %v557, %v557
    %v846 = vpack.c.bf16 %v558, %v558
    %v847 = vpack.c.bf16 %v559, %v559
    %v848 = vpack.c.bf16 %v560, %v560
    %v849 = vpack.c.bf16 %v561, %v561
    %v850 = vpack.c.bf16 %v562, %v562
    %v851 = vld [vmem:[#allocation8] sm:$0xff]
    %v852 = vld [vmem:[#allocation8 + $0x8] sm:$0xff]
    %v853 = vld [vmem:[#allocation8 + $0x10] sm:$0xff]
    %v854 = vld [vmem:[#allocation8 + $0x18] sm:$0xff]
    %v855 = vld [vmem:[#allocation8 + $0x20] sm:$0xff]
    %v856 = vld [vmem:[#allocation8 + $0x28] sm:$0xff]
    %v857 = vld [vmem:[#allocation8 + $0x30] sm:$0xff]
    %v858 = vld [vmem:[#allocation8 + $0x38] sm:$0xff]
    %v859 = vld [vmem:[#allocation8 + $0x40] sm:$0xff]
    %v860 = vld [vmem:[#allocation8 + $0x48] sm:$0xff]
    %v861 = vld [vmem:[#allocation8 + $0x50] sm:$0xff]
    %v862 = vld [vmem:[#allocation8 + $0x58] sm:$0xff]
    %v863 = vld [vmem:[#allocation8 + $0x60] sm:$0xff]
    %v864 = vld [vmem:[#allocation8 + $0x68] sm:$0xff]
    %v865 = vld [vmem:[#allocation8 + $0x70] sm:$0xff]
    %v866 = vld [vmem:[#allocation8 + $0x78] sm:$0xff]
    %v867 = vld [vmem:[#allocation8 + $0x80] sm:$0xff]
    %v868 = vld [vmem:[#allocation8 + $0x88] sm:$0xff]
    %v869 = vld [vmem:[#allocation8 + $0x90] sm:$0xff]
    %v870 = vld [vmem:[#allocation8 + $0x98] sm:$0xff]
    %v871 = vld [vmem:[#allocation8 + $0xa0] sm:$0xff]
    %v872 = vld [vmem:[#allocation8 + $0xa8] sm:$0xff]
    %v873 = vld [vmem:[#allocation8 + $0xb0] sm:$0xff]
    %v874 = vld [vmem:[#allocation8 + $0xb8] sm:$0xff]
    %v875 = vld [vmem:[#allocation8 + $0xc0] sm:$0xff]
    %v876 = vld [vmem:[#allocation8 + $0xc8] sm:$0xff]
    %v877 = vld [vmem:[#allocation8 + $0xd0] sm:$0xff]
    %v878 = vld [vmem:[#allocation8 + $0xd8] sm:$0xff]
    %v879 = vld [vmem:[#allocation8 + $0xe0] sm:$0xff]
    %v880 = vld [vmem:[#allocation8 + $0xe8] sm:$0xff]
    %v881 = vld [vmem:[#allocation8 + $0xf0] sm:$0xff]
    %v882 = vld [vmem:[#allocation8 + $0xf8] sm:$0xff]
    %v883 = vld [vmem:[#allocation8 + $0x100] sm:$0xff]
    %v884 = vld [vmem:[#allocation8 + $0x108] sm:$0xff]
    %v885 = vld [vmem:[#allocation8 + $0x110] sm:$0xff]
    %v886 = vld [vmem:[#allocation8 + $0x118] sm:$0xff]
    %v887 = vld [vmem:[#allocation8 + $0x120] sm:$0xff]
    %v888 = vld [vmem:[#allocation8 + $0x128] sm:$0xff]
    %v889 = vld [vmem:[#allocation8 + $0x130] sm:$0xff]
    %v890 = vld [vmem:[#allocation8 + $0x138] sm:$0xff]
    %v891 = vld [vmem:[#allocation8 + $0x140] sm:$0xff]
    %v892 = vld [vmem:[#allocation8 + $0x148] sm:$0xff]
    %v893 = vld [vmem:[#allocation8 + $0x150] sm:$0xff]
    %v894 = vld [vmem:[#allocation8 + $0x158] sm:$0xff]
    %v895 = vld [vmem:[#allocation8 + $0x160] sm:$0xff]
    %v896 = vld [vmem:[#allocation8 + $0x168] sm:$0xff]
    %v897 = vld [vmem:[#allocation8 + $0x170] sm:$0xff]
    %v898 = vld [vmem:[#allocation8 + $0x178] sm:$0xff]
    %v899 = vld [vmem:[#allocation8 + $0x180] sm:$0xff]
    %v900 = vld [vmem:[#allocation8 + $0x188] sm:$0xff]
    %v901 = vld [vmem:[#allocation8 + $0x190] sm:$0xff]
    %v902 = vld [vmem:[#allocation8 + $0x198] sm:$0xff]
    %v903 = vld [vmem:[#allocation8 + $0x1a0] sm:$0xff]
    %v904 = vld [vmem:[#allocation8 + $0x1a8] sm:$0xff]
    %v905 = vld [vmem:[#allocation8 + $0x1b0] sm:$0xff]
    %v906 = vld [vmem:[#allocation8 + $0x1b8] sm:$0xff]
    %v907 = vld [vmem:[#allocation8 + $0x1c0] sm:$0xff]
    %v908 = vld [vmem:[#allocation8 + $0x1c8] sm:$0xff]
    %v909 = vld [vmem:[#allocation8 + $0x1d0] sm:$0xff]
    %v910 = vld [vmem:[#allocation8 + $0x1d8] sm:$0xff]
    %v911 = vld [vmem:[#allocation8 + $0x1e0] sm:$0xff]
    %v912 = vld [vmem:[#allocation8 + $0x1e8] sm:$0xff]
    %v913 = vld [vmem:[#allocation8 + $0x1f0] sm:$0xff]
    %v914 = vld [vmem:[#allocation8 + $0x1f8] sm:$0xff]
    %v915 = vld [vmem:[#allocation8 + $0x200] sm:$0xff]
    %v916 = vld [vmem:[#allocation8 + $0x208] sm:$0xff]
    %v917 = vld [vmem:[#allocation8 + $0x210] sm:$0xff]
    %v918 = vld [vmem:[#allocation8 + $0x218] sm:$0xff]
    %v919 = vld [vmem:[#allocation8 + $0x220] sm:$0xff]
    %v920 = vld [vmem:[#allocation8 + $0x228] sm:$0xff]
    %v921 = vld [vmem:[#allocation8 + $0x230] sm:$0xff]
    %v922 = vld [vmem:[#allocation8 + $0x238] sm:$0xff]
    %v923 = vld [vmem:[#allocation8 + $0x240] sm:$0xff]
    %v924 = vld [vmem:[#allocation8 + $0x248] sm:$0xff]
    %v925 = vld [vmem:[#allocation8 + $0x250] sm:$0xff]
    %v926 = vld [vmem:[#allocation8 + $0x258] sm:$0xff]
    %v927 = vld [vmem:[#allocation8 + $0x260] sm:$0xff]
    %v928 = vld [vmem:[#allocation8 + $0x268] sm:$0xff]
    %v929 = vld [vmem:[#allocation8 + $0x270] sm:$0xff]
    %v930 = vld [vmem:[#allocation8 + $0x278] sm:$0xff]
    %v931 = vld [vmem:[#allocation8 + $0x280] sm:$0xff]
    %v932 = vld [vmem:[#allocation8 + $0x288] sm:$0xff]
    %v933 = vld [vmem:[#allocation8 + $0x290] sm:$0xff]
    %v934 = vld [vmem:[#allocation8 + $0x298] sm:$0xff]
    %v935 = vld [vmem:[#allocation8 + $0x2a0] sm:$0xff]
    %v936 = vld [vmem:[#allocation8 + $0x2a8] sm:$0xff]
    %v937 = vld [vmem:[#allocation8 + $0x2b0] sm:$0xff]
    %v938 = vld [vmem:[#allocation8 + $0x2b8] sm:$0xff]
    %v939 = vld [vmem:[#allocation8 + $0x2c0] sm:$0xff]
    %v940 = vld [vmem:[#allocation8 + $0x2c8] sm:$0xff]
    %v941 = vld [vmem:[#allocation8 + $0x2d0] sm:$0xff]
    %v942 = vld [vmem:[#allocation8 + $0x2d8] sm:$0xff]
    %v943 = vld [vmem:[#allocation8 + $0x2e0] sm:$0xff]
    %v944 = vld [vmem:[#allocation8 + $0x2e8] sm:$0xff]
    %v945 = vld [vmem:[#allocation8 + $0x2f0] sm:$0xff]
    %v946 = vld [vmem:[#allocation8 + $0x2f8] sm:$0xff]
    %v947 = vld [vmem:[#allocation8 + $0x300] sm:$0xff]
    %v948 = vld [vmem:[#allocation8 + $0x308] sm:$0xff]
    %v949 = vld [vmem:[#allocation8 + $0x310] sm:$0xff]
    %v950 = vld [vmem:[#allocation8 + $0x318] sm:$0xff]
    %v951 = vld [vmem:[#allocation8 + $0x320] sm:$0xff]
    %v952 = vld [vmem:[#allocation8 + $0x328] sm:$0xff]
    %v953 = vld [vmem:[#allocation8 + $0x330] sm:$0xff]
    %v954 = vld [vmem:[#allocation8 + $0x338] sm:$0xff]
    %v955 = vld [vmem:[#allocation8 + $0x340] sm:$0xff]
    %v956 = vld [vmem:[#allocation8 + $0x348] sm:$0xff]
    %v957 = vld [vmem:[#allocation8 + $0x350] sm:$0xff]
    %v958 = vld [vmem:[#allocation8 + $0x358] sm:$0xff]
    %v959 = vld [vmem:[#allocation8 + $0x360] sm:$0xff]
    %v960 = vld [vmem:[#allocation8 + $0x368] sm:$0xff]
    %v961 = vld [vmem:[#allocation8 + $0x370] sm:$0xff]
    %v962 = vld [vmem:[#allocation8 + $0x378] sm:$0xff]
    %v963 = vld [vmem:[#allocation8 + $0x380] sm:$0xff]
    %v964 = vld [vmem:[#allocation8 + $0x388] sm:$0xff]
    %v965 = vld [vmem:[#allocation8 + $0x390] sm:$0xff]
    %v966 = vld [vmem:[#allocation8 + $0x398] sm:$0xff]
    %v967 = vld [vmem:[#allocation8 + $0x3a0] sm:$0xff]
    %v968 = vld [vmem:[#allocation8 + $0x3a8] sm:$0xff]
    %v969 = vld [vmem:[#allocation8 + $0x3b0] sm:$0xff]
    %v970 = vld [vmem:[#allocation8 + $0x3b8] sm:$0xff]
    %v971 = vld [vmem:[#allocation8 + $0x3c0] sm:$0xff]
    %v972 = vld [vmem:[#allocation8 + $0x3c8] sm:$0xff]
    %v973 = vld [vmem:[#allocation8 + $0x3d0] sm:$0xff]
    %v974 = vld [vmem:[#allocation8 + $0x3d8] sm:$0xff]
    %v975 = vld [vmem:[#allocation8 + $0x3e0] sm:$0xff]
    %v976 = vld [vmem:[#allocation8 + $0x3e8] sm:$0xff]
    %v977 = vld [vmem:[#allocation8 + $0x3f0] sm:$0xff]
    %v978 = vld [vmem:[#allocation8 + $0x3f8] sm:$0xff]
    %v979 = vld [vmem:[#allocation8 + $0x400] sm:$0xff]
    %v980 = vld [vmem:[#allocation8 + $0x408] sm:$0xff]
    %v981 = vld [vmem:[#allocation8 + $0x410] sm:$0xff]
    %v982 = vld [vmem:[#allocation8 + $0x418] sm:$0xff]
    %v983 = vld [vmem:[#allocation8 + $0x420] sm:$0xff]
    %v984 = vld [vmem:[#allocation8 + $0x428] sm:$0xff]
    %v985 = vld [vmem:[#allocation8 + $0x430] sm:$0xff]
    %v986 = vld [vmem:[#allocation8 + $0x438] sm:$0xff]
    %v987 = vld [vmem:[#allocation8 + $0x440] sm:$0xff]
    %v988 = vld [vmem:[#allocation8 + $0x448] sm:$0xff]
    %v989 = vld [vmem:[#allocation8 + $0x450] sm:$0xff]
    %v990 = vld [vmem:[#allocation8 + $0x458] sm:$0xff]
    %v991 = vld [vmem:[#allocation8 + $0x460] sm:$0xff]
    %v992 = vld [vmem:[#allocation8 + $0x468] sm:$0xff]
    %v993 = vld [vmem:[#allocation8 + $0x470] sm:$0xff]
    %v994 = vld [vmem:[#allocation8 + $0x478] sm:$0xff]
    %v995 = vld [vmem:[#allocation8 + $0x480] sm:$0xff]
    %v996 = vld [vmem:[#allocation8 + $0x488] sm:$0xff]
    %v997 = vld [vmem:[#allocation8 + $0x490] sm:$0xff]
    %v998 = vld [vmem:[#allocation8 + $0x498] sm:$0xff]
    %v999 = vld [vmem:[#allocation8 + $0x4a0] sm:$0xff]
    %v1000 = vld [vmem:[#allocation8 + $0x4a8] sm:$0xff]
    %v1001 = vld [vmem:[#allocation8 + $0x4b0] sm:$0xff]
    %v1002 = vld [vmem:[#allocation8 + $0x4b8] sm:$0xff]
    %v1003 = vld [vmem:[#allocation8 + $0x4c0] sm:$0xff]
    %v1004 = vld [vmem:[#allocation8 + $0x4c8] sm:$0xff]
    %v1005 = vld [vmem:[#allocation8 + $0x4d0] sm:$0xff]
    %v1006 = vld [vmem:[#allocation8 + $0x4d8] sm:$0xff]
    %v1007 = vld [vmem:[#allocation8 + $0x4e0] sm:$0xff]
    %v1008 = vld [vmem:[#allocation8 + $0x4e8] sm:$0xff]
    %v1009 = vld [vmem:[#allocation8 + $0x4f0] sm:$0xff]
    %v1010 = vld [vmem:[#allocation8 + $0x4f8] sm:$0xff]
    %v1011 = vld [vmem:[#allocation8 + $0x500] sm:$0xff]
    %v1012 = vld [vmem:[#allocation8 + $0x508] sm:$0xff]
    %v1013 = vld [vmem:[#allocation8 + $0x510] sm:$0xff]
    %v1014 = vld [vmem:[#allocation8 + $0x518] sm:$0xff]
    %v1015 = vld [vmem:[#allocation8 + $0x520] sm:$0xff]
    %v1016 = vld [vmem:[#allocation8 + $0x528] sm:$0xff]
    %v1017 = vld [vmem:[#allocation8 + $0x530] sm:$0xff]
    %v1018 = vld [vmem:[#allocation8 + $0x538] sm:$0xff]
    %v1019 = vld [vmem:[#allocation8 + $0x540] sm:$0xff]
    %v1020 = vld [vmem:[#allocation8 + $0x548] sm:$0xff]
    %v1021 = vld [vmem:[#allocation8 + $0x550] sm:$0xff]
    %v1022 = vld [vmem:[#allocation8 + $0x558] sm:$0xff]
    %v1023 = vld [vmem:[#allocation8 + $0x560] sm:$0xff]
    %v1024 = vld [vmem:[#allocation8 + $0x568] sm:$0xff]
    %v1025 = vld [vmem:[#allocation8 + $0x570] sm:$0xff]
    %v1026 = vld [vmem:[#allocation8 + $0x578] sm:$0xff]
    %v1027 = vld [vmem:[#allocation8 + $0x580] sm:$0xff]
    %v1028 = vld [vmem:[#allocation8 + $0x588] sm:$0xff]
    %v1029 = vld [vmem:[#allocation8 + $0x590] sm:$0xff]
    %v1030 = vld [vmem:[#allocation8 + $0x598] sm:$0xff]
    %v1031 = vld [vmem:[#allocation8 + $0x5a0] sm:$0xff]
    %v1032 = vld [vmem:[#allocation8 + $0x5a8] sm:$0xff]
    %v1033 = vld [vmem:[#allocation8 + $0x5b0] sm:$0xff]
    %v1034 = vld [vmem:[#allocation8 + $0x5b8] sm:$0xff]
    %v1035 = vld [vmem:[#allocation8 + $0x5c0] sm:$0xff]
    %v1036 = vld [vmem:[#allocation8 + $0x5c8] sm:$0xff]
    %v1037 = vld [vmem:[#allocation8 + $0x5d0] sm:$0xff]
    %v1038 = vld [vmem:[#allocation8 + $0x5d8] sm:$0xff]
    %v1039 = vld [vmem:[#allocation8 + $0x5e0] sm:$0xff]
    %v1040 = vld [vmem:[#allocation8 + $0x5e8] sm:$0xff]
    %v1041 = vld [vmem:[#allocation8 + $0x5f0] sm:$0xff]
    %v1042 = vld [vmem:[#allocation8 + $0x5f8] sm:$0xff]
    %v1043 = vld [vmem:[#allocation8 + $0x600] sm:$0xff]
    %v1044 = vld [vmem:[#allocation8 + $0x608] sm:$0xff]
    %v1045 = vld [vmem:[#allocation8 + $0x610] sm:$0xff]
    %v1046 = vld [vmem:[#allocation8 + $0x618] sm:$0xff]
    %v1047 = vld [vmem:[#allocation8 + $0x620] sm:$0xff]
    %v1048 = vld [vmem:[#allocation8 + $0x628] sm:$0xff]
    %v1049 = vld [vmem:[#allocation8 + $0x630] sm:$0xff]
    %v1050 = vld [vmem:[#allocation8 + $0x638] sm:$0xff]
    %v1051 = vld [vmem:[#allocation8 + $0x640] sm:$0xff]
    %v1052 = vld [vmem:[#allocation8 + $0x648] sm:$0xff]
    %v1053 = vld [vmem:[#allocation8 + $0x650] sm:$0xff]
    %v1054 = vld [vmem:[#allocation8 + $0x658] sm:$0xff]
    %v1055 = vld [vmem:[#allocation8 + $0x660] sm:$0xff]
    %v1056 = vld [vmem:[#allocation8 + $0x668] sm:$0xff]
    %v1057 = vld [vmem:[#allocation8 + $0x670] sm:$0xff]
    %v1058 = vld [vmem:[#allocation8 + $0x678] sm:$0xff]
    %v1059 = vld [vmem:[#allocation8 + $0x680] sm:$0xff]
    %v1060 = vld [vmem:[#allocation8 + $0x688] sm:$0xff]
    %v1061 = vld [vmem:[#allocation8 + $0x690] sm:$0xff]
    %v1062 = vld [vmem:[#allocation8 + $0x698] sm:$0xff]
    %v1063 = vld [vmem:[#allocation8 + $0x6a0] sm:$0xff]
    %v1064 = vld [vmem:[#allocation8 + $0x6a8] sm:$0xff]
    %v1065 = vld [vmem:[#allocation8 + $0x6b0] sm:$0xff]
    %v1066 = vld [vmem:[#allocation8 + $0x6b8] sm:$0xff]
    %v1067 = vld [vmem:[#allocation8 + $0x6c0] sm:$0xff]
    %v1068 = vld [vmem:[#allocation8 + $0x6c8] sm:$0xff]
    %v1069 = vld [vmem:[#allocation8 + $0x6d0] sm:$0xff]
    %v1070 = vld [vmem:[#allocation8 + $0x6d8] sm:$0xff]
    %v1071 = vld [vmem:[#allocation8 + $0x6e0] sm:$0xff]
    %v1072 = vld [vmem:[#allocation8 + $0x6e8] sm:$0xff]
    %v1073 = vld [vmem:[#allocation8 + $0x6f0] sm:$0xff]
    %v1074 = vld [vmem:[#allocation8 + $0x6f8] sm:$0xff]
    %v1075 = vld [vmem:[#allocation8 + $0x700] sm:$0xff]
    %v1076 = vld [vmem:[#allocation8 + $0x708] sm:$0xff]
    %v1077 = vld [vmem:[#allocation8 + $0x710] sm:$0xff]
    %v1078 = vld [vmem:[#allocation8 + $0x718] sm:$0xff]
    %v1079 = vld [vmem:[#allocation8 + $0x720] sm:$0xff]
    %v1080 = vld [vmem:[#allocation8 + $0x728] sm:$0xff]
    %v1081 = vld [vmem:[#allocation8 + $0x730] sm:$0xff]
    %v1082 = vld [vmem:[#allocation8 + $0x738] sm:$0xff]
    %v1083 = vld [vmem:[#allocation8 + $0x740] sm:$0xff]
    %v1084 = vld [vmem:[#allocation8 + $0x748] sm:$0xff]
    %v1085 = vld [vmem:[#allocation8 + $0x750] sm:$0xff]
    %v1086 = vld [vmem:[#allocation8 + $0x758] sm:$0xff]
    %v1087 = vld [vmem:[#allocation8 + $0x760] sm:$0xff]
    %v1088 = vld [vmem:[#allocation8 + $0x768] sm:$0xff]
    %v1089 = vld [vmem:[#allocation8 + $0x770] sm:$0xff]
    %v1090 = vld [vmem:[#allocation8 + $0x778] sm:$0xff]
    %v1091 = vld [vmem:[#allocation8 + $0x780] sm:$0xff]
    %v1092 = vld [vmem:[#allocation8 + $0x788] sm:$0xff]
    %v1093 = vld [vmem:[#allocation8 + $0x790] sm:$0xff]
    %v1094 = vld [vmem:[#allocation8 + $0x798] sm:$0xff]
    %v1095 = vld [vmem:[#allocation8 + $0x7a0] sm:$0xff]
    %v1096 = vld [vmem:[#allocation8 + $0x7a8] sm:$0xff]
    %v1097 = vld [vmem:[#allocation8 + $0x7b0] sm:$0xff]
    %v1098 = vld [vmem:[#allocation8 + $0x7b8] sm:$0xff]
    %v1099 = vld [vmem:[#allocation8 + $0x7c0] sm:$0xff]
    %v1100 = vld [vmem:[#allocation8 + $0x7c8] sm:$0xff]
    %v1101 = vld [vmem:[#allocation8 + $0x7d0] sm:$0xff]
    %v1102 = vld [vmem:[#allocation8 + $0x7d8] sm:$0xff]
    %v1103 = vld [vmem:[#allocation8 + $0x7e0] sm:$0xff]
    %v1104 = vld [vmem:[#allocation8 + $0x7e8] sm:$0xff]
    %v1105 = vld [vmem:[#allocation8 + $0x7f0] sm:$0xff]
    %v1106 = vld [vmem:[#allocation8 + $0x7f8] sm:$0xff]
    %v1123 = vunpack.c.l.b16 %v835
    %v1124 = vunpack.c.l.b16 %v836
    %v1125 = vunpack.c.l.b16 %v837
    %v1126 = vunpack.c.l.b16 %v838
    %v1127 = vunpack.c.l.b16 %v839
    %v1128 = vunpack.c.l.b16 %v840
    %v1129 = vunpack.c.l.b16 %v841
    %v1130 = vunpack.c.l.b16 %v842
    %v1131 = vunpack.c.l.b16 %v843
    %v1132 = vunpack.c.l.b16 %v844
    %v1133 = vunpack.c.l.b16 %v845
    %v1134 = vunpack.c.l.b16 %v846
    %v1135 = vunpack.c.l.b16 %v847
    %v1136 = vunpack.c.l.b16 %v848
    %v1137 = vunpack.c.l.b16 %v849
    %v1138 = vunpack.c.l.b16 %v850
    %vm1139 = vcmask 1041409
    %v1140 = vsel %vm1139, %v1131, %v1123
    %v1141 = vsel %vm1139, %v1132, %v1124
    %v1142 = vsel %vm1139, %v1133, %v1125
    %v1143 = vsel %vm1139, %v1134, %v1126
    %v1144 = vsel %vm1139, %v1135, %v1127
    %v1145 = vsel %vm1139, %v1136, %v1128
    %v1146 = vsel %vm1139, %v1137, %v1129
    %v1147 = vsel %vm1139, %v1138, %v1130
    %v1148 = vpack.c.b16 %v1140, %v1140
    %v1149 = vpack.c.b16 %v1141, %v1141
    %v1150 = vpack.c.b16 %v1142, %v1142
    %v1151 = vpack.c.b16 %v1143, %v1143
    %v1152 = vpack.c.b16 %v1144, %v1144
    %v1153 = vpack.c.b16 %v1145, %v1145
    %v1154 = vpack.c.b16 %v1146, %v1146
    %v1155 = vpack.c.b16 %v1147, %v1147
    %v1420 = vunpack.c.l.b16 %v851
    %v1421 = vunpack.c.h.b16 %v851
    %v1422 = vunpack.c.l.b16 %v852
    %v1423 = vunpack.c.h.b16 %v852
    %v1424 = vunpack.c.l.b16 %v853
    %v1425 = vunpack.c.h.b16 %v853
    %v1426 = vunpack.c.l.b16 %v854
    %v1427 = vunpack.c.h.b16 %v854
    %v1428 = vunpack.c.l.b16 %v855
    %v1429 = vunpack.c.h.b16 %v855
    %v1430 = vunpack.c.l.b16 %v856
    %v1431 = vunpack.c.h.b16 %v856
    %v1432 = vunpack.c.l.b16 %v857
    %v1433 = vunpack.c.h.b16 %v857
    %v1434 = vunpack.c.l.b16 %v858
    %v1435 = vunpack.c.h.b16 %v858
    %v1436 = vunpack.c.l.b16 %v859
    %v1437 = vunpack.c.h.b16 %v859
    %v1438 = vunpack.c.l.b16 %v860
    %v1439 = vunpack.c.h.b16 %v860
    %v1440 = vunpack.c.l.b16 %v861
    %v1441 = vunpack.c.h.b16 %v861
    %v1442 = vunpack.c.l.b16 %v862
    %v1443 = vunpack.c.h.b16 %v862
    %v1444 = vunpack.c.l.b16 %v863
    %v1445 = vunpack.c.h.b16 %v863
    %v1446 = vunpack.c.l.b16 %v864
    %v1447 = vunpack.c.h.b16 %v864
    %v1448 = vunpack.c.l.b16 %v865
    %v1449 = vunpack.c.h.b16 %v865
    %v1450 = vunpack.c.l.b16 %v866
    %v1451 = vunpack.c.h.b16 %v866
    %v1452 = vunpack.c.l.b16 %v867
    %v1453 = vunpack.c.h.b16 %v867
    %v1454 = vunpack.c.l.b16 %v868
    %v1455 = vunpack.c.h.b16 %v868
    %v1456 = vunpack.c.l.b16 %v869
    %v1457 = vunpack.c.h.b16 %v869
    %v1458 = vunpack.c.l.b16 %v870
    %v1459 = vunpack.c.h.b16 %v870
    %v1460 = vunpack.c.l.b16 %v871
    %v1461 = vunpack.c.h.b16 %v871
    %v1462 = vunpack.c.l.b16 %v872
    %v1463 = vunpack.c.h.b16 %v872
    %v1464 = vunpack.c.l.b16 %v873
    %v1465 = vunpack.c.h.b16 %v873
    %v1466 = vunpack.c.l.b16 %v874
    %v1467 = vunpack.c.h.b16 %v874
    %v1468 = vunpack.c.l.b16 %v875
    %v1469 = vunpack.c.h.b16 %v875
    %v1470 = vunpack.c.l.b16 %v876
    %v1471 = vunpack.c.h.b16 %v876
    %v1472 = vunpack.c.l.b16 %v877
    %v1473 = vunpack.c.h.b16 %v877
    %v1474 = vunpack.c.l.b16 %v878
    %v1475 = vunpack.c.h.b16 %v878
    %v1476 = vunpack.c.l.b16 %v879
    %v1477 = vunpack.c.h.b16 %v879
    %v1478 = vunpack.c.l.b16 %v880
    %v1479 = vunpack.c.h.b16 %v880
    %v1480 = vunpack.c.l.b16 %v881
    %v1481 = vunpack.c.h.b16 %v881
    %v1482 = vunpack.c.l.b16 %v882
    %v1483 = vunpack.c.h.b16 %v882
    %v1484 = vunpack.c.l.b16 %v883
    %v1485 = vunpack.c.h.b16 %v883
    %v1486 = vunpack.c.l.b16 %v884
    %v1487 = vunpack.c.h.b16 %v884
    %v1488 = vunpack.c.l.b16 %v885
    %v1489 = vunpack.c.h.b16 %v885
    %v1490 = vunpack.c.l.b16 %v886
    %v1491 = vunpack.c.h.b16 %v886
    %v1492 = vunpack.c.l.b16 %v887
    %v1493 = vunpack.c.h.b16 %v887
    %v1494 = vunpack.c.l.b16 %v888
    %v1495 = vunpack.c.h.b16 %v888
    %v1496 = vunpack.c.l.b16 %v889
    %v1497 = vunpack.c.h.b16 %v889
    %v1498 = vunpack.c.l.b16 %v890
    %v1499 = vunpack.c.h.b16 %v890
    %v1500 = vunpack.c.l.b16 %v891
    %v1501 = vunpack.c.h.b16 %v891
    %v1502 = vunpack.c.l.b16 %v892
    %v1503 = vunpack.c.h.b16 %v892
    %v1504 = vunpack.c.l.b16 %v893
    %v1505 = vunpack.c.h.b16 %v893
    %v1506 = vunpack.c.l.b16 %v894
    %v1507 = vunpack.c.h.b16 %v894
    %v1508 = vunpack.c.l.b16 %v895
    %v1509 = vunpack.c.h.b16 %v895
    %v1510 = vunpack.c.l.b16 %v896
    %v1511 = vunpack.c.h.b16 %v896
    %v1512 = vunpack.c.l.b16 %v897
    %v1513 = vunpack.c.h.b16 %v897
    %v1514 = vunpack.c.l.b16 %v898
    %v1515 = vunpack.c.h.b16 %v898
    %v1516 = vunpack.c.l.b16 %v899
    %v1517 = vunpack.c.h.b16 %v899
    %v1518 = vunpack.c.l.b16 %v900
    %v1519 = vunpack.c.h.b16 %v900
    %v1520 = vunpack.c.l.b16 %v901
    %v1521 = vunpack.c.h.b16 %v901
    %v1522 = vunpack.c.l.b16 %v902
    %v1523 = vunpack.c.h.b16 %v902
    %v1524 = vunpack.c.l.b16 %v903
    %v1525 = vunpack.c.h.b16 %v903
    %v1526 = vunpack.c.l.b16 %v904
    %v1527 = vunpack.c.h.b16 %v904
    %v1528 = vunpack.c.l.b16 %v905
    %v1529 = vunpack.c.h.b16 %v905
    %v1530 = vunpack.c.l.b16 %v906
    %v1531 = vunpack.c.h.b16 %v906
    %v1532 = vunpack.c.l.b16 %v907
    %v1533 = vunpack.c.h.b16 %v907
    %v1534 = vunpack.c.l.b16 %v908
    %v1535 = vunpack.c.h.b16 %v908
    %v1536 = vunpack.c.l.b16 %v909
    %v1537 = vunpack.c.h.b16 %v909
    %v1538 = vunpack.c.l.b16 %v910
    %v1539 = vunpack.c.h.b16 %v910
    %v1540 = vunpack.c.l.b16 %v911
    %v1541 = vunpack.c.h.b16 %v911
    %v1542 = vunpack.c.l.b16 %v912
    %v1543 = vunpack.c.h.b16 %v912
    %v1544 = vunpack.c.l.b16 %v913
    %v1545 = vunpack.c.h.b16 %v913
    %v1546 = vunpack.c.l.b16 %v914
    %v1547 = vunpack.c.h.b16 %v914
    %v1548 = vunpack.c.l.b16 %v915
    %v1549 = vunpack.c.h.b16 %v915
    %v1550 = vunpack.c.l.b16 %v916
    %v1551 = vunpack.c.h.b16 %v916
    %v1552 = vunpack.c.l.b16 %v917
    %v1553 = vunpack.c.h.b16 %v917
    %v1554 = vunpack.c.l.b16 %v918
    %v1555 = vunpack.c.h.b16 %v918
    %v1556 = vunpack.c.l.b16 %v919
    %v1557 = vunpack.c.h.b16 %v919
    %v1558 = vunpack.c.l.b16 %v920
    %v1559 = vunpack.c.h.b16 %v920
    %v1560 = vunpack.c.l.b16 %v921
    %v1561 = vunpack.c.h.b16 %v921
    %v1562 = vunpack.c.l.b16 %v922
    %v1563 = vunpack.c.h.b16 %v922
    %v1564 = vunpack.c.l.b16 %v923
    %v1565 = vunpack.c.h.b16 %v923
    %v1566 = vunpack.c.l.b16 %v924
    %v1567 = vunpack.c.h.b16 %v924
    %v1568 = vunpack.c.l.b16 %v925
    %v1569 = vunpack.c.h.b16 %v925
    %v1570 = vunpack.c.l.b16 %v926
    %v1571 = vunpack.c.h.b16 %v926
    %v1572 = vunpack.c.l.b16 %v927
    %v1573 = vunpack.c.h.b16 %v927
    %v1574 = vunpack.c.l.b16 %v928
    %v1575 = vunpack.c.h.b16 %v928
    %v1576 = vunpack.c.l.b16 %v929
    %v1577 = vunpack.c.h.b16 %v929
    %v1578 = vunpack.c.l.b16 %v930
    %v1579 = vunpack.c.h.b16 %v930
    %v1580 = vunpack.c.l.b16 %v931
    %v1581 = vunpack.c.h.b16 %v931
    %v1582 = vunpack.c.l.b16 %v932
    %v1583 = vunpack.c.h.b16 %v932
    %v1584 = vunpack.c.l.b16 %v933
    %v1585 = vunpack.c.h.b16 %v933
    %v1586 = vunpack.c.l.b16 %v934
    %v1587 = vunpack.c.h.b16 %v934
    %v1588 = vunpack.c.l.b16 %v935
    %v1589 = vunpack.c.h.b16 %v935
    %v1590 = vunpack.c.l.b16 %v936
    %v1591 = vunpack.c.h.b16 %v936
    %v1592 = vunpack.c.l.b16 %v937
    %v1593 = vunpack.c.h.b16 %v937
    %v1594 = vunpack.c.l.b16 %v938
    %v1595 = vunpack.c.h.b16 %v938
    %v1596 = vunpack.c.l.b16 %v939
    %v1597 = vunpack.c.h.b16 %v939
    %v1598 = vunpack.c.l.b16 %v940
    %v1599 = vunpack.c.h.b16 %v940
    %v1600 = vunpack.c.l.b16 %v941
    %v1601 = vunpack.c.h.b16 %v941
    %v1602 = vunpack.c.l.b16 %v942
    %v1603 = vunpack.c.h.b16 %v942
    %v1604 = vunpack.c.l.b16 %v943
    %v1605 = vunpack.c.h.b16 %v943
    %v1606 = vunpack.c.l.b16 %v944
    %v1607 = vunpack.c.h.b16 %v944
    %v1608 = vunpack.c.l.b16 %v945
    %v1609 = vunpack.c.h.b16 %v945
    %v1610 = vunpack.c.l.b16 %v946
    %v1611 = vunpack.c.h.b16 %v946
    %v1612 = vunpack.c.l.b16 %v947
    %v1613 = vunpack.c.h.b16 %v947
    %v1614 = vunpack.c.l.b16 %v948
    %v1615 = vunpack.c.h.b16 %v948
    %v1616 = vunpack.c.l.b16 %v949
    %v1617 = vunpack.c.h.b16 %v949
    %v1618 = vunpack.c.l.b16 %v950
    %v1619 = vunpack.c.h.b16 %v950
    %v1620 = vunpack.c.l.b16 %v951
    %v1621 = vunpack.c.h.b16 %v951
    %v1622 = vunpack.c.l.b16 %v952
    %v1623 = vunpack.c.h.b16 %v952
    %v1624 = vunpack.c.l.b16 %v953
    %v1625 = vunpack.c.h.b16 %v953
    %v1626 = vunpack.c.l.b16 %v954
    %v1627 = vunpack.c.h.b16 %v954
    %v1628 = vunpack.c.l.b16 %v955
    %v1629 = vunpack.c.h.b16 %v955
    %v1630 = vunpack.c.l.b16 %v956
    %v1631 = vunpack.c.h.b16 %v956
    %v1632 = vunpack.c.l.b16 %v957
    %v1633 = vunpack.c.h.b16 %v957
    %v1634 = vunpack.c.l.b16 %v958
    %v1635 = vunpack.c.h.b16 %v958
    %v1636 = vunpack.c.l.b16 %v959
    %v1637 = vunpack.c.h.b16 %v959
    %v1638 = vunpack.c.l.b16 %v960
    %v1639 = vunpack.c.h.b16 %v960
    %v1640 = vunpack.c.l.b16 %v961
    %v1641 = vunpack.c.h.b16 %v961
    %v1642 = vunpack.c.l.b16 %v962
    %v1643 = vunpack.c.h.b16 %v962
    %v1644 = vunpack.c.l.b16 %v963
    %v1645 = vunpack.c.h.b16 %v963
    %v1646 = vunpack.c.l.b16 %v964
    %v1647 = vunpack.c.h.b16 %v964
    %v1648 = vunpack.c.l.b16 %v965
    %v1649 = vunpack.c.h.b16 %v965
    %v1650 = vunpack.c.l.b16 %v966
    %v1651 = vunpack.c.h.b16 %v966
    %v1652 = vunpack.c.l.b16 %v967
    %v1653 = vunpack.c.h.b16 %v967
    %v1654 = vunpack.c.l.b16 %v968
    %v1655 = vunpack.c.h.b16 %v968
    %v1656 = vunpack.c.l.b16 %v969
    %v1657 = vunpack.c.h.b16 %v969
    %v1658 = vunpack.c.l.b16 %v970
    %v1659 = vunpack.c.h.b16 %v970
    %v1660 = vunpack.c.l.b16 %v971
    %v1661 = vunpack.c.h.b16 %v971
    %v1662 = vunpack.c.l.b16 %v972
    %v1663 = vunpack.c.h.b16 %v972
    %v1664 = vunpack.c.l.b16 %v973
    %v1665 = vunpack.c.h.b16 %v973
    %v1666 = vunpack.c.l.b16 %v974
    %v1667 = vunpack.c.h.b16 %v974
    %v1668 = vunpack.c.l.b16 %v975
    %v1669 = vunpack.c.h.b16 %v975
    %v1670 = vunpack.c.l.b16 %v976
    %v1671 = vunpack.c.h.b16 %v976
    %v1672 = vunpack.c.l.b16 %v977
    %v1673 = vunpack.c.h.b16 %v977
    %v1674 = vunpack.c.l.b16 %v978
    %v1675 = vunpack.c.h.b16 %v978
    %v1676 = vunpack.c.l.b16 %v979
    %v1677 = vunpack.c.h.b16 %v979
    %v1678 = vunpack.c.l.b16 %v980
    %v1679 = vunpack.c.h.b16 %v980
    %v1680 = vunpack.c.l.b16 %v981
    %v1681 = vunpack.c.h.b16 %v981
    %v1682 = vunpack.c.l.b16 %v982
    %v1683 = vunpack.c.h.b16 %v982
    %v1684 = vunpack.c.l.b16 %v983
    %v1685 = vunpack.c.h.b16 %v983
    %v1686 = vunpack.c.l.b16 %v984
    %v1687 = vunpack.c.h.b16 %v984
    %v1688 = vunpack.c.l.b16 %v985
    %v1689 = vunpack.c.h.b16 %v985
    %v1690 = vunpack.c.l.b16 %v986
    %v1691 = vunpack.c.h.b16 %v986
    %v1692 = vunpack.c.l.b16 %v987
    %v1693 = vunpack.c.h.b16 %v987
    %v1694 = vunpack.c.l.b16 %v988
    %v1695 = vunpack.c.h.b16 %v988
    %v1696 = vunpack.c.l.b16 %v989
    %v1697 = vunpack.c.h.b16 %v989
    %v1698 = vunpack.c.l.b16 %v990
    %v1699 = vunpack.c.h.b16 %v990
    %v1700 = vunpack.c.l.b16 %v991
    %v1701 = vunpack.c.h.b16 %v991
    %v1702 = vunpack.c.l.b16 %v992
    %v1703 = vunpack.c.h.b16 %v992
    %v1704 = vunpack.c.l.b16 %v993
    %v1705 = vunpack.c.h.b16 %v993
    %v1706 = vunpack.c.l.b16 %v994
    %v1707 = vunpack.c.h.b16 %v994
    %v1708 = vunpack.c.l.b16 %v995
    %v1709 = vunpack.c.h.b16 %v995
    %v1710 = vunpack.c.l.b16 %v996
    %v1711 = vunpack.c.h.b16 %v996
    %v1712 = vunpack.c.l.b16 %v997
    %v1713 = vunpack.c.h.b16 %v997
    %v1714 = vunpack.c.l.b16 %v998
    %v1715 = vunpack.c.h.b16 %v998
    %v1716 = vunpack.c.l.b16 %v999
    %v1717 = vunpack.c.h.b16 %v999
    %v1718 = vunpack.c.l.b16 %v1000
    %v1719 = vunpack.c.h.b16 %v1000
    %v1720 = vunpack.c.l.b16 %v1001
    %v1721 = vunpack.c.h.b16 %v1001
    %v1722 = vunpack.c.l.b16 %v1002
    %v1723 = vunpack.c.h.b16 %v1002
    %v1724 = vunpack.c.l.b16 %v1003
    %v1725 = vunpack.c.h.b16 %v1003
    %v1726 = vunpack.c.l.b16 %v1004
    %v1727 = vunpack.c.h.b16 %v1004
    %v1728 = vunpack.c.l.b16 %v1005
    %v1729 = vunpack.c.h.b16 %v1005
    %v1730 = vunpack.c.l.b16 %v1006
    %v1731 = vunpack.c.h.b16 %v1006
    %v1732 = vunpack.c.l.b16 %v1007
    %v1733 = vunpack.c.h.b16 %v1007
    %v1734 = vunpack.c.l.b16 %v1008
    %v1735 = vunpack.c.h.b16 %v1008
    %v1736 = vunpack.c.l.b16 %v1009
    %v1737 = vunpack.c.h.b16 %v1009
    %v1738 = vunpack.c.l.b16 %v1010
    %v1739 = vunpack.c.h.b16 %v1010
    %v1740 = vunpack.c.l.b16 %v1011
    %v1741 = vunpack.c.h.b16 %v1011
    %v1742 = vunpack.c.l.b16 %v1012
    %v1743 = vunpack.c.h.b16 %v1012
    %v1744 = vunpack.c.l.b16 %v1013
    %v1745 = vunpack.c.h.b16 %v1013
    %v1746 = vunpack.c.l.b16 %v1014
    %v1747 = vunpack.c.h.b16 %v1014
    %v1748 = vunpack.c.l.b16 %v1015
    %v1749 = vunpack.c.h.b16 %v1015
    %v1750 = vunpack.c.l.b16 %v1016
    %v1751 = vunpack.c.h.b16 %v1016
    %v1752 = vunpack.c.l.b16 %v1017
    %v1753 = vunpack.c.h.b16 %v1017
    %v1754 = vunpack.c.l.b16 %v1018
    %v1755 = vunpack.c.h.b16 %v1018
    %v1756 = vunpack.c.l.b16 %v1019
    %v1757 = vunpack.c.h.b16 %v1019
    %v1758 = vunpack.c.l.b16 %v1020
    %v1759 = vunpack.c.h.b16 %v1020
    %v1760 = vunpack.c.l.b16 %v1021
    %v1761 = vunpack.c.h.b16 %v1021
    %v1762 = vunpack.c.l.b16 %v1022
    %v1763 = vunpack.c.h.b16 %v1022
    %v1764 = vunpack.c.l.b16 %v1023
    %v1765 = vunpack.c.h.b16 %v1023
    %v1766 = vunpack.c.l.b16 %v1024
    %v1767 = vunpack.c.h.b16 %v1024
    %v1768 = vunpack.c.l.b16 %v1025
    %v1769 = vunpack.c.h.b16 %v1025
    %v1770 = vunpack.c.l.b16 %v1026
    %v1771 = vunpack.c.h.b16 %v1026
    %v1772 = vunpack.c.l.b16 %v1027
    %v1773 = vunpack.c.h.b16 %v1027
    %v1774 = vunpack.c.l.b16 %v1028
    %v1775 = vunpack.c.h.b16 %v1028
    %v1776 = vunpack.c.l.b16 %v1029
    %v1777 = vunpack.c.h.b16 %v1029
    %v1778 = vunpack.c.l.b16 %v1030
    %v1779 = vunpack.c.h.b16 %v1030
    %v1780 = vunpack.c.l.b16 %v1031
    %v1781 = vunpack.c.h.b16 %v1031
    %v1782 = vunpack.c.l.b16 %v1032
    %v1783 = vunpack.c.h.b16 %v1032
    %v1784 = vunpack.c.l.b16 %v1033
    %v1785 = vunpack.c.h.b16 %v1033
    %v1786 = vunpack.c.l.b16 %v1034
    %v1787 = vunpack.c.h.b16 %v1034
    %v1788 = vunpack.c.l.b16 %v1035
    %v1789 = vunpack.c.h.b16 %v1035
    %v1790 = vunpack.c.l.b16 %v1036
    %v1791 = vunpack.c.h.b16 %v1036
    %v1792 = vunpack.c.l.b16 %v1037
    %v1793 = vunpack.c.h.b16 %v1037
    %v1794 = vunpack.c.l.b16 %v1038
    %v1795 = vunpack.c.h.b16 %v1038
    %v1796 = vunpack.c.l.b16 %v1039
    %v1797 = vunpack.c.h.b16 %v1039
    %v1798 = vunpack.c.l.b16 %v1040
    %v1799 = vunpack.c.h.b16 %v1040
    %v1800 = vunpack.c.l.b16 %v1041
    %v1801 = vunpack.c.h.b16 %v1041
    %v1802 = vunpack.c.l.b16 %v1042
    %v1803 = vunpack.c.h.b16 %v1042
    %v1804 = vunpack.c.l.b16 %v1043
    %v1805 = vunpack.c.h.b16 %v1043
    %v1806 = vunpack.c.l.b16 %v1044
    %v1807 = vunpack.c.h.b16 %v1044
    %v1808 = vunpack.c.l.b16 %v1045
    %v1809 = vunpack.c.h.b16 %v1045
    %v1810 = vunpack.c.l.b16 %v1046
    %v1811 = vunpack.c.h.b16 %v1046
    %v1812 = vunpack.c.l.b16 %v1047
    %v1813 = vunpack.c.h.b16 %v1047
    %v1814 = vunpack.c.l.b16 %v1048
    %v1815 = vunpack.c.h.b16 %v1048
    %v1816 = vunpack.c.l.b16 %v1049
    %v1817 = vunpack.c.h.b16 %v1049
    %v1818 = vunpack.c.l.b16 %v1050
    %v1819 = vunpack.c.h.b16 %v1050
    %v1820 = vunpack.c.l.b16 %v1051
    %v1821 = vunpack.c.h.b16 %v1051
    %v1822 = vunpack.c.l.b16 %v1052
    %v1823 = vunpack.c.h.b16 %v1052
    %v1824 = vunpack.c.l.b16 %v1053
    %v1825 = vunpack.c.h.b16 %v1053
    %v1826 = vunpack.c.l.b16 %v1054
    %v1827 = vunpack.c.h.b16 %v1054
    %v1828 = vunpack.c.l.b16 %v1055
    %v1829 = vunpack.c.h.b16 %v1055
    %v1830 = vunpack.c.l.b16 %v1056
    %v1831 = vunpack.c.h.b16 %v1056
    %v1832 = vunpack.c.l.b16 %v1057
    %v1833 = vunpack.c.h.b16 %v1057
    %v1834 = vunpack.c.l.b16 %v1058
    %v1835 = vunpack.c.h.b16 %v1058
    %v1836 = vunpack.c.l.b16 %v1059
    %v1837 = vunpack.c.h.b16 %v1059
    %v1838 = vunpack.c.l.b16 %v1060
    %v1839 = vunpack.c.h.b16 %v1060
    %v1840 = vunpack.c.l.b16 %v1061
    %v1841 = vunpack.c.h.b16 %v1061
    %v1842 = vunpack.c.l.b16 %v1062
    %v1843 = vunpack.c.h.b16 %v1062
    %v1844 = vunpack.c.l.b16 %v1063
    %v1845 = vunpack.c.h.b16 %v1063
    %v1846 = vunpack.c.l.b16 %v1064
    %v1847 = vunpack.c.h.b16 %v1064
    %v1848 = vunpack.c.l.b16 %v1065
    %v1849 = vunpack.c.h.b16 %v1065
    %v1850 = vunpack.c.l.b16 %v1066
    %v1851 = vunpack.c.h.b16 %v1066
    %v1852 = vunpack.c.l.b16 %v1067
    %v1853 = vunpack.c.h.b16 %v1067
    %v1854 = vunpack.c.l.b16 %v1068
    %v1855 = vunpack.c.h.b16 %v1068
    %v1856 = vunpack.c.l.b16 %v1069
    %v1857 = vunpack.c.h.b16 %v1069
    %v1858 = vunpack.c.l.b16 %v1070
    %v1859 = vunpack.c.h.b16 %v1070
    %v1860 = vunpack.c.l.b16 %v1071
    %v1861 = vunpack.c.h.b16 %v1071
    %v1862 = vunpack.c.l.b16 %v1072
    %v1863 = vunpack.c.h.b16 %v1072
    %v1864 = vunpack.c.l.b16 %v1073
    %v1865 = vunpack.c.h.b16 %v1073
    %v1866 = vunpack.c.l.b16 %v1074
    %v1867 = vunpack.c.h.b16 %v1074
    %v1868 = vunpack.c.l.b16 %v1075
    %v1869 = vunpack.c.h.b16 %v1075
    %v1870 = vunpack.c.l.b16 %v1076
    %v1871 = vunpack.c.h.b16 %v1076
    %v1872 = vunpack.c.l.b16 %v1077
    %v1873 = vunpack.c.h.b16 %v1077
    %v1874 = vunpack.c.l.b16 %v1078
    %v1875 = vunpack.c.h.b16 %v1078
    %v1876 = vunpack.c.l.b16 %v1079
    %v1877 = vunpack.c.h.b16 %v1079
    %v1878 = vunpack.c.l.b16 %v1080
    %v1879 = vunpack.c.h.b16 %v1080
    %v1880 = vunpack.c.l.b16 %v1081
    %v1881 = vunpack.c.h.b16 %v1081
    %v1882 = vunpack.c.l.b16 %v1082
    %v1883 = vunpack.c.h.b16 %v1082
    %v1884 = vunpack.c.l.b16 %v1083
    %v1885 = vunpack.c.h.b16 %v1083
    %v1886 = vunpack.c.l.b16 %v1084
    %v1887 = vunpack.c.h.b16 %v1084
    %v1888 = vunpack.c.l.b16 %v1085
    %v1889 = vunpack.c.h.b16 %v1085
    %v1890 = vunpack.c.l.b16 %v1086
    %v1891 = vunpack.c.h.b16 %v1086
    %v1892 = vunpack.c.l.b16 %v1087
    %v1893 = vunpack.c.h.b16 %v1087
    %v1894 = vunpack.c.l.b16 %v1088
    %v1895 = vunpack.c.h.b16 %v1088
    %v1896 = vunpack.c.l.b16 %v1089
    %v1897 = vunpack.c.h.b16 %v1089
    %v1898 = vunpack.c.l.b16 %v1090
    %v1899 = vunpack.c.h.b16 %v1090
    %v1900 = vunpack.c.l.b16 %v1091
    %v1901 = vunpack.c.h.b16 %v1091
    %v1902 = vunpack.c.l.b16 %v1092
    %v1903 = vunpack.c.h.b16 %v1092
    %v1904 = vunpack.c.l.b16 %v1093
    %v1905 = vunpack.c.h.b16 %v1093
    %v1906 = vunpack.c.l.b16 %v1094
    %v1907 = vunpack.c.h.b16 %v1094
    %v1908 = vunpack.c.l.b16 %v1095
    %v1909 = vunpack.c.h.b16 %v1095
    %v1910 = vunpack.c.l.b16 %v1096
    %v1911 = vunpack.c.h.b16 %v1096
    %v1912 = vunpack.c.l.b16 %v1097
    %v1913 = vunpack.c.h.b16 %v1097
    %v1914 = vunpack.c.l.b16 %v1098
    %v1915 = vunpack.c.h.b16 %v1098
    %v1916 = vunpack.c.l.b16 %v1099
    %v1917 = vunpack.c.h.b16 %v1099
    %v1918 = vunpack.c.l.b16 %v1100
    %v1919 = vunpack.c.h.b16 %v1100
    %v1920 = vunpack.c.l.b16 %v1101
    %v1921 = vunpack.c.h.b16 %v1101
    %v1922 = vunpack.c.l.b16 %v1102
    %v1923 = vunpack.c.h.b16 %v1102
    %v1924 = vunpack.c.l.b16 %v1103
    %v1925 = vunpack.c.h.b16 %v1103
    %v1926 = vunpack.c.l.b16 %v1104
    %v1927 = vunpack.c.h.b16 %v1104
    %v1928 = vunpack.c.l.b16 %v1105
    %v1929 = vunpack.c.h.b16 %v1105
    %v1930 = vunpack.c.l.b16 %v1106
    %v1931 = vunpack.c.h.b16 %v1106
    %v1932 = vpack.c.b16 %v1424, %v1420
    %v1933 = vpack.c.b16 %v1425, %v1421
    %v1934 = vpack.c.b16 %v1426, %v1422
    %v1935 = vpack.c.b16 %v1427, %v1423
    %v1936 = vpack.c.b16 %v1432, %v1428
    %v1937 = vpack.c.b16 %v1433, %v1429
    %v1938 = vpack.c.b16 %v1434, %v1430
    %v1939 = vpack.c.b16 %v1435, %v1431
    %v1940 = vpack.c.b16 %v1440, %v1436
    %v1941 = vpack.c.b16 %v1441, %v1437
    %v1942 = vpack.c.b16 %v1442, %v1438
    %v1943 = vpack.c.b16 %v1443, %v1439
    %v1944 = vpack.c.b16 %v1448, %v1444
    %v1945 = vpack.c.b16 %v1449, %v1445
    %v1946 = vpack.c.b16 %v1450, %v1446
    %v1947 = vpack.c.b16 %v1451, %v1447
    %v1948 = vpack.c.b16 %v1456, %v1452
    %v1949 = vpack.c.b16 %v1457, %v1453
    %v1950 = vpack.c.b16 %v1458, %v1454
    %v1951 = vpack.c.b16 %v1459, %v1455
    %v1952 = vpack.c.b16 %v1464, %v1460
    %v1953 = vpack.c.b16 %v1465, %v1461
    %v1954 = vpack.c.b16 %v1466, %v1462
    %v1955 = vpack.c.b16 %v1467, %v1463
    %v1956 = vpack.c.b16 %v1472, %v1468
    %v1957 = vpack.c.b16 %v1473, %v1469
    %v1958 = vpack.c.b16 %v1474, %v1470
    %v1959 = vpack.c.b16 %v1475, %v1471
    %v1960 = vpack.c.b16 %v1480, %v1476
    %v1961 = vpack.c.b16 %v1481, %v1477
    %v1962 = vpack.c.b16 %v1482, %v1478
    %v1963 = vpack.c.b16 %v1483, %v1479
    %v1964 = vpack.c.b16 %v1488, %v1484
    %v1965 = vpack.c.b16 %v1489, %v1485
    %v1966 = vpack.c.b16 %v1490, %v1486
    %v1967 = vpack.c.b16 %v1491, %v1487
    %v1968 = vpack.c.b16 %v1496, %v1492
    %v1969 = vpack.c.b16 %v1497, %v1493
    %v1970 = vpack.c.b16 %v1498, %v1494
    %v1971 = vpack.c.b16 %v1499, %v1495
    %v1972 = vpack.c.b16 %v1504, %v1500
    %v1973 = vpack.c.b16 %v1505, %v1501
    %v1974 = vpack.c.b16 %v1506, %v1502
    %v1975 = vpack.c.b16 %v1507, %v1503
    %v1976 = vpack.c.b16 %v1512, %v1508
    %v1977 = vpack.c.b16 %v1513, %v1509
    %v1978 = vpack.c.b16 %v1514, %v1510
    %v1979 = vpack.c.b16 %v1515, %v1511
    %v1980 = vpack.c.b16 %v1520, %v1516
    %v1981 = vpack.c.b16 %v1521, %v1517
    %v1982 = vpack.c.b16 %v1522, %v1518
    %v1983 = vpack.c.b16 %v1523, %v1519
    %v1984 = vpack.c.b16 %v1528, %v1524
    %v1985 = vpack.c.b16 %v1529, %v1525
    %v1986 = vpack.c.b16 %v1530, %v1526
    %v1987 = vpack.c.b16 %v1531, %v1527
    %v1988 = vpack.c.b16 %v1536, %v1532
    %v1989 = vpack.c.b16 %v1537, %v1533
    %v1990 = vpack.c.b16 %v1538, %v1534
    %v1991 = vpack.c.b16 %v1539, %v1535
    %v1992 = vpack.c.b16 %v1544, %v1540
    %v1993 = vpack.c.b16 %v1545, %v1541
    %v1994 = vpack.c.b16 %v1546, %v1542
    %v1995 = vpack.c.b16 %v1547, %v1543
    %v1996 = vpack.c.b16 %v1552, %v1548
    %v1997 = vpack.c.b16 %v1553, %v1549
    %v1998 = vpack.c.b16 %v1554, %v1550
    %v1999 = vpack.c.b16 %v1555, %v1551
    %v2000 = vpack.c.b16 %v1560, %v1556
    %v2001 = vpack.c.b16 %v1561, %v1557
    %v2002 = vpack.c.b16 %v1562, %v1558
    %v2003 = vpack.c.b16 %v1563, %v1559
    %v2004 = vpack.c.b16 %v1568, %v1564
    %v2005 = vpack.c.b16 %v1569, %v1565
    %v2006 = vpack.c.b16 %v1570, %v1566
    %v2007 = vpack.c.b16 %v1571, %v1567
    %v2008 = vpack.c.b16 %v1576, %v1572
    %v2009 = vpack.c.b16 %v1577, %v1573
    %v2010 = vpack.c.b16 %v1578, %v1574
    %v2011 = vpack.c.b16 %v1579, %v1575
    %v2012 = vpack.c.b16 %v1584, %v1580
    %v2013 = vpack.c.b16 %v1585, %v1581
    %v2014 = vpack.c.b16 %v1586, %v1582
    %v2015 = vpack.c.b16 %v1587, %v1583
    %v2016 = vpack.c.b16 %v1592, %v1588
    %v2017 = vpack.c.b16 %v1593, %v1589
    %v2018 = vpack.c.b16 %v1594, %v1590
    %v2019 = vpack.c.b16 %v1595, %v1591
    %v2020 = vpack.c.b16 %v1600, %v1596
    %v2021 = vpack.c.b16 %v1601, %v1597
    %v2022 = vpack.c.b16 %v1602, %v1598
    %v2023 = vpack.c.b16 %v1603, %v1599
    %v2024 = vpack.c.b16 %v1608, %v1604
    %v2025 = vpack.c.b16 %v1609, %v1605
    %v2026 = vpack.c.b16 %v1610, %v1606
    %v2027 = vpack.c.b16 %v1611, %v1607
    %v2028 = vpack.c.b16 %v1616, %v1612
    %v2029 = vpack.c.b16 %v1617, %v1613
    %v2030 = vpack.c.b16 %v1618, %v1614
    %v2031 = vpack.c.b16 %v1619, %v1615
    %v2032 = vpack.c.b16 %v1624, %v1620
    %v2033 = vpack.c.b16 %v1625, %v1621
    %v2034 = vpack.c.b16 %v1626, %v1622
    %v2035 = vpack.c.b16 %v1627, %v1623
    %v2036 = vpack.c.b16 %v1632, %v1628
    %v2037 = vpack.c.b16 %v1633, %v1629
    %v2038 = vpack.c.b16 %v1634, %v1630
    %v2039 = vpack.c.b16 %v1635, %v1631
    %v2040 = vpack.c.b16 %v1640, %v1636
    %v2041 = vpack.c.b16 %v1641, %v1637
    %v2042 = vpack.c.b16 %v1642, %v1638
    %v2043 = vpack.c.b16 %v1643, %v1639
    %v2044 = vpack.c.b16 %v1648, %v1644
    %v2045 = vpack.c.b16 %v1649, %v1645
    %v2046 = vpack.c.b16 %v1650, %v1646
    %v2047 = vpack.c.b16 %v1651, %v1647
    %v2048 = vpack.c.b16 %v1656, %v1652
    %v2049 = vpack.c.b16 %v1657, %v1653
    %v2050 = vpack.c.b16 %v1658, %v1654
    %v2051 = vpack.c.b16 %v1659, %v1655
    %v2052 = vpack.c.b16 %v1664, %v1660
    %v2053 = vpack.c.b16 %v1665, %v1661
    %v2054 = vpack.c.b16 %v1666, %v1662
    %v2055 = vpack.c.b16 %v1667, %v1663
    %v2056 = vpack.c.b16 %v1672, %v1668
    %v2057 = vpack.c.b16 %v1673, %v1669
    %v2058 = vpack.c.b16 %v1674, %v1670
    %v2059 = vpack.c.b16 %v1675, %v1671
    %v2060 = vpack.c.b16 %v1680, %v1676
    %v2061 = vpack.c.b16 %v1681, %v1677
    %v2062 = vpack.c.b16 %v1682, %v1678
    %v2063 = vpack.c.b16 %v1683, %v1679
    %v2064 = vpack.c.b16 %v1688, %v1684
    %v2065 = vpack.c.b16 %v1689, %v1685
    %v2066 = vpack.c.b16 %v1690, %v1686
    %v2067 = vpack.c.b16 %v1691, %v1687
    %v2068 = vpack.c.b16 %v1696, %v1692
    %v2069 = vpack.c.b16 %v1697, %v1693
    %v2070 = vpack.c.b16 %v1698, %v1694
    %v2071 = vpack.c.b16 %v1699, %v1695
    %v2072 = vpack.c.b16 %v1704, %v1700
    %v2073 = vpack.c.b16 %v1705, %v1701
    %v2074 = vpack.c.b16 %v1706, %v1702
    %v2075 = vpack.c.b16 %v1707, %v1703
    %v2076 = vpack.c.b16 %v1712, %v1708
    %v2077 = vpack.c.b16 %v1713, %v1709
    %v2078 = vpack.c.b16 %v1714, %v1710
    %v2079 = vpack.c.b16 %v1715, %v1711
    %v2080 = vpack.c.b16 %v1720, %v1716
    %v2081 = vpack.c.b16 %v1721, %v1717
    %v2082 = vpack.c.b16 %v1722, %v1718
    %v2083 = vpack.c.b16 %v1723, %v1719
    %v2084 = vpack.c.b16 %v1728, %v1724
    %v2085 = vpack.c.b16 %v1729, %v1725
    %v2086 = vpack.c.b16 %v1730, %v1726
    %v2087 = vpack.c.b16 %v1731, %v1727
    %v2088 = vpack.c.b16 %v1736, %v1732
    %v2089 = vpack.c.b16 %v1737, %v1733
    %v2090 = vpack.c.b16 %v1738, %v1734
    %v2091 = vpack.c.b16 %v1739, %v1735
    %v2092 = vpack.c.b16 %v1744, %v1740
    %v2093 = vpack.c.b16 %v1745, %v1741
    %v2094 = vpack.c.b16 %v1746, %v1742
    %v2095 = vpack.c.b16 %v1747, %v1743
    %v2096 = vpack.c.b16 %v1752, %v1748
    %v2097 = vpack.c.b16 %v1753, %v1749
    %v2098 = vpack.c.b16 %v1754, %v1750
    %v2099 = vpack.c.b16 %v1755, %v1751
    %v2100 = vpack.c.b16 %v1760, %v1756
    %v2101 = vpack.c.b16 %v1761, %v1757
    %v2102 = vpack.c.b16 %v1762, %v1758
    %v2103 = vpack.c.b16 %v1763, %v1759
    %v2104 = vpack.c.b16 %v1768, %v1764
    %v2105 = vpack.c.b16 %v1769, %v1765
    %v2106 = vpack.c.b16 %v1770, %v1766
    %v2107 = vpack.c.b16 %v1771, %v1767
    %v2108 = vpack.c.b16 %v1776, %v1772
    %v2109 = vpack.c.b16 %v1777, %v1773
    %v2110 = vpack.c.b16 %v1778, %v1774
    %v2111 = vpack.c.b16 %v1779, %v1775
    %v2112 = vpack.c.b16 %v1784, %v1780
    %v2113 = vpack.c.b16 %v1785, %v1781
    %v2114 = vpack.c.b16 %v1786, %v1782
    %v2115 = vpack.c.b16 %v1787, %v1783
    %v2116 = vpack.c.b16 %v1792, %v1788
    %v2117 = vpack.c.b16 %v1793, %v1789
    %v2118 = vpack.c.b16 %v1794, %v1790
    %v2119 = vpack.c.b16 %v1795, %v1791
    %v2120 = vpack.c.b16 %v1800, %v1796
    %v2121 = vpack.c.b16 %v1801, %v1797
    %v2122 = vpack.c.b16 %v1802, %v1798
    %v2123 = vpack.c.b16 %v1803, %v1799
    %v2124 = vpack.c.b16 %v1808, %v1804
    %v2125 = vpack.c.b16 %v1809, %v1805
    %v2126 = vpack.c.b16 %v1810, %v1806
    %v2127 = vpack.c.b16 %v1811, %v1807
    %v2128 = vpack.c.b16 %v1816, %v1812
    %v2129 = vpack.c.b16 %v1817, %v1813
    %v2130 = vpack.c.b16 %v1818, %v1814
    %v2131 = vpack.c.b16 %v1819, %v1815
    %v2132 = vpack.c.b16 %v1824, %v1820
    %v2133 = vpack.c.b16 %v1825, %v1821
    %v2134 = vpack.c.b16 %v1826, %v1822
    %v2135 = vpack.c.b16 %v1827, %v1823
    %v2136 = vpack.c.b16 %v1832, %v1828
    %v2137 = vpack.c.b16 %v1833, %v1829
    %v2138 = vpack.c.b16 %v1834, %v1830
    %v2139 = vpack.c.b16 %v1835, %v1831
    %v2140 = vpack.c.b16 %v1840, %v1836
    %v2141 = vpack.c.b16 %v1841, %v1837
    %v2142 = vpack.c.b16 %v1842, %v1838
    %v2143 = vpack.c.b16 %v1843, %v1839
    %v2144 = vpack.c.b16 %v1848, %v1844
    %v2145 = vpack.c.b16 %v1849, %v1845
    %v2146 = vpack.c.b16 %v1850, %v1846
    %v2147 = vpack.c.b16 %v1851, %v1847
    %v2148 = vpack.c.b16 %v1856, %v1852
    %v2149 = vpack.c.b16 %v1857, %v1853
    %v2150 = vpack.c.b16 %v1858, %v1854
    %v2151 = vpack.c.b16 %v1859, %v1855
    %v2152 = vpack.c.b16 %v1864, %v1860
    %v2153 = vpack.c.b16 %v1865, %v1861
    %v2154 = vpack.c.b16 %v1866, %v1862
    %v2155 = vpack.c.b16 %v1867, %v1863
    %v2156 = vpack.c.b16 %v1872, %v1868
    %v2157 = vpack.c.b16 %v1873, %v1869
    %v2158 = vpack.c.b16 %v1874, %v1870
    %v2159 = vpack.c.b16 %v1875, %v1871
    %v2160 = vpack.c.b16 %v1880, %v1876
    %v2161 = vpack.c.b16 %v1881, %v1877
    %v2162 = vpack.c.b16 %v1882, %v1878
    %v2163 = vpack.c.b16 %v1883, %v1879
    %v2164 = vpack.c.b16 %v1888, %v1884
    %v2165 = vpack.c.b16 %v1889, %v1885
    %v2166 = vpack.c.b16 %v1890, %v1886
    %v2167 = vpack.c.b16 %v1891, %v1887
    %v2168 = vpack.c.b16 %v1896, %v1892
    %v2169 = vpack.c.b16 %v1897, %v1893
    %v2170 = vpack.c.b16 %v1898, %v1894
    %v2171 = vpack.c.b16 %v1899, %v1895
    %v2172 = vpack.c.b16 %v1904, %v1900
    %v2173 = vpack.c.b16 %v1905, %v1901
    %v2174 = vpack.c.b16 %v1906, %v1902
    %v2175 = vpack.c.b16 %v1907, %v1903
    %v2176 = vpack.c.b16 %v1912, %v1908
    %v2177 = vpack.c.b16 %v1913, %v1909
    %v2178 = vpack.c.b16 %v1914, %v1910
    %v2179 = vpack.c.b16 %v1915, %v1911
    %v2180 = vpack.c.b16 %v1920, %v1916
    %v2181 = vpack.c.b16 %v1921, %v1917
    %v2182 = vpack.c.b16 %v1922, %v1918
    %v2183 = vpack.c.b16 %v1923, %v1919
    %v2184 = vpack.c.b16 %v1928, %v1924
    %v2185 = vpack.c.b16 %v1929, %v1925
    %v2186 = vpack.c.b16 %v1930, %v1926
    %v2187 = vpack.c.b16 %v1931, %v1927
    %2444 = vmatpush.bf16.msra.mxu0 %v1960
    %2445 = vmatpush.bf16.msra.mxu0 %v1956
    %2446 = vmatpush.bf16.msra.mxu0 %v1952
    %2447 = vmatpush.bf16.msra.mxu0 %v1948
    %2448 = vmatpush.bf16.msra.mxu0 %v1944
    %2449 = vmatpush.bf16.msra.mxu0 %v1940
    %2450 = vmatpush.bf16.msra.mxu0 %v1936
    %2451 = vmatpush.bf16.msra.mxu0 %v1932
    %2452 = vmatmul.bf16.gmra.mxu0 %v1148
    %v2453 = vpop.f32.mrf.mxu0
    %v2454 = vadd.f32 0.0, %v2453
    %v2455 = vpop.f32.mrf.mxu0
    %2456 = vdwg.mxu0
    %2457 = vmatpush.bf16.msra.mxu0 %v1992
    %2458 = vmatpush.bf16.msra.mxu0 %v1988
    %2459 = vmatpush.bf16.msra.mxu0 %v1984
    %2460 = vmatpush.bf16.msra.mxu0 %v1980
    %2461 = vmatpush.bf16.msra.mxu0 %v1976
    %2462 = vmatpush.bf16.msra.mxu0 %v1972
    %2463 = vmatpush.bf16.msra.mxu0 %v1968
    %2464 = vmatpush.bf16.msra.mxu0 %v1964
    %2465 = vmatmul.bf16.gmra.mxu0 %v1149
    %v2466 = vpop.f32.mrf.mxu0
    %v2467 = vadd.f32 %v2454, %v2466
    %v2468 = vpop.f32.mrf.mxu0
    %2469 = vdwg.mxu0
    %2470 = vmatpush.bf16.msra.mxu0 %v2024
    %2471 = vmatpush.bf16.msra.mxu0 %v2020
    %2472 = vmatpush.bf16.msra.mxu0 %v2016
    %2473 = vmatpush.bf16.msra.mxu0 %v2012
    %2474 = vmatpush.bf16.msra.mxu0 %v2008
    %2475 = vmatpush.bf16.msra.mxu0 %v2004
    %2476 = vmatpush.bf16.msra.mxu0 %v2000
    %2477 = vmatpush.bf16.msra.mxu0 %v1996
    %2478 = vmatmul.bf16.gmra.mxu0 %v1150
    %v2479 = vpop.f32.mrf.mxu0
    %v2480 = vadd.f32 %v2467, %v2479
    %v2481 = vpop.f32.mrf.mxu0
    %2482 = vdwg.mxu0
    %2483 = vmatpush.bf16.msra.mxu0 %v2056
    %2484 = vmatpush.bf16.msra.mxu0 %v2052
    %2485 = vmatpush.bf16.msra.mxu0 %v2048
    %2486 = vmatpush.bf16.msra.mxu0 %v2044
    %2487 = vmatpush.bf16.msra.mxu0 %v2040
    %2488 = vmatpush.bf16.msra.mxu0 %v2036
    %2489 = vmatpush.bf16.msra.mxu0 %v2032
    %2490 = vmatpush.bf16.msra.mxu0 %v2028
    %2491 = vmatmul.bf16.gmra.mxu0 %v1151
    %v2492 = vpop.f32.mrf.mxu0
    %v2493 = vadd.f32 %v2480, %v2492
    %v2494 = vpop.f32.mrf.mxu0
    %2495 = vdwg.mxu0
    %2496 = vmatpush.bf16.msra.mxu0 %v2088
    %2497 = vmatpush.bf16.msra.mxu0 %v2084
    %2498 = vmatpush.bf16.msra.mxu0 %v2080
    %2499 = vmatpush.bf16.msra.mxu0 %v2076
    %2500 = vmatpush.bf16.msra.mxu0 %v2072
    %2501 = vmatpush.bf16.msra.mxu0 %v2068
    %2502 = vmatpush.bf16.msra.mxu0 %v2064
    %2503 = vmatpush.bf16.msra.mxu0 %v2060
    %2504 = vmatmul.bf16.gmra.mxu0 %v1152
    %v2505 = vpop.f32.mrf.mxu0
    %v2506 = vadd.f32 %v2493, %v2505
    %v2507 = vpop.f32.mrf.mxu0
    %2508 = vdwg.mxu0
    %2509 = vmatpush.bf16.msra.mxu0 %v2120
    %2510 = vmatpush.bf16.msra.mxu0 %v2116
    %2511 = vmatpush.bf16.msra.mxu0 %v2112
    %2512 = vmatpush.bf16.msra.mxu0 %v2108
    %2513 = vmatpush.bf16.msra.mxu0 %v2104
    %2514 = vmatpush.bf16.msra.mxu0 %v2100
    %2515 = vmatpush.bf16.msra.mxu0 %v2096
    %2516 = vmatpush.bf16.msra.mxu0 %v2092
    %2517 = vmatmul.bf16.gmra.mxu0 %v1153
    %v2518 = vpop.f32.mrf.mxu0
    %v2519 = vadd.f32 %v2506, %v2518
    %v2520 = vpop.f32.mrf.mxu0
    %2521 = vdwg.mxu0
    %2522 = vmatpush.bf16.msra.mxu0 %v2152
    %2523 = vmatpush.bf16.msra.mxu0 %v2148
    %2524 = vmatpush.bf16.msra.mxu0 %v2144
    %2525 = vmatpush.bf16.msra.mxu0 %v2140
    %2526 = vmatpush.bf16.msra.mxu0 %v2136
    %2527 = vmatpush.bf16.msra.mxu0 %v2132
    %2528 = vmatpush.bf16.msra.mxu0 %v2128
    %2529 = vmatpush.bf16.msra.mxu0 %v2124
    %2530 = vmatmul.bf16.gmra.mxu0 %v1154
    %v2531 = vpop.f32.mrf.mxu0
    %v2532 = vadd.f32 %v2519, %v2531
    %v2533 = vpop.f32.mrf.mxu0
    %2534 = vdwg.mxu0
    %2535 = vmatpush.bf16.msra.mxu0 %v2184
    %2536 = vmatpush.bf16.msra.mxu0 %v2180
    %2537 = vmatpush.bf16.msra.mxu0 %v2176
    %2538 = vmatpush.bf16.msra.mxu0 %v2172
    %2539 = vmatpush.bf16.msra.mxu0 %v2168
    %2540 = vmatpush.bf16.msra.mxu0 %v2164
    %2541 = vmatpush.bf16.msra.mxu0 %v2160
    %2542 = vmatpush.bf16.msra.mxu0 %v2156
    %2543 = vmatmul.bf16.gmra.mxu0 %v1155
    %v2544 = vpop.f32.mrf.mxu0
    %v2545 = vadd.f32 %v2532, %v2544
    %v2546 = vpop.f32.mrf.mxu0
    %2547 = vdwg.mxu0
    %2548 = vmatpush.bf16.msra.mxu0 %v1961
    %2549 = vmatpush.bf16.msra.mxu0 %v1957
    %2550 = vmatpush.bf16.msra.mxu0 %v1953
    %2551 = vmatpush.bf16.msra.mxu0 %v1949
    %2552 = vmatpush.bf16.msra.mxu0 %v1945
    %2553 = vmatpush.bf16.msra.mxu0 %v1941
    %2554 = vmatpush.bf16.msra.mxu0 %v1937
    %2555 = vmatpush.bf16.msra.mxu0 %v1933
    %2556 = vmatmul.bf16.gmra.mxu0 %v1148
    %v2557 = vpop.f32.mrf.mxu0
    %v2558 = vadd.f32 0.0, %v2557
    %v2559 = vpop.f32.mrf.mxu0
    %2560 = vdwg.mxu0
    %2561 = vmatpush.bf16.msra.mxu0 %v1993
    %2562 = vmatpush.bf16.msra.mxu0 %v1989
    %2563 = vmatpush.bf16.msra.mxu0 %v1985
    %2564 = vmatpush.bf16.msra.mxu0 %v1981
    %2565 = vmatpush.bf16.msra.mxu0 %v1977
    %2566 = vmatpush.bf16.msra.mxu0 %v1973
    %2567 = vmatpush.bf16.msra.mxu0 %v1969
    %2568 = vmatpush.bf16.msra.mxu0 %v1965
    %2569 = vmatmul.bf16.gmra.mxu0 %v1149
    %v2570 = vpop.f32.mrf.mxu0
    %v2571 = vadd.f32 %v2558, %v2570
    %v2572 = vpop.f32.mrf.mxu0
    %2573 = vdwg.mxu0
    %2574 = vmatpush.bf16.msra.mxu0 %v2025
    %2575 = vmatpush.bf16.msra.mxu0 %v2021
    %2576 = vmatpush.bf16.msra.mxu0 %v2017
    %2577 = vmatpush.bf16.msra.mxu0 %v2013
    %2578 = vmatpush.bf16.msra.mxu0 %v2009
    %2579 = vmatpush.bf16.msra.mxu0 %v2005
    %2580 = vmatpush.bf16.msra.mxu0 %v2001
    %2581 = vmatpush.bf16.msra.mxu0 %v1997
    %2582 = vmatmul.bf16.gmra.mxu0 %v1150
    %v2583 = vpop.f32.mrf.mxu0
    %v2584 = vadd.f32 %v2571, %v2583
    %v2585 = vpop.f32.mrf.mxu0
    %2586 = vdwg.mxu0
    %2587 = vmatpush.bf16.msra.mxu0 %v2057
    %2588 = vmatpush.bf16.msra.mxu0 %v2053
    %2589 = vmatpush.bf16.msra.mxu0 %v2049
    %2590 = vmatpush.bf16.msra.mxu0 %v2045
    %2591 = vmatpush.bf16.msra.mxu0 %v2041
    %2592 = vmatpush.bf16.msra.mxu0 %v2037
    %2593 = vmatpush.bf16.msra.mxu0 %v2033
    %2594 = vmatpush.bf16.msra.mxu0 %v2029
    %2595 = vmatmul.bf16.gmra.mxu0 %v1151
    %v2596 = vpop.f32.mrf.mxu0
    %v2597 = vadd.f32 %v2584, %v2596
    %v2598 = vpop.f32.mrf.mxu0
    %2599 = vdwg.mxu0
    %2600 = vmatpush.bf16.msra.mxu0 %v2089
    %2601 = vmatpush.bf16.msra.mxu0 %v2085
    %2602 = vmatpush.bf16.msra.mxu0 %v2081
    %2603 = vmatpush.bf16.msra.mxu0 %v2077
    %2604 = vmatpush.bf16.msra.mxu0 %v2073
    %2605 = vmatpush.bf16.msra.mxu0 %v2069
    %2606 = vmatpush.bf16.msra.mxu0 %v2065
    %2607 = vmatpush.bf16.msra.mxu0 %v2061
    %2608 = vmatmul.bf16.gmra.mxu0 %v1152
    %v2609 = vpop.f32.mrf.mxu0
    %v2610 = vadd.f32 %v2597, %v2609
    %v2611 = vpop.f32.mrf.mxu0
    %2612 = vdwg.mxu0
    %2613 = vmatpush.bf16.msra.mxu0 %v2121
    %2614 = vmatpush.bf16.msra.mxu0 %v2117
    %2615 = vmatpush.bf16.msra.mxu0 %v2113
    %2616 = vmatpush.bf16.msra.mxu0 %v2109
    %2617 = vmatpush.bf16.msra.mxu0 %v2105
    %2618 = vmatpush.bf16.msra.mxu0 %v2101
    %2619 = vmatpush.bf16.msra.mxu0 %v2097
    %2620 = vmatpush.bf16.msra.mxu0 %v2093
    %2621 = vmatmul.bf16.gmra.mxu0 %v1153
    %v2622 = vpop.f32.mrf.mxu0
    %v2623 = vadd.f32 %v2610, %v2622
    %v2624 = vpop.f32.mrf.mxu0
    %2625 = vdwg.mxu0
    %2626 = vmatpush.bf16.msra.mxu0 %v2153
    %2627 = vmatpush.bf16.msra.mxu0 %v2149
    %2628 = vmatpush.bf16.msra.mxu0 %v2145
    %2629 = vmatpush.bf16.msra.mxu0 %v2141
    %2630 = vmatpush.bf16.msra.mxu0 %v2137
    %2631 = vmatpush.bf16.msra.mxu0 %v2133
    %2632 = vmatpush.bf16.msra.mxu0 %v2129
    %2633 = vmatpush.bf16.msra.mxu0 %v2125
    %2634 = vmatmul.bf16.gmra.mxu0 %v1154
    %v2635 = vpop.f32.mrf.mxu0
    %v2636 = vadd.f32 %v2623, %v2635
    %v2637 = vpop.f32.mrf.mxu0
    %2638 = vdwg.mxu0
    %2639 = vmatpush.bf16.msra.mxu0 %v2185
    %2640 = vmatpush.bf16.msra.mxu0 %v2181
    %2641 = vmatpush.bf16.msra.mxu0 %v2177
    %2642 = vmatpush.bf16.msra.mxu0 %v2173
    %2643 = vmatpush.bf16.msra.mxu0 %v2169
    %2644 = vmatpush.bf16.msra.mxu0 %v2165
    %2645 = vmatpush.bf16.msra.mxu0 %v2161
    %2646 = vmatpush.bf16.msra.mxu0 %v2157
    %2647 = vmatmul.bf16.gmra.mxu0 %v1155
    %v2648 = vpop.f32.mrf.mxu0
    %v2649 = vadd.f32 %v2636, %v2648
    %v2650 = vpop.f32.mrf.mxu0
    %2651 = vdwg.mxu0
    %2652 = vmatpush.bf16.msra.mxu0 %v1962
    %2653 = vmatpush.bf16.msra.mxu0 %v1958
    %2654 = vmatpush.bf16.msra.mxu0 %v1954
    %2655 = vmatpush.bf16.msra.mxu0 %v1950
    %2656 = vmatpush.bf16.msra.mxu0 %v1946
    %2657 = vmatpush.bf16.msra.mxu0 %v1942
    %2658 = vmatpush.bf16.msra.mxu0 %v1938
    %2659 = vmatpush.bf16.msra.mxu0 %v1934
    %2660 = vmatmul.bf16.gmra.mxu0 %v1148
    %v2661 = vpop.f32.mrf.mxu0
    %v2662 = vadd.f32 0.0, %v2661
    %v2663 = vpop.f32.mrf.mxu0
    %2664 = vdwg.mxu0
    %2665 = vmatpush.bf16.msra.mxu0 %v1994
    %2666 = vmatpush.bf16.msra.mxu0 %v1990
    %2667 = vmatpush.bf16.msra.mxu0 %v1986
    %2668 = vmatpush.bf16.msra.mxu0 %v1982
    %2669 = vmatpush.bf16.msra.mxu0 %v1978
    %2670 = vmatpush.bf16.msra.mxu0 %v1974
    %2671 = vmatpush.bf16.msra.mxu0 %v1970
    %2672 = vmatpush.bf16.msra.mxu0 %v1966
    %2673 = vmatmul.bf16.gmra.mxu0 %v1149
    %v2674 = vpop.f32.mrf.mxu0
    %v2675 = vadd.f32 %v2662, %v2674
    %v2676 = vpop.f32.mrf.mxu0
    %2677 = vdwg.mxu0
    %2678 = vmatpush.bf16.msra.mxu0 %v2026
    %2679 = vmatpush.bf16.msra.mxu0 %v2022
    %2680 = vmatpush.bf16.msra.mxu0 %v2018
    %2681 = vmatpush.bf16.msra.mxu0 %v2014
    %2682 = vmatpush.bf16.msra.mxu0 %v2010
    %2683 = vmatpush.bf16.msra.mxu0 %v2006
    %2684 = vmatpush.bf16.msra.mxu0 %v2002
    %2685 = vmatpush.bf16.msra.mxu0 %v1998
    %2686 = vmatmul.bf16.gmra.mxu0 %v1150
    %v2687 = vpop.f32.mrf.mxu0
    %v2688 = vadd.f32 %v2675, %v2687
    %v2689 = vpop.f32.mrf.mxu0
    %2690 = vdwg.mxu0
    %2691 = vmatpush.bf16.msra.mxu0 %v2058
    %2692 = vmatpush.bf16.msra.mxu0 %v2054
    %2693 = vmatpush.bf16.msra.mxu0 %v2050
    %2694 = vmatpush.bf16.msra.mxu0 %v2046
    %2695 = vmatpush.bf16.msra.mxu0 %v2042
    %2696 = vmatpush.bf16.msra.mxu0 %v2038
    %2697 = vmatpush.bf16.msra.mxu0 %v2034
    %2698 = vmatpush.bf16.msra.mxu0 %v2030
    %2699 = vmatmul.bf16.gmra.mxu0 %v1151
    %v2700 = vpop.f32.mrf.mxu0
    %v2701 = vadd.f32 %v2688, %v2700
    %v2702 = vpop.f32.mrf.mxu0
    %2703 = vdwg.mxu0
    %2704 = vmatpush.bf16.msra.mxu0 %v2090
    %2705 = vmatpush.bf16.msra.mxu0 %v2086
    %2706 = vmatpush.bf16.msra.mxu0 %v2082
    %2707 = vmatpush.bf16.msra.mxu0 %v2078
    %2708 = vmatpush.bf16.msra.mxu0 %v2074
    %2709 = vmatpush.bf16.msra.mxu0 %v2070
    %2710 = vmatpush.bf16.msra.mxu0 %v2066
    %2711 = vmatpush.bf16.msra.mxu0 %v2062
    %2712 = vmatmul.bf16.gmra.mxu0 %v1152
    %v2713 = vpop.f32.mrf.mxu0
    %v2714 = vadd.f32 %v2701, %v2713
    %v2715 = vpop.f32.mrf.mxu0
    %2716 = vdwg.mxu0
    %2717 = vmatpush.bf16.msra.mxu0 %v2122
    %2718 = vmatpush.bf16.msra.mxu0 %v2118
    %2719 = vmatpush.bf16.msra.mxu0 %v2114
    %2720 = vmatpush.bf16.msra.mxu0 %v2110
    %2721 = vmatpush.bf16.msra.mxu0 %v2106
    %2722 = vmatpush.bf16.msra.mxu0 %v2102
    %2723 = vmatpush.bf16.msra.mxu0 %v2098
    %2724 = vmatpush.bf16.msra.mxu0 %v2094
    %2725 = vmatmul.bf16.gmra.mxu0 %v1153
    %v2726 = vpop.f32.mrf.mxu0
    %v2727 = vadd.f32 %v2714, %v2726
    %v2728 = vpop.f32.mrf.mxu0
    %2729 = vdwg.mxu0
    %2730 = vmatpush.bf16.msra.mxu0 %v2154
    %2731 = vmatpush.bf16.msra.mxu0 %v2150
    %2732 = vmatpush.bf16.msra.mxu0 %v2146
    %2733 = vmatpush.bf16.msra.mxu0 %v2142
    %2734 = vmatpush.bf16.msra.mxu0 %v2138
    %2735 = vmatpush.bf16.msra.mxu0 %v2134
    %2736 = vmatpush.bf16.msra.mxu0 %v2130
    %2737 = vmatpush.bf16.msra.mxu0 %v2126
    %2738 = vmatmul.bf16.gmra.mxu0 %v1154
    %v2739 = vpop.f32.mrf.mxu0
    %v2740 = vadd.f32 %v2727, %v2739
    %v2741 = vpop.f32.mrf.mxu0
    %2742 = vdwg.mxu0
    %2743 = vmatpush.bf16.msra.mxu0 %v2186
    %2744 = vmatpush.bf16.msra.mxu0 %v2182
    %2745 = vmatpush.bf16.msra.mxu0 %v2178
    %2746 = vmatpush.bf16.msra.mxu0 %v2174
    %2747 = vmatpush.bf16.msra.mxu0 %v2170
    %2748 = vmatpush.bf16.msra.mxu0 %v2166
    %2749 = vmatpush.bf16.msra.mxu0 %v2162
    %2750 = vmatpush.bf16.msra.mxu0 %v2158
    %2751 = vmatmul.bf16.gmra.mxu0 %v1155
    %v2752 = vpop.f32.mrf.mxu0
    %v2753 = vadd.f32 %v2740, %v2752
    %v2754 = vpop.f32.mrf.mxu0
    %2755 = vdwg.mxu0
    %2756 = vmatpush.bf16.msra.mxu0 %v1963
    %2757 = vmatpush.bf16.msra.mxu0 %v1959
    %2758 = vmatpush.bf16.msra.mxu0 %v1955
    %2759 = vmatpush.bf16.msra.mxu0 %v1951
    %2760 = vmatpush.bf16.msra.mxu0 %v1947
    %2761 = vmatpush.bf16.msra.mxu0 %v1943
    %2762 = vmatpush.bf16.msra.mxu0 %v1939
    %2763 = vmatpush.bf16.msra.mxu0 %v1935
    %2764 = vmatmul.bf16.gmra.mxu0 %v1148
    %v2765 = vpop.f32.mrf.mxu0
    %v2766 = vadd.f32 0.0, %v2765
    %v2767 = vpop.f32.mrf.mxu0
    %2768 = vdwg.mxu0
    %2769 = vmatpush.bf16.msra.mxu0 %v1995
    %2770 = vmatpush.bf16.msra.mxu0 %v1991
    %2771 = vmatpush.bf16.msra.mxu0 %v1987
    %2772 = vmatpush.bf16.msra.mxu0 %v1983
    %2773 = vmatpush.bf16.msra.mxu0 %v1979
    %2774 = vmatpush.bf16.msra.mxu0 %v1975
    %2775 = vmatpush.bf16.msra.mxu0 %v1971
    %2776 = vmatpush.bf16.msra.mxu0 %v1967
    %2777 = vmatmul.bf16.gmra.mxu0 %v1149
    %v2778 = vpop.f32.mrf.mxu0
    %v2779 = vadd.f32 %v2766, %v2778
    %v2780 = vpop.f32.mrf.mxu0
    %2781 = vdwg.mxu0
    %2782 = vmatpush.bf16.msra.mxu0 %v2027
    %2783 = vmatpush.bf16.msra.mxu0 %v2023
    %2784 = vmatpush.bf16.msra.mxu0 %v2019
    %2785 = vmatpush.bf16.msra.mxu0 %v2015
    %2786 = vmatpush.bf16.msra.mxu0 %v2011
    %2787 = vmatpush.bf16.msra.mxu0 %v2007
    %2788 = vmatpush.bf16.msra.mxu0 %v2003
    %2789 = vmatpush.bf16.msra.mxu0 %v1999
    %2790 = vmatmul.bf16.gmra.mxu0 %v1150
    %v2791 = vpop.f32.mrf.mxu0
    %v2792 = vadd.f32 %v2779, %v2791
    %v2793 = vpop.f32.mrf.mxu0
    %2794 = vdwg.mxu0
    %2795 = vmatpush.bf16.msra.mxu0 %v2059
    %2796 = vmatpush.bf16.msra.mxu0 %v2055
    %2797 = vmatpush.bf16.msra.mxu0 %v2051
    %2798 = vmatpush.bf16.msra.mxu0 %v2047
    %2799 = vmatpush.bf16.msra.mxu0 %v2043
    %2800 = vmatpush.bf16.msra.mxu0 %v2039
    %2801 = vmatpush.bf16.msra.mxu0 %v2035
    %2802 = vmatpush.bf16.msra.mxu0 %v2031
    %2803 = vmatmul.bf16.gmra.mxu0 %v1151
    %v2804 = vpop.f32.mrf.mxu0
    %v2805 = vadd.f32 %v2792, %v2804
    %v2806 = vpop.f32.mrf.mxu0
    %2807 = vdwg.mxu0
    %2808 = vmatpush.bf16.msra.mxu0 %v2091
    %2809 = vmatpush.bf16.msra.mxu0 %v2087
    %2810 = vmatpush.bf16.msra.mxu0 %v2083
    %2811 = vmatpush.bf16.msra.mxu0 %v2079
    %2812 = vmatpush.bf16.msra.mxu0 %v2075
    %2813 = vmatpush.bf16.msra.mxu0 %v2071
    %2814 = vmatpush.bf16.msra.mxu0 %v2067
    %2815 = vmatpush.bf16.msra.mxu0 %v2063
    %2816 = vmatmul.bf16.gmra.mxu0 %v1152
    %v2817 = vpop.f32.mrf.mxu0
    %v2818 = vadd.f32 %v2805, %v2817
    %v2819 = vpop.f32.mrf.mxu0
    %2820 = vdwg.mxu0
    %2821 = vmatpush.bf16.msra.mxu0 %v2123
    %2822 = vmatpush.bf16.msra.mxu0 %v2119
    %2823 = vmatpush.bf16.msra.mxu0 %v2115
    %2824 = vmatpush.bf16.msra.mxu0 %v2111
    %2825 = vmatpush.bf16.msra.mxu0 %v2107
    %2826 = vmatpush.bf16.msra.mxu0 %v2103
    %2827 = vmatpush.bf16.msra.mxu0 %v2099
    %2828 = vmatpush.bf16.msra.mxu0 %v2095
    %2829 = vmatmul.bf16.gmra.mxu0 %v1153
    %v2830 = vpop.f32.mrf.mxu0
    %v2831 = vadd.f32 %v2818, %v2830
    %v2832 = vpop.f32.mrf.mxu0
    %2833 = vdwg.mxu0
    %2834 = vmatpush.bf16.msra.mxu0 %v2155
    %2835 = vmatpush.bf16.msra.mxu0 %v2151
    %2836 = vmatpush.bf16.msra.mxu0 %v2147
    %2837 = vmatpush.bf16.msra.mxu0 %v2143
    %2838 = vmatpush.bf16.msra.mxu0 %v2139
    %2839 = vmatpush.bf16.msra.mxu0 %v2135
    %2840 = vmatpush.bf16.msra.mxu0 %v2131
    %2841 = vmatpush.bf16.msra.mxu0 %v2127
    %2842 = vmatmul.bf16.gmra.mxu0 %v1154
    %v2843 = vpop.f32.mrf.mxu0
    %v2844 = vadd.f32 %v2831, %v2843
    %v2845 = vpop.f32.mrf.mxu0
    %2846 = vdwg.mxu0
    %2847 = vmatpush.bf16.msra.mxu0 %v2187
    %2848 = vmatpush.bf16.msra.mxu0 %v2183
    %2849 = vmatpush.bf16.msra.mxu0 %v2179
    %2850 = vmatpush.bf16.msra.mxu0 %v2175
    %2851 = vmatpush.bf16.msra.mxu0 %v2171
    %2852 = vmatpush.bf16.msra.mxu0 %v2167
    %2853 = vmatpush.bf16.msra.mxu0 %v2163
    %2854 = vmatpush.bf16.msra.mxu0 %v2159
    %2855 = vmatmul.bf16.gmra.mxu0 %v1155
    %v2856 = vpop.f32.mrf.mxu0
    %v2857 = vadd.f32 %v2844, %v2856
    %v2858 = vpop.f32.mrf.mxu0
    %2859 = vdwg.mxu0
    %v2876 = vunpack.c.l.b16 %v563
    %v2877 = vunpack.c.l.b16 %v564
    %v2878 = vunpack.c.l.b16 %v565
    %v2879 = vunpack.c.l.b16 %v566
    %v2880 = vunpack.c.l.b16 %v567
    %v2881 = vunpack.c.l.b16 %v568
    %v2882 = vunpack.c.l.b16 %v569
    %v2883 = vunpack.c.l.b16 %v570
    %v2884 = vunpack.c.l.b16 %v571
    %v2885 = vunpack.c.l.b16 %v572
    %v2886 = vunpack.c.l.b16 %v573
    %v2887 = vunpack.c.l.b16 %v574
    %v2888 = vunpack.c.l.b16 %v575
    %v2889 = vunpack.c.l.b16 %v576
    %v2890 = vunpack.c.l.b16 %v577
    %v2891 = vunpack.c.l.b16 %v578
    %v2892 = vsel %vm1139, %v2884, %v2876
    %v2893 = vsel %vm1139, %v2885, %v2877
    %v2894 = vsel %vm1139, %v2886, %v2878
    %v2895 = vsel %vm1139, %v2887, %v2879
    %v2896 = vsel %vm1139, %v2888, %v2880
    %v2897 = vsel %vm1139, %v2889, %v2881
    %v2898 = vsel %vm1139, %v2890, %v2882
    %v2899 = vsel %vm1139, %v2891, %v2883
    %v2900 = vpack.c.b16 %v2892, %v2892
    %v2901 = vpack.c.b16 %v2893, %v2893
    %v2902 = vpack.c.b16 %v2894, %v2894
    %v2903 = vpack.c.b16 %v2895, %v2895
    %v2904 = vpack.c.b16 %v2896, %v2896
    %v2905 = vpack.c.b16 %v2897, %v2897
    %v2906 = vpack.c.b16 %v2898, %v2898
    %v2907 = vpack.c.b16 %v2899, %v2899
    %v3172 = vunpack.c.l.b16 %v579
    %v3173 = vunpack.c.h.b16 %v579
    %v3174 = vunpack.c.l.b16 %v580
    %v3175 = vunpack.c.h.b16 %v580
    %v3176 = vunpack.c.l.b16 %v581
    %v3177 = vunpack.c.h.b16 %v581
    %v3178 = vunpack.c.l.b16 %v582
    %v3179 = vunpack.c.h.b16 %v582
    %v3180 = vunpack.c.l.b16 %v583
    %v3181 = vunpack.c.h.b16 %v583
    %v3182 = vunpack.c.l.b16 %v584
    %v3183 = vunpack.c.h.b16 %v584
    %v3184 = vunpack.c.l.b16 %v585
    %v3185 = vunpack.c.h.b16 %v585
    %v3186 = vunpack.c.l.b16 %v586
    %v3187 = vunpack.c.h.b16 %v586
    %v3188 = vunpack.c.l.b16 %v587
    %v3189 = vunpack.c.h.b16 %v587
    %v3190 = vunpack.c.l.b16 %v588
    %v3191 = vunpack.c.h.b16 %v588
    %v3192 = vunpack.c.l.b16 %v589
    %v3193 = vunpack.c.h.b16 %v589
    %v3194 = vunpack.c.l.b16 %v590
    %v3195 = vunpack.c.h.b16 %v590
    %v3196 = vunpack.c.l.b16 %v591
    %v3197 = vunpack.c.h.b16 %v591
    %v3198 = vunpack.c.l.b16 %v592
    %v3199 = vunpack.c.h.b16 %v592
    %v3200 = vunpack.c.l.b16 %v593
    %v3201 = vunpack.c.h.b16 %v593
    %v3202 = vunpack.c.l.b16 %v594
    %v3203 = vunpack.c.h.b16 %v594
    %v3204 = vunpack.c.l.b16 %v595
    %v3205 = vunpack.c.h.b16 %v595
    %v3206 = vunpack.c.l.b16 %v596
    %v3207 = vunpack.c.h.b16 %v596
    %v3208 = vunpack.c.l.b16 %v597
    %v3209 = vunpack.c.h.b16 %v597
    %v3210 = vunpack.c.l.b16 %v598
    %v3211 = vunpack.c.h.b16 %v598
    %v3212 = vunpack.c.l.b16 %v599
    %v3213 = vunpack.c.h.b16 %v599
    %v3214 = vunpack.c.l.b16 %v600
    %v3215 = vunpack.c.h.b16 %v600
    %v3216 = vunpack.c.l.b16 %v601
    %v3217 = vunpack.c.h.b16 %v601
    %v3218 = vunpack.c.l.b16 %v602
    %v3219 = vunpack.c.h.b16 %v602
    %v3220 = vunpack.c.l.b16 %v603
    %v3221 = vunpack.c.h.b16 %v603
    %v3222 = vunpack.c.l.b16 %v604
    %v3223 = vunpack.c.h.b16 %v604
    %v3224 = vunpack.c.l.b16 %v605
    %v3225 = vunpack.c.h.b16 %v605
    %v3226 = vunpack.c.l.b16 %v606
    %v3227 = vunpack.c.h.b16 %v606
    %v3228 = vunpack.c.l.b16 %v607
    %v3229 = vunpack.c.h.b16 %v607
    %v3230 = vunpack.c.l.b16 %v608
    %v3231 = vunpack.c.h.b16 %v608
    %v3232 = vunpack.c.l.b16 %v609
    %v3233 = vunpack.c.h.b16 %v609
    %v3234 = vunpack.c.l.b16 %v610
    %v3235 = vunpack.c.h.b16 %v610
    %v3236 = vunpack.c.l.b16 %v611
    %v3237 = vunpack.c.h.b16 %v611
    %v3238 = vunpack.c.l.b16 %v612
    %v3239 = vunpack.c.h.b16 %v612
    %v3240 = vunpack.c.l.b16 %v613
    %v3241 = vunpack.c.h.b16 %v613
    %v3242 = vunpack.c.l.b16 %v614
    %v3243 = vunpack.c.h.b16 %v614
    %v3244 = vunpack.c.l.b16 %v615
    %v3245 = vunpack.c.h.b16 %v615
    %v3246 = vunpack.c.l.b16 %v616
    %v3247 = vunpack.c.h.b16 %v616
    %v3248 = vunpack.c.l.b16 %v617
    %v3249 = vunpack.c.h.b16 %v617
    %v3250 = vunpack.c.l.b16 %v618
    %v3251 = vunpack.c.h.b16 %v618
    %v3252 = vunpack.c.l.b16 %v619
    %v3253 = vunpack.c.h.b16 %v619
    %v3254 = vunpack.c.l.b16 %v620
    %v3255 = vunpack.c.h.b16 %v620
    %v3256 = vunpack.c.l.b16 %v621
    %v3257 = vunpack.c.h.b16 %v621
    %v3258 = vunpack.c.l.b16 %v622
    %v3259 = vunpack.c.h.b16 %v622
    %v3260 = vunpack.c.l.b16 %v623
    %v3261 = vunpack.c.h.b16 %v623
    %v3262 = vunpack.c.l.b16 %v624
    %v3263 = vunpack.c.h.b16 %v624
    %v3264 = vunpack.c.l.b16 %v625
    %v3265 = vunpack.c.h.b16 %v625
    %v3266 = vunpack.c.l.b16 %v626
    %v3267 = vunpack.c.h.b16 %v626
    %v3268 = vunpack.c.l.b16 %v627
    %v3269 = vunpack.c.h.b16 %v627
    %v3270 = vunpack.c.l.b16 %v628
    %v3271 = vunpack.c.h.b16 %v628
    %v3272 = vunpack.c.l.b16 %v629
    %v3273 = vunpack.c.h.b16 %v629
    %v3274 = vunpack.c.l.b16 %v630
    %v3275 = vunpack.c.h.b16 %v630
    %v3276 = vunpack.c.l.b16 %v631
    %v3277 = vunpack.c.h.b16 %v631
    %v3278 = vunpack.c.l.b16 %v632
    %v3279 = vunpack.c.h.b16 %v632
    %v3280 = vunpack.c.l.b16 %v633
    %v3281 = vunpack.c.h.b16 %v633
    %v3282 = vunpack.c.l.b16 %v634
    %v3283 = vunpack.c.h.b16 %v634
    %v3284 = vunpack.c.l.b16 %v635
    %v3285 = vunpack.c.h.b16 %v635
    %v3286 = vunpack.c.l.b16 %v636
    %v3287 = vunpack.c.h.b16 %v636
    %v3288 = vunpack.c.l.b16 %v637
    %v3289 = vunpack.c.h.b16 %v637
    %v3290 = vunpack.c.l.b16 %v638
    %v3291 = vunpack.c.h.b16 %v638
    %v3292 = vunpack.c.l.b16 %v639
    %v3293 = vunpack.c.h.b16 %v639
    %v3294 = vunpack.c.l.b16 %v640
    %v3295 = vunpack.c.h.b16 %v640
    %v3296 = vunpack.c.l.b16 %v641
    %v3297 = vunpack.c.h.b16 %v641
    %v3298 = vunpack.c.l.b16 %v642
    %v3299 = vunpack.c.h.b16 %v642
    %v3300 = vunpack.c.l.b16 %v643
    %v3301 = vunpack.c.h.b16 %v643
    %v3302 = vunpack.c.l.b16 %v644
    %v3303 = vunpack.c.h.b16 %v644
    %v3304 = vunpack.c.l.b16 %v645
    %v3305 = vunpack.c.h.b16 %v645
    %v3306 = vunpack.c.l.b16 %v646
    %v3307 = vunpack.c.h.b16 %v646
    %v3308 = vunpack.c.l.b16 %v647
    %v3309 = vunpack.c.h.b16 %v647
    %v3310 = vunpack.c.l.b16 %v648
    %v3311 = vunpack.c.h.b16 %v648
    %v3312 = vunpack.c.l.b16 %v649
    %v3313 = vunpack.c.h.b16 %v649
    %v3314 = vunpack.c.l.b16 %v650
    %v3315 = vunpack.c.h.b16 %v650
    %v3316 = vunpack.c.l.b16 %v651
    %v3317 = vunpack.c.h.b16 %v651
    %v3318 = vunpack.c.l.b16 %v652
    %v3319 = vunpack.c.h.b16 %v652
    %v3320 = vunpack.c.l.b16 %v653
    %v3321 = vunpack.c.h.b16 %v653
    %v3322 = vunpack.c.l.b16 %v654
    %v3323 = vunpack.c.h.b16 %v654
    %v3324 = vunpack.c.l.b16 %v655
    %v3325 = vunpack.c.h.b16 %v655
    %v3326 = vunpack.c.l.b16 %v656
    %v3327 = vunpack.c.h.b16 %v656
    %v3328 = vunpack.c.l.b16 %v657
    %v3329 = vunpack.c.h.b16 %v657
    %v3330 = vunpack.c.l.b16 %v658
    %v3331 = vunpack.c.h.b16 %v658
    %v3332 = vunpack.c.l.b16 %v659
    %v3333 = vunpack.c.h.b16 %v659
    %v3334 = vunpack.c.l.b16 %v660
    %v3335 = vunpack.c.h.b16 %v660
    %v3336 = vunpack.c.l.b16 %v661
    %v3337 = vunpack.c.h.b16 %v661
    %v3338 = vunpack.c.l.b16 %v662
    %v3339 = vunpack.c.h.b16 %v662
    %v3340 = vunpack.c.l.b16 %v663
    %v3341 = vunpack.c.h.b16 %v663
    %v3342 = vunpack.c.l.b16 %v664
    %v3343 = vunpack.c.h.b16 %v664
    %v3344 = vunpack.c.l.b16 %v665
    %v3345 = vunpack.c.h.b16 %v665
    %v3346 = vunpack.c.l.b16 %v666
    %v3347 = vunpack.c.h.b16 %v666
    %v3348 = vunpack.c.l.b16 %v667
    %v3349 = vunpack.c.h.b16 %v667
    %v3350 = vunpack.c.l.b16 %v668
    %v3351 = vunpack.c.h.b16 %v668
    %v3352 = vunpack.c.l.b16 %v669
    %v3353 = vunpack.c.h.b16 %v669
    %v3354 = vunpack.c.l.b16 %v670
    %v3355 = vunpack.c.h.b16 %v670
    %v3356 = vunpack.c.l.b16 %v671
    %v3357 = vunpack.c.h.b16 %v671
    %v3358 = vunpack.c.l.b16 %v672
    %v3359 = vunpack.c.h.b16 %v672
    %v3360 = vunpack.c.l.b16 %v673
    %v3361 = vunpack.c.h.b16 %v673
    %v3362 = vunpack.c.l.b16 %v674
    %v3363 = vunpack.c.h.b16 %v674
    %v3364 = vunpack.c.l.b16 %v675
    %v3365 = vunpack.c.h.b16 %v675
    %v3366 = vunpack.c.l.b16 %v676
    %v3367 = vunpack.c.h.b16 %v676
    %v3368 = vunpack.c.l.b16 %v677
    %v3369 = vunpack.c.h.b16 %v677
    %v3370 = vunpack.c.l.b16 %v678
    %v3371 = vunpack.c.h.b16 %v678
    %v3372 = vunpack.c.l.b16 %v679
    %v3373 = vunpack.c.h.b16 %v679
    %v3374 = vunpack.c.l.b16 %v680
    %v3375 = vunpack.c.h.b16 %v680
    %v3376 = vunpack.c.l.b16 %v681
    %v3377 = vunpack.c.h.b16 %v681
    %v3378 = vunpack.c.l.b16 %v682
    %v3379 = vunpack.c.h.b16 %v682
    %v3380 = vunpack.c.l.b16 %v683
    %v3381 = vunpack.c.h.b16 %v683
    %v3382 = vunpack.c.l.b16 %v684
    %v3383 = vunpack.c.h.b16 %v684
    %v3384 = vunpack.c.l.b16 %v685
    %v3385 = vunpack.c.h.b16 %v685
    %v3386 = vunpack.c.l.b16 %v686
    %v3387 = vunpack.c.h.b16 %v686
    %v3388 = vunpack.c.l.b16 %v687
    %v3389 = vunpack.c.h.b16 %v687
    %v3390 = vunpack.c.l.b16 %v688
    %v3391 = vunpack.c.h.b16 %v688
    %v3392 = vunpack.c.l.b16 %v689
    %v3393 = vunpack.c.h.b16 %v689
    %v3394 = vunpack.c.l.b16 %v690
    %v3395 = vunpack.c.h.b16 %v690
    %v3396 = vunpack.c.l.b16 %v691
    %v3397 = vunpack.c.h.b16 %v691
    %v3398 = vunpack.c.l.b16 %v692
    %v3399 = vunpack.c.h.b16 %v692
    %v3400 = vunpack.c.l.b16 %v693
    %v3401 = vunpack.c.h.b16 %v693
    %v3402 = vunpack.c.l.b16 %v694
    %v3403 = vunpack.c.h.b16 %v694
    %v3404 = vunpack.c.l.b16 %v695
    %v3405 = vunpack.c.h.b16 %v695
    %v3406 = vunpack.c.l.b16 %v696
    %v3407 = vunpack.c.h.b16 %v696
    %v3408 = vunpack.c.l.b16 %v697
    %v3409 = vunpack.c.h.b16 %v697
    %v3410 = vunpack.c.l.b16 %v698
    %v3411 = vunpack.c.h.b16 %v698
    %v3412 = vunpack.c.l.b16 %v699
    %v3413 = vunpack.c.h.b16 %v699
    %v3414 = vunpack.c.l.b16 %v700
    %v3415 = vunpack.c.h.b16 %v700
    %v3416 = vunpack.c.l.b16 %v701
    %v3417 = vunpack.c.h.b16 %v701
    %v3418 = vunpack.c.l.b16 %v702
    %v3419 = vunpack.c.h.b16 %v702
    %v3420 = vunpack.c.l.b16 %v703
    %v3421 = vunpack.c.h.b16 %v703
    %v3422 = vunpack.c.l.b16 %v704
    %v3423 = vunpack.c.h.b16 %v704
    %v3424 = vunpack.c.l.b16 %v705
    %v3425 = vunpack.c.h.b16 %v705
    %v3426 = vunpack.c.l.b16 %v706
    %v3427 = vunpack.c.h.b16 %v706
    %v3428 = vunpack.c.l.b16 %v707
    %v3429 = vunpack.c.h.b16 %v707
    %v3430 = vunpack.c.l.b16 %v708
    %v3431 = vunpack.c.h.b16 %v708
    %v3432 = vunpack.c.l.b16 %v709
    %v3433 = vunpack.c.h.b16 %v709
    %v3434 = vunpack.c.l.b16 %v710
    %v3435 = vunpack.c.h.b16 %v710
    %v3436 = vunpack.c.l.b16 %v711
    %v3437 = vunpack.c.h.b16 %v711
    %v3438 = vunpack.c.l.b16 %v712
    %v3439 = vunpack.c.h.b16 %v712
    %v3440 = vunpack.c.l.b16 %v713
    %v3441 = vunpack.c.h.b16 %v713
    %v3442 = vunpack.c.l.b16 %v714
    %v3443 = vunpack.c.h.b16 %v714
    %v3444 = vunpack.c.l.b16 %v715
    %v3445 = vunpack.c.h.b16 %v715
    %v3446 = vunpack.c.l.b16 %v716
    %v3447 = vunpack.c.h.b16 %v716
    %v3448 = vunpack.c.l.b16 %v717
    %v3449 = vunpack.c.h.b16 %v717
    %v3450 = vunpack.c.l.b16 %v718
    %v3451 = vunpack.c.h.b16 %v718
    %v3452 = vunpack.c.l.b16 %v719
    %v3453 = vunpack.c.h.b16 %v719
    %v3454 = vunpack.c.l.b16 %v720
    %v3455 = vunpack.c.h.b16 %v720
    %v3456 = vunpack.c.l.b16 %v721
    %v3457 = vunpack.c.h.b16 %v721
    %v3458 = vunpack.c.l.b16 %v722
    %v3459 = vunpack.c.h.b16 %v722
    %v3460 = vunpack.c.l.b16 %v723
    %v3461 = vunpack.c.h.b16 %v723
    %v3462 = vunpack.c.l.b16 %v724
    %v3463 = vunpack.c.h.b16 %v724
    %v3464 = vunpack.c.l.b16 %v725
    %v3465 = vunpack.c.h.b16 %v725
    %v3466 = vunpack.c.l.b16 %v726
    %v3467 = vunpack.c.h.b16 %v726
    %v3468 = vunpack.c.l.b16 %v727
    %v3469 = vunpack.c.h.b16 %v727
    %v3470 = vunpack.c.l.b16 %v728
    %v3471 = vunpack.c.h.b16 %v728
    %v3472 = vunpack.c.l.b16 %v729
    %v3473 = vunpack.c.h.b16 %v729
    %v3474 = vunpack.c.l.b16 %v730
    %v3475 = vunpack.c.h.b16 %v730
    %v3476 = vunpack.c.l.b16 %v731
    %v3477 = vunpack.c.h.b16 %v731
    %v3478 = vunpack.c.l.b16 %v732
    %v3479 = vunpack.c.h.b16 %v732
    %v3480 = vunpack.c.l.b16 %v733
    %v3481 = vunpack.c.h.b16 %v733
    %v3482 = vunpack.c.l.b16 %v734
    %v3483 = vunpack.c.h.b16 %v734
    %v3484 = vunpack.c.l.b16 %v735
    %v3485 = vunpack.c.h.b16 %v735
    %v3486 = vunpack.c.l.b16 %v736
    %v3487 = vunpack.c.h.b16 %v736
    %v3488 = vunpack.c.l.b16 %v737
    %v3489 = vunpack.c.h.b16 %v737
    %v3490 = vunpack.c.l.b16 %v738
    %v3491 = vunpack.c.h.b16 %v738
    %v3492 = vunpack.c.l.b16 %v739
    %v3493 = vunpack.c.h.b16 %v739
    %v3494 = vunpack.c.l.b16 %v740
    %v3495 = vunpack.c.h.b16 %v740
    %v3496 = vunpack.c.l.b16 %v741
    %v3497 = vunpack.c.h.b16 %v741
    %v3498 = vunpack.c.l.b16 %v742
    %v3499 = vunpack.c.h.b16 %v742
    %v3500 = vunpack.c.l.b16 %v743
    %v3501 = vunpack.c.h.b16 %v743
    %v3502 = vunpack.c.l.b16 %v744
    %v3503 = vunpack.c.h.b16 %v744
    %v3504 = vunpack.c.l.b16 %v745
    %v3505 = vunpack.c.h.b16 %v745
    %v3506 = vunpack.c.l.b16 %v746
    %v3507 = vunpack.c.h.b16 %v746
    %v3508 = vunpack.c.l.b16 %v747
    %v3509 = vunpack.c.h.b16 %v747
    %v3510 = vunpack.c.l.b16 %v748
    %v3511 = vunpack.c.h.b16 %v748
    %v3512 = vunpack.c.l.b16 %v749
    %v3513 = vunpack.c.h.b16 %v749
    %v3514 = vunpack.c.l.b16 %v750
    %v3515 = vunpack.c.h.b16 %v750
    %v3516 = vunpack.c.l.b16 %v751
    %v3517 = vunpack.c.h.b16 %v751
    %v3518 = vunpack.c.l.b16 %v752
    %v3519 = vunpack.c.h.b16 %v752
    %v3520 = vunpack.c.l.b16 %v753
    %v3521 = vunpack.c.h.b16 %v753
    %v3522 = vunpack.c.l.b16 %v754
    %v3523 = vunpack.c.h.b16 %v754
    %v3524 = vunpack.c.l.b16 %v755
    %v3525 = vunpack.c.h.b16 %v755
    %v3526 = vunpack.c.l.b16 %v756
    %v3527 = vunpack.c.h.b16 %v756
    %v3528 = vunpack.c.l.b16 %v757
    %v3529 = vunpack.c.h.b16 %v757
    %v3530 = vunpack.c.l.b16 %v758
    %v3531 = vunpack.c.h.b16 %v758
    %v3532 = vunpack.c.l.b16 %v759
    %v3533 = vunpack.c.h.b16 %v759
    %v3534 = vunpack.c.l.b16 %v760
    %v3535 = vunpack.c.h.b16 %v760
    %v3536 = vunpack.c.l.b16 %v761
    %v3537 = vunpack.c.h.b16 %v761
    %v3538 = vunpack.c.l.b16 %v762
    %v3539 = vunpack.c.h.b16 %v762
    %v3540 = vunpack.c.l.b16 %v763
    %v3541 = vunpack.c.h.b16 %v763
    %v3542 = vunpack.c.l.b16 %v764
    %v3543 = vunpack.c.h.b16 %v764
    %v3544 = vunpack.c.l.b16 %v765
    %v3545 = vunpack.c.h.b16 %v765
    %v3546 = vunpack.c.l.b16 %v766
    %v3547 = vunpack.c.h.b16 %v766
    %v3548 = vunpack.c.l.b16 %v767
    %v3549 = vunpack.c.h.b16 %v767
    %v3550 = vunpack.c.l.b16 %v768
    %v3551 = vunpack.c.h.b16 %v768
    %v3552 = vunpack.c.l.b16 %v769
    %v3553 = vunpack.c.h.b16 %v769
    %v3554 = vunpack.c.l.b16 %v770
    %v3555 = vunpack.c.h.b16 %v770
    %v3556 = vunpack.c.l.b16 %v771
    %v3557 = vunpack.c.h.b16 %v771
    %v3558 = vunpack.c.l.b16 %v772
    %v3559 = vunpack.c.h.b16 %v772
    %v3560 = vunpack.c.l.b16 %v773
    %v3561 = vunpack.c.h.b16 %v773
    %v3562 = vunpack.c.l.b16 %v774
    %v3563 = vunpack.c.h.b16 %v774
    %v3564 = vunpack.c.l.b16 %v775
    %v3565 = vunpack.c.h.b16 %v775
    %v3566 = vunpack.c.l.b16 %v776
    %v3567 = vunpack.c.h.b16 %v776
    %v3568 = vunpack.c.l.b16 %v777
    %v3569 = vunpack.c.h.b16 %v777
    %v3570 = vunpack.c.l.b16 %v778
    %v3571 = vunpack.c.h.b16 %v778
    %v3572 = vunpack.c.l.b16 %v779
    %v3573 = vunpack.c.h.b16 %v779
    %v3574 = vunpack.c.l.b16 %v780
    %v3575 = vunpack.c.h.b16 %v780
    %v3576 = vunpack.c.l.b16 %v781
    %v3577 = vunpack.c.h.b16 %v781
    %v3578 = vunpack.c.l.b16 %v782
    %v3579 = vunpack.c.h.b16 %v782
    %v3580 = vunpack.c.l.b16 %v783
    %v3581 = vunpack.c.h.b16 %v783
    %v3582 = vunpack.c.l.b16 %v784
    %v3583 = vunpack.c.h.b16 %v784
    %v3584 = vunpack.c.l.b16 %v785
    %v3585 = vunpack.c.h.b16 %v785
    %v3586 = vunpack.c.l.b16 %v786
    %v3587 = vunpack.c.h.b16 %v786
    %v3588 = vunpack.c.l.b16 %v787
    %v3589 = vunpack.c.h.b16 %v787
    %v3590 = vunpack.c.l.b16 %v788
    %v3591 = vunpack.c.h.b16 %v788
    %v3592 = vunpack.c.l.b16 %v789
    %v3593 = vunpack.c.h.b16 %v789
    %v3594 = vunpack.c.l.b16 %v790
    %v3595 = vunpack.c.h.b16 %v790
    %v3596 = vunpack.c.l.b16 %v791
    %v3597 = vunpack.c.h.b16 %v791
    %v3598 = vunpack.c.l.b16 %v792
    %v3599 = vunpack.c.h.b16 %v792
    %v3600 = vunpack.c.l.b16 %v793
    %v3601 = vunpack.c.h.b16 %v793
    %v3602 = vunpack.c.l.b16 %v794
    %v3603 = vunpack.c.h.b16 %v794
    %v3604 = vunpack.c.l.b16 %v795
    %v3605 = vunpack.c.h.b16 %v795
    %v3606 = vunpack.c.l.b16 %v796
    %v3607 = vunpack.c.h.b16 %v796
    %v3608 = vunpack.c.l.b16 %v797
    %v3609 = vunpack.c.h.b16 %v797
    %v3610 = vunpack.c.l.b16 %v798
    %v3611 = vunpack.c.h.b16 %v798
    %v3612 = vunpack.c.l.b16 %v799
    %v3613 = vunpack.c.h.b16 %v799
    %v3614 = vunpack.c.l.b16 %v800
    %v3615 = vunpack.c.h.b16 %v800
    %v3616 = vunpack.c.l.b16 %v801
    %v3617 = vunpack.c.h.b16 %v801
    %v3618 = vunpack.c.l.b16 %v802
    %v3619 = vunpack.c.h.b16 %v802
    %v3620 = vunpack.c.l.b16 %v803
    %v3621 = vunpack.c.h.b16 %v803
    %v3622 = vunpack.c.l.b16 %v804
    %v3623 = vunpack.c.h.b16 %v804
    %v3624 = vunpack.c.l.b16 %v805
    %v3625 = vunpack.c.h.b16 %v805
    %v3626 = vunpack.c.l.b16 %v806
    %v3627 = vunpack.c.h.b16 %v806
    %v3628 = vunpack.c.l.b16 %v807
    %v3629 = vunpack.c.h.b16 %v807
    %v3630 = vunpack.c.l.b16 %v808
    %v3631 = vunpack.c.h.b16 %v808
    %v3632 = vunpack.c.l.b16 %v809
    %v3633 = vunpack.c.h.b16 %v809
    %v3634 = vunpack.c.l.b16 %v810
    %v3635 = vunpack.c.h.b16 %v810
    %v3636 = vunpack.c.l.b16 %v811
    %v3637 = vunpack.c.h.b16 %v811
    %v3638 = vunpack.c.l.b16 %v812
    %v3639 = vunpack.c.h.b16 %v812
    %v3640 = vunpack.c.l.b16 %v813
    %v3641 = vunpack.c.h.b16 %v813
    %v3642 = vunpack.c.l.b16 %v814
    %v3643 = vunpack.c.h.b16 %v814
    %v3644 = vunpack.c.l.b16 %v815
    %v3645 = vunpack.c.h.b16 %v815
    %v3646 = vunpack.c.l.b16 %v816
    %v3647 = vunpack.c.h.b16 %v816
    %v3648 = vunpack.c.l.b16 %v817
    %v3649 = vunpack.c.h.b16 %v817
    %v3650 = vunpack.c.l.b16 %v818
    %v3651 = vunpack.c.h.b16 %v818
    %v3652 = vunpack.c.l.b16 %v819
    %v3653 = vunpack.c.h.b16 %v819
    %v3654 = vunpack.c.l.b16 %v820
    %v3655 = vunpack.c.h.b16 %v820
    %v3656 = vunpack.c.l.b16 %v821
    %v3657 = vunpack.c.h.b16 %v821
    %v3658 = vunpack.c.l.b16 %v822
    %v3659 = vunpack.c.h.b16 %v822
    %v3660 = vunpack.c.l.b16 %v823
    %v3661 = vunpack.c.h.b16 %v823
    %v3662 = vunpack.c.l.b16 %v824
    %v3663 = vunpack.c.h.b16 %v824
    %v3664 = vunpack.c.l.b16 %v825
    %v3665 = vunpack.c.h.b16 %v825
    %v3666 = vunpack.c.l.b16 %v826
    %v3667 = vunpack.c.h.b16 %v826
    %v3668 = vunpack.c.l.b16 %v827
    %v3669 = vunpack.c.h.b16 %v827
    %v3670 = vunpack.c.l.b16 %v828
    %v3671 = vunpack.c.h.b16 %v828
    %v3672 = vunpack.c.l.b16 %v829
    %v3673 = vunpack.c.h.b16 %v829
    %v3674 = vunpack.c.l.b16 %v830
    %v3675 = vunpack.c.h.b16 %v830
    %v3676 = vunpack.c.l.b16 %v831
    %v3677 = vunpack.c.h.b16 %v831
    %v3678 = vunpack.c.l.b16 %v832
    %v3679 = vunpack.c.h.b16 %v832
    %v3680 = vunpack.c.l.b16 %v833
    %v3681 = vunpack.c.h.b16 %v833
    %v3682 = vunpack.c.l.b16 %v834
    %v3683 = vunpack.c.h.b16 %v834
    %v3684 = vpack.c.b16 %v3176, %v3172
    %v3685 = vpack.c.b16 %v3177, %v3173
    %v3686 = vpack.c.b16 %v3178, %v3174
    %v3687 = vpack.c.b16 %v3179, %v3175
    %v3688 = vpack.c.b16 %v3184, %v3180
    %v3689 = vpack.c.b16 %v3185, %v3181
    %v3690 = vpack.c.b16 %v3186, %v3182
    %v3691 = vpack.c.b16 %v3187, %v3183
    %v3692 = vpack.c.b16 %v3192, %v3188
    %v3693 = vpack.c.b16 %v3193, %v3189
    %v3694 = vpack.c.b16 %v3194, %v3190
    %v3695 = vpack.c.b16 %v3195, %v3191
    %v3696 = vpack.c.b16 %v3200, %v3196
    %v3697 = vpack.c.b16 %v3201, %v3197
    %v3698 = vpack.c.b16 %v3202, %v3198
    %v3699 = vpack.c.b16 %v3203, %v3199
    %v3700 = vpack.c.b16 %v3208, %v3204
    %v3701 = vpack.c.b16 %v3209, %v3205
    %v3702 = vpack.c.b16 %v3210, %v3206
    %v3703 = vpack.c.b16 %v3211, %v3207
    %v3704 = vpack.c.b16 %v3216, %v3212
    %v3705 = vpack.c.b16 %v3217, %v3213
    %v3706 = vpack.c.b16 %v3218, %v3214
    %v3707 = vpack.c.b16 %v3219, %v3215
    %v3708 = vpack.c.b16 %v3224, %v3220
    %v3709 = vpack.c.b16 %v3225, %v3221
    %v3710 = vpack.c.b16 %v3226, %v3222
    %v3711 = vpack.c.b16 %v3227, %v3223
    %v3712 = vpack.c.b16 %v3232, %v3228
    %v3713 = vpack.c.b16 %v3233, %v3229
    %v3714 = vpack.c.b16 %v3234, %v3230
    %v3715 = vpack.c.b16 %v3235, %v3231
    %v3716 = vpack.c.b16 %v3240, %v3236
    %v3717 = vpack.c.b16 %v3241, %v3237
    %v3718 = vpack.c.b16 %v3242, %v3238
    %v3719 = vpack.c.b16 %v3243, %v3239
    %v3720 = vpack.c.b16 %v3248, %v3244
    %v3721 = vpack.c.b16 %v3249, %v3245
    %v3722 = vpack.c.b16 %v3250, %v3246
    %v3723 = vpack.c.b16 %v3251, %v3247
    %v3724 = vpack.c.b16 %v3256, %v3252
    %v3725 = vpack.c.b16 %v3257, %v3253
    %v3726 = vpack.c.b16 %v3258, %v3254
    %v3727 = vpack.c.b16 %v3259, %v3255
    %v3728 = vpack.c.b16 %v3264, %v3260
    %v3729 = vpack.c.b16 %v3265, %v3261
    %v3730 = vpack.c.b16 %v3266, %v3262
    %v3731 = vpack.c.b16 %v3267, %v3263
    %v3732 = vpack.c.b16 %v3272, %v3268
    %v3733 = vpack.c.b16 %v3273, %v3269
    %v3734 = vpack.c.b16 %v3274, %v3270
    %v3735 = vpack.c.b16 %v3275, %v3271
    %v3736 = vpack.c.b16 %v3280, %v3276
    %v3737 = vpack.c.b16 %v3281, %v3277
    %v3738 = vpack.c.b16 %v3282, %v3278
    %v3739 = vpack.c.b16 %v3283, %v3279
    %v3740 = vpack.c.b16 %v3288, %v3284
    %v3741 = vpack.c.b16 %v3289, %v3285
    %v3742 = vpack.c.b16 %v3290, %v3286
    %v3743 = vpack.c.b16 %v3291, %v3287
    %v3744 = vpack.c.b16 %v3296, %v3292
    %v3745 = vpack.c.b16 %v3297, %v3293
    %v3746 = vpack.c.b16 %v3298, %v3294
    %v3747 = vpack.c.b16 %v3299, %v3295
    %v3748 = vpack.c.b16 %v3304, %v3300
    %v3749 = vpack.c.b16 %v3305, %v3301
    %v3750 = vpack.c.b16 %v3306, %v3302
    %v3751 = vpack.c.b16 %v3307, %v3303
    %v3752 = vpack.c.b16 %v3312, %v3308
    %v3753 = vpack.c.b16 %v3313, %v3309
    %v3754 = vpack.c.b16 %v3314, %v3310
    %v3755 = vpack.c.b16 %v3315, %v3311
    %v3756 = vpack.c.b16 %v3320, %v3316
    %v3757 = vpack.c.b16 %v3321, %v3317
    %v3758 = vpack.c.b16 %v3322, %v3318
    %v3759 = vpack.c.b16 %v3323, %v3319
    %v3760 = vpack.c.b16 %v3328, %v3324
    %v3761 = vpack.c.b16 %v3329, %v3325
    %v3762 = vpack.c.b16 %v3330, %v3326
    %v3763 = vpack.c.b16 %v3331, %v3327
    %v3764 = vpack.c.b16 %v3336, %v3332
    %v3765 = vpack.c.b16 %v3337, %v3333
    %v3766 = vpack.c.b16 %v3338, %v3334
    %v3767 = vpack.c.b16 %v3339, %v3335
    %v3768 = vpack.c.b16 %v3344, %v3340
    %v3769 = vpack.c.b16 %v3345, %v3341
    %v3770 = vpack.c.b16 %v3346, %v3342
    %v3771 = vpack.c.b16 %v3347, %v3343
    %v3772 = vpack.c.b16 %v3352, %v3348
    %v3773 = vpack.c.b16 %v3353, %v3349
    %v3774 = vpack.c.b16 %v3354, %v3350
    %v3775 = vpack.c.b16 %v3355, %v3351
    %v3776 = vpack.c.b16 %v3360, %v3356
    %v3777 = vpack.c.b16 %v3361, %v3357
    %v3778 = vpack.c.b16 %v3362, %v3358
    %v3779 = vpack.c.b16 %v3363, %v3359
    %v3780 = vpack.c.b16 %v3368, %v3364
    %v3781 = vpack.c.b16 %v3369, %v3365
    %v3782 = vpack.c.b16 %v3370, %v3366
    %v3783 = vpack.c.b16 %v3371, %v3367
    %v3784 = vpack.c.b16 %v3376, %v3372
    %v3785 = vpack.c.b16 %v3377, %v3373
    %v3786 = vpack.c.b16 %v3378, %v3374
    %v3787 = vpack.c.b16 %v3379, %v3375
    %v3788 = vpack.c.b16 %v3384, %v3380
    %v3789 = vpack.c.b16 %v3385, %v3381
    %v3790 = vpack.c.b16 %v3386, %v3382
    %v3791 = vpack.c.b16 %v3387, %v3383
    %v3792 = vpack.c.b16 %v3392, %v3388
    %v3793 = vpack.c.b16 %v3393, %v3389
    %v3794 = vpack.c.b16 %v3394, %v3390
    %v3795 = vpack.c.b16 %v3395, %v3391
    %v3796 = vpack.c.b16 %v3400, %v3396
    %v3797 = vpack.c.b16 %v3401, %v3397
    %v3798 = vpack.c.b16 %v3402, %v3398
    %v3799 = vpack.c.b16 %v3403, %v3399
    %v3800 = vpack.c.b16 %v3408, %v3404
    %v3801 = vpack.c.b16 %v3409, %v3405
    %v3802 = vpack.c.b16 %v3410, %v3406
    %v3803 = vpack.c.b16 %v3411, %v3407
    %v3804 = vpack.c.b16 %v3416, %v3412
    %v3805 = vpack.c.b16 %v3417, %v3413
    %v3806 = vpack.c.b16 %v3418, %v3414
    %v3807 = vpack.c.b16 %v3419, %v3415
    %v3808 = vpack.c.b16 %v3424, %v3420
    %v3809 = vpack.c.b16 %v3425, %v3421
    %v3810 = vpack.c.b16 %v3426, %v3422
    %v3811 = vpack.c.b16 %v3427, %v3423
    %v3812 = vpack.c.b16 %v3432, %v3428
    %v3813 = vpack.c.b16 %v3433, %v3429
    %v3814 = vpack.c.b16 %v3434, %v3430
    %v3815 = vpack.c.b16 %v3435, %v3431
    %v3816 = vpack.c.b16 %v3440, %v3436
    %v3817 = vpack.c.b16 %v3441, %v3437
    %v3818 = vpack.c.b16 %v3442, %v3438
    %v3819 = vpack.c.b16 %v3443, %v3439
    %v3820 = vpack.c.b16 %v3448, %v3444
    %v3821 = vpack.c.b16 %v3449, %v3445
    %v3822 = vpack.c.b16 %v3450, %v3446
    %v3823 = vpack.c.b16 %v3451, %v3447
    %v3824 = vpack.c.b16 %v3456, %v3452
    %v3825 = vpack.c.b16 %v3457, %v3453
    %v3826 = vpack.c.b16 %v3458, %v3454
    %v3827 = vpack.c.b16 %v3459, %v3455
    %v3828 = vpack.c.b16 %v3464, %v3460
    %v3829 = vpack.c.b16 %v3465, %v3461
    %v3830 = vpack.c.b16 %v3466, %v3462
    %v3831 = vpack.c.b16 %v3467, %v3463
    %v3832 = vpack.c.b16 %v3472, %v3468
    %v3833 = vpack.c.b16 %v3473, %v3469
    %v3834 = vpack.c.b16 %v3474, %v3470
    %v3835 = vpack.c.b16 %v3475, %v3471
    %v3836 = vpack.c.b16 %v3480, %v3476
    %v3837 = vpack.c.b16 %v3481, %v3477
    %v3838 = vpack.c.b16 %v3482, %v3478
    %v3839 = vpack.c.b16 %v3483, %v3479
    %v3840 = vpack.c.b16 %v3488, %v3484
    %v3841 = vpack.c.b16 %v3489, %v3485
    %v3842 = vpack.c.b16 %v3490, %v3486
    %v3843 = vpack.c.b16 %v3491, %v3487
    %v3844 = vpack.c.b16 %v3496, %v3492
    %v3845 = vpack.c.b16 %v3497, %v3493
    %v3846 = vpack.c.b16 %v3498, %v3494
    %v3847 = vpack.c.b16 %v3499, %v3495
    %v3848 = vpack.c.b16 %v3504, %v3500
    %v3849 = vpack.c.b16 %v3505, %v3501
    %v3850 = vpack.c.b16 %v3506, %v3502
    %v3851 = vpack.c.b16 %v3507, %v3503
    %v3852 = vpack.c.b16 %v3512, %v3508
    %v3853 = vpack.c.b16 %v3513, %v3509
    %v3854 = vpack.c.b16 %v3514, %v3510
    %v3855 = vpack.c.b16 %v3515, %v3511
    %v3856 = vpack.c.b16 %v3520, %v3516
    %v3857 = vpack.c.b16 %v3521, %v3517
    %v3858 = vpack.c.b16 %v3522, %v3518
    %v3859 = vpack.c.b16 %v3523, %v3519
    %v3860 = vpack.c.b16 %v3528, %v3524
    %v3861 = vpack.c.b16 %v3529, %v3525
    %v3862 = vpack.c.b16 %v3530, %v3526
    %v3863 = vpack.c.b16 %v3531, %v3527
    %v3864 = vpack.c.b16 %v3536, %v3532
    %v3865 = vpack.c.b16 %v3537, %v3533
    %v3866 = vpack.c.b16 %v3538, %v3534
    %v3867 = vpack.c.b16 %v3539, %v3535
    %v3868 = vpack.c.b16 %v3544, %v3540
    %v3869 = vpack.c.b16 %v3545, %v3541
    %v3870 = vpack.c.b16 %v3546, %v3542
    %v3871 = vpack.c.b16 %v3547, %v3543
    %v3872 = vpack.c.b16 %v3552, %v3548
    %v3873 = vpack.c.b16 %v3553, %v3549
    %v3874 = vpack.c.b16 %v3554, %v3550
    %v3875 = vpack.c.b16 %v3555, %v3551
    %v3876 = vpack.c.b16 %v3560, %v3556
    %v3877 = vpack.c.b16 %v3561, %v3557
    %v3878 = vpack.c.b16 %v3562, %v3558
    %v3879 = vpack.c.b16 %v3563, %v3559
    %v3880 = vpack.c.b16 %v3568, %v3564
    %v3881 = vpack.c.b16 %v3569, %v3565
    %v3882 = vpack.c.b16 %v3570, %v3566
    %v3883 = vpack.c.b16 %v3571, %v3567
    %v3884 = vpack.c.b16 %v3576, %v3572
    %v3885 = vpack.c.b16 %v3577, %v3573
    %v3886 = vpack.c.b16 %v3578, %v3574
    %v3887 = vpack.c.b16 %v3579, %v3575
    %v3888 = vpack.c.b16 %v3584, %v3580
    %v3889 = vpack.c.b16 %v3585, %v3581
    %v3890 = vpack.c.b16 %v3586, %v3582
    %v3891 = vpack.c.b16 %v3587, %v3583
    %v3892 = vpack.c.b16 %v3592, %v3588
    %v3893 = vpack.c.b16 %v3593, %v3589
    %v3894 = vpack.c.b16 %v3594, %v3590
    %v3895 = vpack.c.b16 %v3595, %v3591
    %v3896 = vpack.c.b16 %v3600, %v3596
    %v3897 = vpack.c.b16 %v3601, %v3597
    %v3898 = vpack.c.b16 %v3602, %v3598
    %v3899 = vpack.c.b16 %v3603, %v3599
    %v3900 = vpack.c.b16 %v3608, %v3604
    %v3901 = vpack.c.b16 %v3609, %v3605
    %v3902 = vpack.c.b16 %v3610, %v3606
    %v3903 = vpack.c.b16 %v3611, %v3607
    %v3904 = vpack.c.b16 %v3616, %v3612
    %v3905 = vpack.c.b16 %v3617, %v3613
    %v3906 = vpack.c.b16 %v3618, %v3614
    %v3907 = vpack.c.b16 %v3619, %v3615
    %v3908 = vpack.c.b16 %v3624, %v3620
    %v3909 = vpack.c.b16 %v3625, %v3621
    %v3910 = vpack.c.b16 %v3626, %v3622
    %v3911 = vpack.c.b16 %v3627, %v3623
    %v3912 = vpack.c.b16 %v3632, %v3628
    %v3913 = vpack.c.b16 %v3633, %v3629
    %v3914 = vpack.c.b16 %v3634, %v3630
    %v3915 = vpack.c.b16 %v3635, %v3631
    %v3916 = vpack.c.b16 %v3640, %v3636
    %v3917 = vpack.c.b16 %v3641, %v3637
    %v3918 = vpack.c.b16 %v3642, %v3638
    %v3919 = vpack.c.b16 %v3643, %v3639
    %v3920 = vpack.c.b16 %v3648, %v3644
    %v3921 = vpack.c.b16 %v3649, %v3645
    %v3922 = vpack.c.b16 %v3650, %v3646
    %v3923 = vpack.c.b16 %v3651, %v3647
    %v3924 = vpack.c.b16 %v3656, %v3652
    %v3925 = vpack.c.b16 %v3657, %v3653
    %v3926 = vpack.c.b16 %v3658, %v3654
    %v3927 = vpack.c.b16 %v3659, %v3655
    %v3928 = vpack.c.b16 %v3664, %v3660
    %v3929 = vpack.c.b16 %v3665, %v3661
    %v3930 = vpack.c.b16 %v3666, %v3662
    %v3931 = vpack.c.b16 %v3667, %v3663
    %v3932 = vpack.c.b16 %v3672, %v3668
    %v3933 = vpack.c.b16 %v3673, %v3669
    %v3934 = vpack.c.b16 %v3674, %v3670
    %v3935 = vpack.c.b16 %v3675, %v3671
    %v3936 = vpack.c.b16 %v3680, %v3676
    %v3937 = vpack.c.b16 %v3681, %v3677
    %v3938 = vpack.c.b16 %v3682, %v3678
    %v3939 = vpack.c.b16 %v3683, %v3679
    %4196 = vmatpush.bf16.msra.mxu0 %v3712
    %4197 = vmatpush.bf16.msra.mxu0 %v3708
    %4198 = vmatpush.bf16.msra.mxu0 %v3704
    %4199 = vmatpush.bf16.msra.mxu0 %v3700
    %4200 = vmatpush.bf16.msra.mxu0 %v3696
    %4201 = vmatpush.bf16.msra.mxu0 %v3692
    %4202 = vmatpush.bf16.msra.mxu0 %v3688
    %4203 = vmatpush.bf16.msra.mxu0 %v3684
    %4204 = vmatmul.bf16.gmra.mxu0 %v2900
    %v4205 = vpop.f32.mrf.mxu0
    %v4206 = vadd.f32 %v2545, %v4205
    %v4207 = vpop.f32.mrf.mxu0
    %4208 = vdwg.mxu0
    %4209 = vmatpush.bf16.msra.mxu0 %v3744
    %4210 = vmatpush.bf16.msra.mxu0 %v3740
    %4211 = vmatpush.bf16.msra.mxu0 %v3736
    %4212 = vmatpush.bf16.msra.mxu0 %v3732
    %4213 = vmatpush.bf16.msra.mxu0 %v3728
    %4214 = vmatpush.bf16.msra.mxu0 %v3724
    %4215 = vmatpush.bf16.msra.mxu0 %v3720
    %4216 = vmatpush.bf16.msra.mxu0 %v3716
    %4217 = vmatmul.bf16.gmra.mxu0 %v2901
    %v4218 = vpop.f32.mrf.mxu0
    %v4219 = vadd.f32 %v4206, %v4218
    %v4220 = vpop.f32.mrf.mxu0
    %4221 = vdwg.mxu0
    %4222 = vmatpush.bf16.msra.mxu0 %v3776
    %4223 = vmatpush.bf16.msra.mxu0 %v3772
    %4224 = vmatpush.bf16.msra.mxu0 %v3768
    %4225 = vmatpush.bf16.msra.mxu0 %v3764
    %4226 = vmatpush.bf16.msra.mxu0 %v3760
    %4227 = vmatpush.bf16.msra.mxu0 %v3756
    %4228 = vmatpush.bf16.msra.mxu0 %v3752
    %4229 = vmatpush.bf16.msra.mxu0 %v3748
    %4230 = vmatmul.bf16.gmra.mxu0 %v2902
    %v4231 = vpop.f32.mrf.mxu0
    %v4232 = vadd.f32 %v4219, %v4231
    %v4233 = vpop.f32.mrf.mxu0
    %4234 = vdwg.mxu0
    %4235 = vmatpush.bf16.msra.mxu0 %v3808
    %4236 = vmatpush.bf16.msra.mxu0 %v3804
    %4237 = vmatpush.bf16.msra.mxu0 %v3800
    %4238 = vmatpush.bf16.msra.mxu0 %v3796
    %4239 = vmatpush.bf16.msra.mxu0 %v3792
    %4240 = vmatpush.bf16.msra.mxu0 %v3788
    %4241 = vmatpush.bf16.msra.mxu0 %v3784
    %4242 = vmatpush.bf16.msra.mxu0 %v3780
    %4243 = vmatmul.bf16.gmra.mxu0 %v2903
    %v4244 = vpop.f32.mrf.mxu0
    %v4245 = vadd.f32 %v4232, %v4244
    %v4246 = vpop.f32.mrf.mxu0
    %4247 = vdwg.mxu0
    %4248 = vmatpush.bf16.msra.mxu0 %v3840
    %4249 = vmatpush.bf16.msra.mxu0 %v3836
    %4250 = vmatpush.bf16.msra.mxu0 %v3832
    %4251 = vmatpush.bf16.msra.mxu0 %v3828
    %4252 = vmatpush.bf16.msra.mxu0 %v3824
    %4253 = vmatpush.bf16.msra.mxu0 %v3820
    %4254 = vmatpush.bf16.msra.mxu0 %v3816
    %4255 = vmatpush.bf16.msra.mxu0 %v3812
    %4256 = vmatmul.bf16.gmra.mxu0 %v2904
    %v4257 = vpop.f32.mrf.mxu0
    %v4258 = vadd.f32 %v4245, %v4257
    %v4259 = vpop.f32.mrf.mxu0
    %4260 = vdwg.mxu0
    %4261 = vmatpush.bf16.msra.mxu0 %v3872
    %4262 = vmatpush.bf16.msra.mxu0 %v3868
    %4263 = vmatpush.bf16.msra.mxu0 %v3864
    %4264 = vmatpush.bf16.msra.mxu0 %v3860
    %4265 = vmatpush.bf16.msra.mxu0 %v3856
    %4266 = vmatpush.bf16.msra.mxu0 %v3852
    %4267 = vmatpush.bf16.msra.mxu0 %v3848
    %4268 = vmatpush.bf16.msra.mxu0 %v3844
    %4269 = vmatmul.bf16.gmra.mxu0 %v2905
    %v4270 = vpop.f32.mrf.mxu0
    %v4271 = vadd.f32 %v4258, %v4270
    %v4272 = vpop.f32.mrf.mxu0
    %4273 = vdwg.mxu0
    %4274 = vmatpush.bf16.msra.mxu0 %v3904
    %4275 = vmatpush.bf16.msra.mxu0 %v3900
    %4276 = vmatpush.bf16.msra.mxu0 %v3896
    %4277 = vmatpush.bf16.msra.mxu0 %v3892
    %4278 = vmatpush.bf16.msra.mxu0 %v3888
    %4279 = vmatpush.bf16.msra.mxu0 %v3884
    %4280 = vmatpush.bf16.msra.mxu0 %v3880
    %4281 = vmatpush.bf16.msra.mxu0 %v3876
    %4282 = vmatmul.bf16.gmra.mxu0 %v2906
    %v4283 = vpop.f32.mrf.mxu0
    %v4284 = vadd.f32 %v4271, %v4283
    %v4285 = vpop.f32.mrf.mxu0
    %4286 = vdwg.mxu0
    %4287 = vmatpush.bf16.msra.mxu0 %v3936
    %4288 = vmatpush.bf16.msra.mxu0 %v3932
    %4289 = vmatpush.bf16.msra.mxu0 %v3928
    %4290 = vmatpush.bf16.msra.mxu0 %v3924
    %4291 = vmatpush.bf16.msra.mxu0 %v3920
    %4292 = vmatpush.bf16.msra.mxu0 %v3916
    %4293 = vmatpush.bf16.msra.mxu0 %v3912
    %4294 = vmatpush.bf16.msra.mxu0 %v3908
    %4295 = vmatmul.bf16.gmra.mxu0 %v2907
    %v4296 = vpop.f32.mrf.mxu0
    %v4297 = vadd.f32 %v4284, %v4296
    %v4298 = vpop.f32.mrf.mxu0
    %4299 = vdwg.mxu0
    %4300 = vmatpush.bf16.msra.mxu0 %v3713
    %4301 = vmatpush.bf16.msra.mxu0 %v3709
    %4302 = vmatpush.bf16.msra.mxu0 %v3705
    %4303 = vmatpush.bf16.msra.mxu0 %v3701
    %4304 = vmatpush.bf16.msra.mxu0 %v3697
    %4305 = vmatpush.bf16.msra.mxu0 %v3693
    %4306 = vmatpush.bf16.msra.mxu0 %v3689
    %4307 = vmatpush.bf16.msra.mxu0 %v3685
    %4308 = vmatmul.bf16.gmra.mxu0 %v2900
    %v4309 = vpop.f32.mrf.mxu0
    %v4310 = vadd.f32 %v2649, %v4309
    %v4311 = vpop.f32.mrf.mxu0
    %4312 = vdwg.mxu0
    %4313 = vmatpush.bf16.msra.mxu0 %v3745
    %4314 = vmatpush.bf16.msra.mxu0 %v3741
    %4315 = vmatpush.bf16.msra.mxu0 %v3737
    %4316 = vmatpush.bf16.msra.mxu0 %v3733
    %4317 = vmatpush.bf16.msra.mxu0 %v3729
    %4318 = vmatpush.bf16.msra.mxu0 %v3725
    %4319 = vmatpush.bf16.msra.mxu0 %v3721
    %4320 = vmatpush.bf16.msra.mxu0 %v3717
    %4321 = vmatmul.bf16.gmra.mxu0 %v2901
    %v4322 = vpop.f32.mrf.mxu0
    %v4323 = vadd.f32 %v4310, %v4322
    %v4324 = vpop.f32.mrf.mxu0
    %4325 = vdwg.mxu0
    %4326 = vmatpush.bf16.msra.mxu0 %v3777
    %4327 = vmatpush.bf16.msra.mxu0 %v3773
    %4328 = vmatpush.bf16.msra.mxu0 %v3769
    %4329 = vmatpush.bf16.msra.mxu0 %v3765
    %4330 = vmatpush.bf16.msra.mxu0 %v3761
    %4331 = vmatpush.bf16.msra.mxu0 %v3757
    %4332 = vmatpush.bf16.msra.mxu0 %v3753
    %4333 = vmatpush.bf16.msra.mxu0 %v3749
    %4334 = vmatmul.bf16.gmra.mxu0 %v2902
    %v4335 = vpop.f32.mrf.mxu0
    %v4336 = vadd.f32 %v4323, %v4335
    %v4337 = vpop.f32.mrf.mxu0
    %4338 = vdwg.mxu0
    %4339 = vmatpush.bf16.msra.mxu0 %v3809
    %4340 = vmatpush.bf16.msra.mxu0 %v3805
    %4341 = vmatpush.bf16.msra.mxu0 %v3801
    %4342 = vmatpush.bf16.msra.mxu0 %v3797
    %4343 = vmatpush.bf16.msra.mxu0 %v3793
    %4344 = vmatpush.bf16.msra.mxu0 %v3789
    %4345 = vmatpush.bf16.msra.mxu0 %v3785
    %4346 = vmatpush.bf16.msra.mxu0 %v3781
    %4347 = vmatmul.bf16.gmra.mxu0 %v2903
    %v4348 = vpop.f32.mrf.mxu0
    %v4349 = vadd.f32 %v4336, %v4348
    %v4350 = vpop.f32.mrf.mxu0
    %4351 = vdwg.mxu0
    %4352 = vmatpush.bf16.msra.mxu0 %v3841
    %4353 = vmatpush.bf16.msra.mxu0 %v3837
    %4354 = vmatpush.bf16.msra.mxu0 %v3833
    %4355 = vmatpush.bf16.msra.mxu0 %v3829
    %4356 = vmatpush.bf16.msra.mxu0 %v3825
    %4357 = vmatpush.bf16.msra.mxu0 %v3821
    %4358 = vmatpush.bf16.msra.mxu0 %v3817
    %4359 = vmatpush.bf16.msra.mxu0 %v3813
    %4360 = vmatmul.bf16.gmra.mxu0 %v2904
    %v4361 = vpop.f32.mrf.mxu0
    %v4362 = vadd.f32 %v4349, %v4361
    %v4363 = vpop.f32.mrf.mxu0
    %4364 = vdwg.mxu0
    %4365 = vmatpush.bf16.msra.mxu0 %v3873
    %4366 = vmatpush.bf16.msra.mxu0 %v3869
    %4367 = vmatpush.bf16.msra.mxu0 %v3865
    %4368 = vmatpush.bf16.msra.mxu0 %v3861
    %4369 = vmatpush.bf16.msra.mxu0 %v3857
    %4370 = vmatpush.bf16.msra.mxu0 %v3853
    %4371 = vmatpush.bf16.msra.mxu0 %v3849
    %4372 = vmatpush.bf16.msra.mxu0 %v3845
    %4373 = vmatmul.bf16.gmra.mxu0 %v2905
    %v4374 = vpop.f32.mrf.mxu0
    %v4375 = vadd.f32 %v4362, %v4374
    %v4376 = vpop.f32.mrf.mxu0
    %4377 = vdwg.mxu0
    %4378 = vmatpush.bf16.msra.mxu0 %v3905
    %4379 = vmatpush.bf16.msra.mxu0 %v3901
    %4380 = vmatpush.bf16.msra.mxu0 %v3897
    %4381 = vmatpush.bf16.msra.mxu0 %v3893
    %4382 = vmatpush.bf16.msra.mxu0 %v3889
    %4383 = vmatpush.bf16.msra.mxu0 %v3885
    %4384 = vmatpush.bf16.msra.mxu0 %v3881
    %4385 = vmatpush.bf16.msra.mxu0 %v3877
    %4386 = vmatmul.bf16.gmra.mxu0 %v2906
    %v4387 = vpop.f32.mrf.mxu0
    %v4388 = vadd.f32 %v4375, %v4387
    %v4389 = vpop.f32.mrf.mxu0
    %4390 = vdwg.mxu0
    %4391 = vmatpush.bf16.msra.mxu0 %v3937
    %4392 = vmatpush.bf16.msra.mxu0 %v3933
    %4393 = vmatpush.bf16.msra.mxu0 %v3929
    %4394 = vmatpush.bf16.msra.mxu0 %v3925
    %4395 = vmatpush.bf16.msra.mxu0 %v3921
    %4396 = vmatpush.bf16.msra.mxu0 %v3917
    %4397 = vmatpush.bf16.msra.mxu0 %v3913
    %4398 = vmatpush.bf16.msra.mxu0 %v3909
    %4399 = vmatmul.bf16.gmra.mxu0 %v2907
    %v4400 = vpop.f32.mrf.mxu0
    %v4401 = vadd.f32 %v4388, %v4400
    %v4402 = vpop.f32.mrf.mxu0
    %4403 = vdwg.mxu0
    %4404 = vmatpush.bf16.msra.mxu0 %v3714
    %4405 = vmatpush.bf16.msra.mxu0 %v3710
    %4406 = vmatpush.bf16.msra.mxu0 %v3706
    %4407 = vmatpush.bf16.msra.mxu0 %v3702
    %4408 = vmatpush.bf16.msra.mxu0 %v3698
    %4409 = vmatpush.bf16.msra.mxu0 %v3694
    %4410 = vmatpush.bf16.msra.mxu0 %v3690
    %4411 = vmatpush.bf16.msra.mxu0 %v3686
    %4412 = vmatmul.bf16.gmra.mxu0 %v2900
    %v4413 = vpop.f32.mrf.mxu0
    %v4414 = vadd.f32 %v2753, %v4413
    %v4415 = vpop.f32.mrf.mxu0
    %4416 = vdwg.mxu0
    %4417 = vmatpush.bf16.msra.mxu0 %v3746
    %4418 = vmatpush.bf16.msra.mxu0 %v3742
    %4419 = vmatpush.bf16.msra.mxu0 %v3738
    %4420 = vmatpush.bf16.msra.mxu0 %v3734
    %4421 = vmatpush.bf16.msra.mxu0 %v3730
    %4422 = vmatpush.bf16.msra.mxu0 %v3726
    %4423 = vmatpush.bf16.msra.mxu0 %v3722
    %4424 = vmatpush.bf16.msra.mxu0 %v3718
    %4425 = vmatmul.bf16.gmra.mxu0 %v2901
    %v4426 = vpop.f32.mrf.mxu0
    %v4427 = vadd.f32 %v4414, %v4426
    %v4428 = vpop.f32.mrf.mxu0
    %4429 = vdwg.mxu0
    %4430 = vmatpush.bf16.msra.mxu0 %v3778
    %4431 = vmatpush.bf16.msra.mxu0 %v3774
    %4432 = vmatpush.bf16.msra.mxu0 %v3770
    %4433 = vmatpush.bf16.msra.mxu0 %v3766
    %4434 = vmatpush.bf16.msra.mxu0 %v3762
    %4435 = vmatpush.bf16.msra.mxu0 %v3758
    %4436 = vmatpush.bf16.msra.mxu0 %v3754
    %4437 = vmatpush.bf16.msra.mxu0 %v3750
    %4438 = vmatmul.bf16.gmra.mxu0 %v2902
    %v4439 = vpop.f32.mrf.mxu0
    %v4440 = vadd.f32 %v4427, %v4439
    %v4441 = vpop.f32.mrf.mxu0
    %4442 = vdwg.mxu0
    %4443 = vmatpush.bf16.msra.mxu0 %v3810
    %4444 = vmatpush.bf16.msra.mxu0 %v3806
    %4445 = vmatpush.bf16.msra.mxu0 %v3802
    %4446 = vmatpush.bf16.msra.mxu0 %v3798
    %4447 = vmatpush.bf16.msra.mxu0 %v3794
    %4448 = vmatpush.bf16.msra.mxu0 %v3790
    %4449 = vmatpush.bf16.msra.mxu0 %v3786
    %4450 = vmatpush.bf16.msra.mxu0 %v3782
    %4451 = vmatmul.bf16.gmra.mxu0 %v2903
    %v4452 = vpop.f32.mrf.mxu0
    %v4453 = vadd.f32 %v4440, %v4452
    %v4454 = vpop.f32.mrf.mxu0
    %4455 = vdwg.mxu0
    %4456 = vmatpush.bf16.msra.mxu0 %v3842
    %4457 = vmatpush.bf16.msra.mxu0 %v3838
    %4458 = vmatpush.bf16.msra.mxu0 %v3834
    %4459 = vmatpush.bf16.msra.mxu0 %v3830
    %4460 = vmatpush.bf16.msra.mxu0 %v3826
    %4461 = vmatpush.bf16.msra.mxu0 %v3822
    %4462 = vmatpush.bf16.msra.mxu0 %v3818
    %4463 = vmatpush.bf16.msra.mxu0 %v3814
    %4464 = vmatmul.bf16.gmra.mxu0 %v2904
    %v4465 = vpop.f32.mrf.mxu0
    %v4466 = vadd.f32 %v4453, %v4465
    %v4467 = vpop.f32.mrf.mxu0
    %4468 = vdwg.mxu0
    %4469 = vmatpush.bf16.msra.mxu0 %v3874
    %4470 = vmatpush.bf16.msra.mxu0 %v3870
    %4471 = vmatpush.bf16.msra.mxu0 %v3866
    %4472 = vmatpush.bf16.msra.mxu0 %v3862
    %4473 = vmatpush.bf16.msra.mxu0 %v3858
    %4474 = vmatpush.bf16.msra.mxu0 %v3854
    %4475 = vmatpush.bf16.msra.mxu0 %v3850
    %4476 = vmatpush.bf16.msra.mxu0 %v3846
    %4477 = vmatmul.bf16.gmra.mxu0 %v2905
    %v4478 = vpop.f32.mrf.mxu0
    %v4479 = vadd.f32 %v4466, %v4478
    %v4480 = vpop.f32.mrf.mxu0
    %4481 = vdwg.mxu0
    %4482 = vmatpush.bf16.msra.mxu0 %v3906
    %4483 = vmatpush.bf16.msra.mxu0 %v3902
    %4484 = vmatpush.bf16.msra.mxu0 %v3898
    %4485 = vmatpush.bf16.msra.mxu0 %v3894
    %4486 = vmatpush.bf16.msra.mxu0 %v3890
    %4487 = vmatpush.bf16.msra.mxu0 %v3886
    %4488 = vmatpush.bf16.msra.mxu0 %v3882
    %4489 = vmatpush.bf16.msra.mxu0 %v3878
    %4490 = vmatmul.bf16.gmra.mxu0 %v2906
    %v4491 = vpop.f32.mrf.mxu0
    %v4492 = vadd.f32 %v4479, %v4491
    %v4493 = vpop.f32.mrf.mxu0
    %4494 = vdwg.mxu0
    %4495 = vmatpush.bf16.msra.mxu0 %v3938
    %4496 = vmatpush.bf16.msra.mxu0 %v3934
    %4497 = vmatpush.bf16.msra.mxu0 %v3930
    %4498 = vmatpush.bf16.msra.mxu0 %v3926
    %4499 = vmatpush.bf16.msra.mxu0 %v3922
    %4500 = vmatpush.bf16.msra.mxu0 %v3918
    %4501 = vmatpush.bf16.msra.mxu0 %v3914
    %4502 = vmatpush.bf16.msra.mxu0 %v3910
    %4503 = vmatmul.bf16.gmra.mxu0 %v2907
    %v4504 = vpop.f32.mrf.mxu0
    %v4505 = vadd.f32 %v4492, %v4504
    %v4506 = vpop.f32.mrf.mxu0
    %4507 = vdwg.mxu0
    %4508 = vmatpush.bf16.msra.mxu0 %v3715
    %4509 = vmatpush.bf16.msra.mxu0 %v3711
    %4510 = vmatpush.bf16.msra.mxu0 %v3707
    %4511 = vmatpush.bf16.msra.mxu0 %v3703
    %4512 = vmatpush.bf16.msra.mxu0 %v3699
    %4513 = vmatpush.bf16.msra.mxu0 %v3695
    %4514 = vmatpush.bf16.msra.mxu0 %v3691
    %4515 = vmatpush.bf16.msra.mxu0 %v3687
    %4516 = vmatmul.bf16.gmra.mxu0 %v2900
    %v4517 = vpop.f32.mrf.mxu0
    %v4518 = vadd.f32 %v2857, %v4517
    %v4519 = vpop.f32.mrf.mxu0
    %4520 = vdwg.mxu0
    %4521 = vmatpush.bf16.msra.mxu0 %v3747
    %4522 = vmatpush.bf16.msra.mxu0 %v3743
    %4523 = vmatpush.bf16.msra.mxu0 %v3739
    %4524 = vmatpush.bf16.msra.mxu0 %v3735
    %4525 = vmatpush.bf16.msra.mxu0 %v3731
    %4526 = vmatpush.bf16.msra.mxu0 %v3727
    %4527 = vmatpush.bf16.msra.mxu0 %v3723
    %4528 = vmatpush.bf16.msra.mxu0 %v3719
    %4529 = vmatmul.bf16.gmra.mxu0 %v2901
    %v4530 = vpop.f32.mrf.mxu0
    %v4531 = vadd.f32 %v4518, %v4530
    %v4532 = vpop.f32.mrf.mxu0
    %4533 = vdwg.mxu0
    %4534 = vmatpush.bf16.msra.mxu0 %v3779
    %4535 = vmatpush.bf16.msra.mxu0 %v3775
    %4536 = vmatpush.bf16.msra.mxu0 %v3771
    %4537 = vmatpush.bf16.msra.mxu0 %v3767
    %4538 = vmatpush.bf16.msra.mxu0 %v3763
    %4539 = vmatpush.bf16.msra.mxu0 %v3759
    %4540 = vmatpush.bf16.msra.mxu0 %v3755
    %4541 = vmatpush.bf16.msra.mxu0 %v3751
    %4542 = vmatmul.bf16.gmra.mxu0 %v2902
    %v4543 = vpop.f32.mrf.mxu0
    %v4544 = vadd.f32 %v4531, %v4543
    %v4545 = vpop.f32.mrf.mxu0
    %4546 = vdwg.mxu0
    %4547 = vmatpush.bf16.msra.mxu0 %v3811
    %4548 = vmatpush.bf16.msra.mxu0 %v3807
    %4549 = vmatpush.bf16.msra.mxu0 %v3803
    %4550 = vmatpush.bf16.msra.mxu0 %v3799
    %4551 = vmatpush.bf16.msra.mxu0 %v3795
    %4552 = vmatpush.bf16.msra.mxu0 %v3791
    %4553 = vmatpush.bf16.msra.mxu0 %v3787
    %4554 = vmatpush.bf16.msra.mxu0 %v3783
    %4555 = vmatmul.bf16.gmra.mxu0 %v2903
    %v4556 = vpop.f32.mrf.mxu0
    %v4557 = vadd.f32 %v4544, %v4556
    %v4558 = vpop.f32.mrf.mxu0
    %4559 = vdwg.mxu0
    %4560 = vmatpush.bf16.msra.mxu0 %v3843
    %4561 = vmatpush.bf16.msra.mxu0 %v3839
    %4562 = vmatpush.bf16.msra.mxu0 %v3835
    %4563 = vmatpush.bf16.msra.mxu0 %v3831
    %4564 = vmatpush.bf16.msra.mxu0 %v3827
    %4565 = vmatpush.bf16.msra.mxu0 %v3823
    %4566 = vmatpush.bf16.msra.mxu0 %v3819
    %4567 = vmatpush.bf16.msra.mxu0 %v3815
    %4568 = vmatmul.bf16.gmra.mxu0 %v2904
    %v4569 = vpop.f32.mrf.mxu0
    %v4570 = vadd.f32 %v4557, %v4569
    %v4571 = vpop.f32.mrf.mxu0
    %4572 = vdwg.mxu0
    %4573 = vmatpush.bf16.msra.mxu0 %v3875
    %4574 = vmatpush.bf16.msra.mxu0 %v3871
    %4575 = vmatpush.bf16.msra.mxu0 %v3867
    %4576 = vmatpush.bf16.msra.mxu0 %v3863
    %4577 = vmatpush.bf16.msra.mxu0 %v3859
    %4578 = vmatpush.bf16.msra.mxu0 %v3855
    %4579 = vmatpush.bf16.msra.mxu0 %v3851
    %4580 = vmatpush.bf16.msra.mxu0 %v3847
    %4581 = vmatmul.bf16.gmra.mxu0 %v2905
    %v4582 = vpop.f32.mrf.mxu0
    %v4583 = vadd.f32 %v4570, %v4582
    %v4584 = vpop.f32.mrf.mxu0
    %4585 = vdwg.mxu0
    %4586 = vmatpush.bf16.msra.mxu0 %v3907
    %4587 = vmatpush.bf16.msra.mxu0 %v3903
    %4588 = vmatpush.bf16.msra.mxu0 %v3899
    %4589 = vmatpush.bf16.msra.mxu0 %v3895
    %4590 = vmatpush.bf16.msra.mxu0 %v3891
    %4591 = vmatpush.bf16.msra.mxu0 %v3887
    %4592 = vmatpush.bf16.msra.mxu0 %v3883
    %4593 = vmatpush.bf16.msra.mxu0 %v3879
    %4594 = vmatmul.bf16.gmra.mxu0 %v2906
    %v4595 = vpop.f32.mrf.mxu0
    %v4596 = vadd.f32 %v4583, %v4595
    %v4597 = vpop.f32.mrf.mxu0
    %4598 = vdwg.mxu0
    %4599 = vmatpush.bf16.msra.mxu0 %v3939
    %4600 = vmatpush.bf16.msra.mxu0 %v3935
    %4601 = vmatpush.bf16.msra.mxu0 %v3931
    %4602 = vmatpush.bf16.msra.mxu0 %v3927
    %4603 = vmatpush.bf16.msra.mxu0 %v3923
    %4604 = vmatpush.bf16.msra.mxu0 %v3919
    %4605 = vmatpush.bf16.msra.mxu0 %v3915
    %4606 = vmatpush.bf16.msra.mxu0 %v3911
    %4607 = vmatmul.bf16.gmra.mxu0 %v2907
    %v4608 = vpop.f32.mrf.mxu0
    %v4609 = vadd.f32 %v4596, %v4608
    %v4610 = vpop.f32.mrf.mxu0
    %4611 = vdwg.mxu0
    %v4612 = vld [vmem:[#allocation10] sm:$0xf]
    %v4614 = vperm.slane %v4612, 0
    %v4615 = vperm.slane %v4612, 1
    %v4616 = vperm.slane %v4612, 2
    %v4617 = vperm.slane %v4612, 3
    %v4622 = vadd.f32 %v4297, %v4614
    %v4623 = vadd.f32 %v4401, %v4615
    %v4624 = vadd.f32 %v4505, %v4616
    %v4625 = vadd.f32 %v4609, %v4617
    %v4626 = vmax.f32 %v4622, 0.0
    %v4627 = vmax.f32 %v4623, 0.0
    %v4628 = vmax.f32 %v4624, 0.0
    %v4629 = vmax.f32 %v4625, 0.0
    %v4630 = vpack.c.bf16 %v4626, %v4626
    %v4631 = vpack.c.bf16 %v4627, %v4627
    %v4632 = vpack.c.bf16 %v4628, %v4628
    %v4633 = vpack.c.bf16 %v4629, %v4629
    %v4634 = vld [vmem:[#allocation11] sm:$0xf]
    %v4635 = vld [vmem:[#allocation11 + $0x4] sm:$0xf]
    %v4636 = vld [vmem:[#allocation11 + $0x8] sm:$0xf]
    %v4637 = vld [vmem:[#allocation11 + $0xc] sm:$0xf]
    %v4638 = vld [vmem:[#allocation11 + $0x10] sm:$0xf]
    %v4639 = vld [vmem:[#allocation11 + $0x14] sm:$0xf]
    %v4640 = vld [vmem:[#allocation11 + $0x18] sm:$0xf]
    %v4641 = vld [vmem:[#allocation11 + $0x1c] sm:$0xf]
    %v4642 = vld [vmem:[#allocation11 + $0x20] sm:$0xf]
    %v4643 = vld [vmem:[#allocation11 + $0x24] sm:$0xf]
    %v4644 = vld [vmem:[#allocation11 + $0x28] sm:$0xf]
    %v4645 = vld [vmem:[#allocation11 + $0x2c] sm:$0xf]
    %v4646 = vld [vmem:[#allocation11 + $0x30] sm:$0xf]
    %v4647 = vld [vmem:[#allocation11 + $0x34] sm:$0xf]
    %v4648 = vld [vmem:[#allocation11 + $0x38] sm:$0xf]
    %v4649 = vld [vmem:[#allocation11 + $0x3c] sm:$0xf]
    %v4650 = vld [vmem:[#allocation11 + $0x40] sm:$0xf]
    %v4651 = vld [vmem:[#allocation11 + $0x44] sm:$0xf]
    %v4652 = vld [vmem:[#allocation11 + $0x48] sm:$0xf]
    %v4653 = vld [vmem:[#allocation11 + $0x4c] sm:$0xf]
    %v4654 = vld [vmem:[#allocation11 + $0x50] sm:$0xf]
    %v4655 = vld [vmem:[#allocation11 + $0x54] sm:$0xf]
    %v4656 = vld [vmem:[#allocation11 + $0x58] sm:$0xf]
    %v4657 = vld [vmem:[#allocation11 + $0x5c] sm:$0xf]
    %v4658 = vld [vmem:[#allocation11 + $0x60] sm:$0xf]
    %v4659 = vld [vmem:[#allocation11 + $0x64] sm:$0xf]
    %v4660 = vld [vmem:[#allocation11 + $0x68] sm:$0xf]
    %v4661 = vld [vmem:[#allocation11 + $0x6c] sm:$0xf]
    %v4662 = vld [vmem:[#allocation11 + $0x70] sm:$0xf]
    %v4663 = vld [vmem:[#allocation11 + $0x74] sm:$0xf]
    %v4664 = vld [vmem:[#allocation11 + $0x78] sm:$0xf]
    %v4665 = vld [vmem:[#allocation11 + $0x7c] sm:$0xf]
    %v4666 = vld [vmem:[#allocation11 + $0x80] sm:$0xf]
    %v4667 = vld [vmem:[#allocation11 + $0x84] sm:$0xf]
    %v4668 = vld [vmem:[#allocation11 + $0x88] sm:$0xf]
    %v4669 = vld [vmem:[#allocation11 + $0x8c] sm:$0xf]
    %v4670 = vld [vmem:[#allocation11 + $0x90] sm:$0xf]
    %v4671 = vld [vmem:[#allocation11 + $0x94] sm:$0xf]
    %v4672 = vld [vmem:[#allocation11 + $0x98] sm:$0xf]
    %v4673 = vld [vmem:[#allocation11 + $0x9c] sm:$0xf]
    %v4674 = vld [vmem:[#allocation11 + $0xa0] sm:$0xf]
    %v4675 = vld [vmem:[#allocation11 + $0xa4] sm:$0xf]
    %v4676 = vld [vmem:[#allocation11 + $0xa8] sm:$0xf]
    %v4677 = vld [vmem:[#allocation11 + $0xac] sm:$0xf]
    %v4678 = vld [vmem:[#allocation11 + $0xb0] sm:$0xf]
    %v4679 = vld [vmem:[#allocation11 + $0xb4] sm:$0xf]
    %v4680 = vld [vmem:[#allocation11 + $0xb8] sm:$0xf]
    %v4681 = vld [vmem:[#allocation11 + $0xbc] sm:$0xf]
    %v4682 = vld [vmem:[#allocation11 + $0xc0] sm:$0xf]
    %v4683 = vld [vmem:[#allocation11 + $0xc4] sm:$0xf]
    %v4684 = vld [vmem:[#allocation11 + $0xc8] sm:$0xf]
    %v4685 = vld [vmem:[#allocation11 + $0xcc] sm:$0xf]
    %v4686 = vld [vmem:[#allocation11 + $0xd0] sm:$0xf]
    %v4687 = vld [vmem:[#allocation11 + $0xd4] sm:$0xf]
    %v4688 = vld [vmem:[#allocation11 + $0xd8] sm:$0xf]
    %v4689 = vld [vmem:[#allocation11 + $0xdc] sm:$0xf]
    %v4690 = vld [vmem:[#allocation11 + $0xe0] sm:$0xf]
    %v4691 = vld [vmem:[#allocation11 + $0xe4] sm:$0xf]
    %v4692 = vld [vmem:[#allocation11 + $0xe8] sm:$0xf]
    %v4693 = vld [vmem:[#allocation11 + $0xec] sm:$0xf]
    %v4694 = vld [vmem:[#allocation11 + $0xf0] sm:$0xf]
    %v4695 = vld [vmem:[#allocation11 + $0xf4] sm:$0xf]
    %v4696 = vld [vmem:[#allocation11 + $0xf8] sm:$0xf]
    %v4697 = vld [vmem:[#allocation11 + $0xfc] sm:$0xf]
    %v4698 = vld [vmem:[%s6] sm:$0x1]
    %v4700 = vperm.slane %v4698, 0
    %v4766 = vunpack.c.l.b16 %v4634
    %v4767 = vunpack.c.l.b16 %v4635
    %v4768 = vunpack.c.l.b16 %v4636
    %v4769 = vunpack.c.l.b16 %v4637
    %v4770 = vunpack.c.l.b16 %v4638
    %v4771 = vunpack.c.l.b16 %v4639
    %v4772 = vunpack.c.l.b16 %v4640
    %v4773 = vunpack.c.l.b16 %v4641
    %v4774 = vunpack.c.l.b16 %v4642
    %v4775 = vunpack.c.l.b16 %v4643
    %v4776 = vunpack.c.l.b16 %v4644
    %v4777 = vunpack.c.l.b16 %v4645
    %v4778 = vunpack.c.l.b16 %v4646
    %v4779 = vunpack.c.l.b16 %v4647
    %v4780 = vunpack.c.l.b16 %v4648
    %v4781 = vunpack.c.l.b16 %v4649
    %v4782 = vunpack.c.l.b16 %v4650
    %v4783 = vunpack.c.l.b16 %v4651
    %v4784 = vunpack.c.l.b16 %v4652
    %v4785 = vunpack.c.l.b16 %v4653
    %v4786 = vunpack.c.l.b16 %v4654
    %v4787 = vunpack.c.l.b16 %v4655
    %v4788 = vunpack.c.l.b16 %v4656
    %v4789 = vunpack.c.l.b16 %v4657
    %v4790 = vunpack.c.l.b16 %v4658
    %v4791 = vunpack.c.l.b16 %v4659
    %v4792 = vunpack.c.l.b16 %v4660
    %v4793 = vunpack.c.l.b16 %v4661
    %v4794 = vunpack.c.l.b16 %v4662
    %v4795 = vunpack.c.l.b16 %v4663
    %v4796 = vunpack.c.l.b16 %v4664
    %v4797 = vunpack.c.l.b16 %v4665
    %v4798 = vunpack.c.l.b16 %v4666
    %v4799 = vunpack.c.l.b16 %v4667
    %v4800 = vunpack.c.l.b16 %v4668
    %v4801 = vunpack.c.l.b16 %v4669
    %v4802 = vunpack.c.l.b16 %v4670
    %v4803 = vunpack.c.l.b16 %v4671
    %v4804 = vunpack.c.l.b16 %v4672
    %v4805 = vunpack.c.l.b16 %v4673
    %v4806 = vunpack.c.l.b16 %v4674
    %v4807 = vunpack.c.l.b16 %v4675
    %v4808 = vunpack.c.l.b16 %v4676
    %v4809 = vunpack.c.l.b16 %v4677
    %v4810 = vunpack.c.l.b16 %v4678
    %v4811 = vunpack.c.l.b16 %v4679
    %v4812 = vunpack.c.l.b16 %v4680
    %v4813 = vunpack.c.l.b16 %v4681
    %v4814 = vunpack.c.l.b16 %v4682
    %v4815 = vunpack.c.l.b16 %v4683
    %v4816 = vunpack.c.l.b16 %v4684
    %v4817 = vunpack.c.l.b16 %v4685
    %v4818 = vunpack.c.l.b16 %v4686
    %v4819 = vunpack.c.l.b16 %v4687
    %v4820 = vunpack.c.l.b16 %v4688
    %v4821 = vunpack.c.l.b16 %v4689
    %v4822 = vunpack.c.l.b16 %v4690
    %v4823 = vunpack.c.l.b16 %v4691
    %v4824 = vunpack.c.l.b16 %v4692
    %v4825 = vunpack.c.l.b16 %v4693
    %v4826 = vunpack.c.l.b16 %v4694
    %v4827 = vunpack.c.l.b16 %v4695
    %v4828 = vunpack.c.l.b16 %v4696
    %v4829 = vunpack.c.l.b16 %v4697
    %v4830 = vpack.c.b16 %v4767, %v4766
    %v4831 = vpack.c.b16 %v4769, %v4768
    %v4832 = vpack.c.b16 %v4771, %v4770
    %v4833 = vpack.c.b16 %v4773, %v4772
    %v4834 = vpack.c.b16 %v4775, %v4774
    %v4835 = vpack.c.b16 %v4777, %v4776
    %v4836 = vpack.c.b16 %v4779, %v4778
    %v4837 = vpack.c.b16 %v4781, %v4780
    %v4838 = vpack.c.b16 %v4783, %v4782
    %v4839 = vpack.c.b16 %v4785, %v4784
    %v4840 = vpack.c.b16 %v4787, %v4786
    %v4841 = vpack.c.b16 %v4789, %v4788
    %v4842 = vpack.c.b16 %v4791, %v4790
    %v4843 = vpack.c.b16 %v4793, %v4792
    %v4844 = vpack.c.b16 %v4795, %v4794
    %v4845 = vpack.c.b16 %v4797, %v4796
    %v4846 = vpack.c.b16 %v4799, %v4798
    %v4847 = vpack.c.b16 %v4801, %v4800
    %v4848 = vpack.c.b16 %v4803, %v4802
    %v4849 = vpack.c.b16 %v4805, %v4804
    %v4850 = vpack.c.b16 %v4807, %v4806
    %v4851 = vpack.c.b16 %v4809, %v4808
    %v4852 = vpack.c.b16 %v4811, %v4810
    %v4853 = vpack.c.b16 %v4813, %v4812
    %v4854 = vpack.c.b16 %v4815, %v4814
    %v4855 = vpack.c.b16 %v4817, %v4816
    %v4856 = vpack.c.b16 %v4819, %v4818
    %v4857 = vpack.c.b16 %v4821, %v4820
    %v4858 = vpack.c.b16 %v4823, %v4822
    %v4859 = vpack.c.b16 %v4825, %v4824
    %v4860 = vpack.c.b16 %v4827, %v4826
    %v4861 = vpack.c.b16 %v4829, %v4828
    %4894 = vmatpush.bf16.msra.mxu0 %v4837
    %4895 = vmatpush.bf16.msra.mxu0 %v4836
    %4896 = vmatpush.bf16.msra.mxu0 %v4835
    %4897 = vmatpush.bf16.msra.mxu0 %v4834
    %4898 = vmatpush.bf16.msra.mxu0 %v4833
    %4899 = vmatpush.bf16.msra.mxu0 %v4832
    %4900 = vmatpush.bf16.msra.mxu0 %v4831
    %4901 = vmatpush.bf16.msra.mxu0 %v4830
    %4902 = vmatmul.bf16.gmra.mxu0 %v4630
    %v4903 = vpop.f32.mrf.mxu0
    %v4904 = vadd.f32 %v4700, %v4903
    %v4905 = vpop.f32.mrf.mxu0
    %4906 = vdwg.mxu0
    %4907 = vmatpush.bf16.msra.mxu0 %v4845
    %4908 = vmatpush.bf16.msra.mxu0 %v4844
    %4909 = vmatpush.bf16.msra.mxu0 %v4843
    %4910 = vmatpush.bf16.msra.mxu0 %v4842
    %4911 = vmatpush.bf16.msra.mxu0 %v4841
    %4912 = vmatpush.bf16.msra.mxu0 %v4840
    %4913 = vmatpush.bf16.msra.mxu0 %v4839
    %4914 = vmatpush.bf16.msra.mxu0 %v4838
    %4915 = vmatmul.bf16.gmra.mxu0 %v4631
    %v4916 = vpop.f32.mrf.mxu0
    %v4917 = vadd.f32 %v4904, %v4916
    %v4918 = vpop.f32.mrf.mxu0
    %4919 = vdwg.mxu0
    %4920 = vmatpush.bf16.msra.mxu0 %v4853
    %4921 = vmatpush.bf16.msra.mxu0 %v4852
    %4922 = vmatpush.bf16.msra.mxu0 %v4851
    %4923 = vmatpush.bf16.msra.mxu0 %v4850
    %4924 = vmatpush.bf16.msra.mxu0 %v4849
    %4925 = vmatpush.bf16.msra.mxu0 %v4848
    %4926 = vmatpush.bf16.msra.mxu0 %v4847
    %4927 = vmatpush.bf16.msra.mxu0 %v4846
    %4928 = vmatmul.bf16.gmra.mxu0 %v4632
    %v4929 = vpop.f32.mrf.mxu0
    %v4930 = vadd.f32 %v4917, %v4929
    %v4931 = vpop.f32.mrf.mxu0
    %4932 = vdwg.mxu0
    %4933 = vmatpush.bf16.msra.mxu0 %v4861
    %4934 = vmatpush.bf16.msra.mxu0 %v4860
    %4935 = vmatpush.bf16.msra.mxu0 %v4859
    %4936 = vmatpush.bf16.msra.mxu0 %v4858
    %4937 = vmatpush.bf16.msra.mxu0 %v4857
    %4938 = vmatpush.bf16.msra.mxu0 %v4856
    %4939 = vmatpush.bf16.msra.mxu0 %v4855
    %4940 = vmatpush.bf16.msra.mxu0 %v4854
    %4941 = vmatmul.bf16.gmra.mxu0 %v4633
    %v4942 = vpop.f32.mrf.mxu0
    %v4943 = vadd.f32 %v4930, %v4942
    %v4944 = vpop.f32.mrf.mxu0
    %4945 = vdwg.mxu0
    %v4946 = vmax.f32 %v4943, 0.0
    %v4947 = vpack.c.bf16 %v4946, %v4946
    %v4948 = vld [vmem:[#allocation13] sm:$0xf]
    %v4949 = vld [vmem:[#allocation13 + $0x4] sm:$0xf]
    %v4950 = vld [vmem:[#allocation13 + $0x8] sm:$0xf]
    %v4951 = vld [vmem:[#allocation13 + $0xc] sm:$0xf]
    %v4952 = vld [vmem:[#allocation13 + $0x10] sm:$0xf]
    %v4953 = vld [vmem:[#allocation13 + $0x14] sm:$0xf]
    %v4954 = vld [vmem:[#allocation13 + $0x18] sm:$0xf]
    %v4955 = vld [vmem:[#allocation13 + $0x1c] sm:$0xf]
    %v4956 = vld [vmem:[#allocation13 + $0x20] sm:$0xf]
    %v4957 = vld [vmem:[#allocation13 + $0x24] sm:$0xf]
    %v4958 = vld [vmem:[#allocation13 + $0x28] sm:$0xf]
    %v4959 = vld [vmem:[#allocation13 + $0x2c] sm:$0xf]
    %v4960 = vld [vmem:[#allocation13 + $0x30] sm:$0xf]
    %v4961 = vld [vmem:[#allocation13 + $0x34] sm:$0xf]
    %v4962 = vld [vmem:[#allocation13 + $0x38] sm:$0xf]
    %v4963 = vld [vmem:[#allocation13 + $0x3c] sm:$0xf]
    %v4964 = vld [vmem:[%s8] sm:$0x1]
    %v4966 = vperm.slane %v4964, 0
    %v4984 = vunpack.c.l.b16 %v4948
    %v4985 = vunpack.c.l.b16 %v4949
    %v4986 = vunpack.c.l.b16 %v4950
    %v4987 = vunpack.c.l.b16 %v4951
    %v4988 = vunpack.c.l.b16 %v4952
    %v4989 = vunpack.c.l.b16 %v4953
    %v4990 = vunpack.c.l.b16 %v4954
    %v4991 = vunpack.c.l.b16 %v4955
    %v4992 = vunpack.c.l.b16 %v4956
    %v4993 = vunpack.c.l.b16 %v4957
    %v4994 = vunpack.c.l.b16 %v4958
    %v4995 = vunpack.c.l.b16 %v4959
    %v4996 = vunpack.c.l.b16 %v4960
    %v4997 = vunpack.c.l.b16 %v4961
    %v4998 = vunpack.c.l.b16 %v4962
    %v4999 = vunpack.c.l.b16 %v4963
    %v5000 = vpack.c.b16 %v4985, %v4984
    %v5001 = vpack.c.b16 %v4987, %v4986
    %v5002 = vpack.c.b16 %v4989, %v4988
    %v5003 = vpack.c.b16 %v4991, %v4990
    %v5004 = vpack.c.b16 %v4993, %v4992
    %v5005 = vpack.c.b16 %v4995, %v4994
    %v5006 = vpack.c.b16 %v4997, %v4996
    %v5007 = vpack.c.b16 %v4999, %v4998
    %5016 = vmatpush.bf16.msra.mxu0 %v5007
    %5017 = vmatpush.bf16.msra.mxu0 %v5006
    %5018 = vmatpush.bf16.msra.mxu0 %v5005
    %5019 = vmatpush.bf16.msra.mxu0 %v5004
    %5020 = vmatpush.bf16.msra.mxu0 %v5003
    %5021 = vmatpush.bf16.msra.mxu0 %v5002
    %5022 = vmatpush.bf16.msra.mxu0 %v5001
    %5023 = vmatpush.bf16.msra.mxu0 %v5000
    %5024 = vmatmul.bf16.gmra.mxu0 %v4947
    %v5025 = vpop.f32.mrf.mxu0
    %v5026 = vadd.f32 %v4966, %v5025
    %v5027 = vpop.f32.mrf.mxu0
    %5028 = vdwg.mxu0
    %5029 = vst [vmem:[#allocation14] sm:$0x3] %v5026
    // Predicated region
    $region66: #{tpu_custom_call.1} parent=1 // pred_check
      _
    $region67: #{tpu_custom_call.1} parent=1 // pred_check_branch
      %5031 = sbr.rel (0) target = $region69
    $region68: #{tpu_custom_call.1} parent=1 // pred_region
      %5033 = vsyncadd [#allocation4], 0
      %s5035 = sshll.u32 [#allocation14], 4
      %s5036 = int_to_ptr.vmem [resolvable:$true] %s5035
      %s5037 = sshll.u32 %s9, 4
      %s5038 = int_to_ptr.hbm [resolvable:$true] %s5037
      %5040 = dma.vmem_to_hbm [thread:$0]  %s5036, 32, %s5038, [#allocation4]
    $region69: #{tpu_custom_call.1} parent=1 // pred_fallthru
      _
    // Predicated region
    $region70: #{tpu_custom_call.1} parent=1 // pred_check
      _
    $region71: #{tpu_custom_call.1} parent=1 // pred_check_branch
      %5042 = sbr.rel (0) target = $region73
    $region72: #{tpu_custom_call.1} parent=1 // pred_region
      %5044 = dma.done [#allocation4], 32
    $region73: #{tpu_custom_call.1} parent=1 // pred_fallthru
      _
    %5045 = vsyncpa [#allocation3], 1
    %5046 = vsyncpa [#allocation6], 1
    %5047 = vsyncpa [#allocation9], 1
    %5048 = vsyncpa [#allocation12], 1
    %5049 = vsyncpa [#allocation4], 1

</llo_original>
